<compile_context>
chip_gen: v7x
topology: tpu7x:2x2x1
jax: 0.10.0
libtpu: 0.0.40
codegen_flags: <defaults>
</compile_context>

<pallas_src>
import jax
import jax.numpy as jnp
from jax.experimental import pallas as pl
from jax.experimental.pallas import tpu as pltpu


# -----------------------------------------------------------------------------
# Fused 3-layer wavefront LSTM kernel (whole forward in one pallas_call)
# -----------------------------------------------------------------------------
def _make_wavefront_lstm_kernel(num_layers, T, B, H):
    """Kernel refs: (lens, x_flat, [wih, whh, b] * num_layers, hN_out)."""

    def kernel(*refs):
        len_ref = refs[0]                          # [B, 1] int32
        x_ref = refs[1]                            # [T*B, E] time-major row blocks
        w_refs = refs[2:2 + 3 * num_layers]        # per layer: wih [Din,4H], whh [H,4H], b [1,4H]
        hN_ref = refs[2 + 3 * num_layers]          # [B, H] output

        lens = len_ref[...]                        # [B, 1]

        # Validity masks hoisted once, shared by all layers (T compares instead of T*L).
        valid = [lens > t for t in range(T)]       # list of [B, 1] bool

        # Per-lane activation fixup: i/f/o lanes get 0.5*tanh+0.5 (== sigmoid, since the
        # 0.5 pre-scale is folded into the weights), g lanes get plain tanh.
        lane = jax.lax.broadcasted_iota(jnp.int32, (B, 4 * H), 1)
        is_sig = lane < 3 * H
        act_scale = jnp.where(is_sig, jnp.float32(0.5), jnp.float32(1.0))
        act_offset = jnp.where(is_sig, jnp.float32(0.5), jnp.float32(0.0))

        # Layer-0 input projection + bias hoisted: one big matmul off the recurrent path.
        gates_x0 = jnp.dot(x_ref[...], w_refs[0][...],
                           preferred_element_type=jnp.float32) + w_refs[2][...]   # [T*B, 4H]

        zeros_BH = jnp.zeros((B, H), jnp.float32)
        h = [zeros_BH] * num_layers
        c = [zeros_BH] * num_layers
        y = [zeros_BH] * num_layers                # y[l]: masked output of layer l, prev global step

        # Wavefront: global step s runs layer l at time t = s - l; the three per-layer
        # recurrent chains inside one step are independent -> scheduler overlaps them.
        for s in range(T + num_layers - 1):        # static -> fully unrolled
            new_y = list(y)
            for l in range(num_layers):
                t = s - l
                if not (0 <= t < T):
                    continue
                wih = w_refs[3 * l]
                whh = w_refs[3 * l + 1]
                b = w_refs[3 * l + 2]

                if l == 0:
                    gx = gates_x0[t * B:(t + 1) * B, :]                    # precomputed
                else:
                    # input y[l-1] was produced at the previous global step -> off this
                    # layer's recurrent (h[l]) chain.
                    gx = jnp.dot(y[l - 1], wih[...],
                                 preferred_element_type=jnp.float32) + b[...]

                gates = gx + jnp.dot(h[l], whh[...],
                                     preferred_element_type=jnp.float32)  # [B, 4H] one vreg

                act = jnp.tanh(gates) * act_scale + act_offset            # single EUP op
                i_g = act[:, 0 * H:1 * H]
                f_g = act[:, 1 * H:2 * H]
                o_g = act[:, 2 * H:3 * H]
                g_g = act[:, 3 * H:4 * H]

                c_new = f_g * c[l] + i_g * g_g
                h_new = o_g * jnp.tanh(c_new)

                v = valid[t]                       # [B, 1] bool, broadcast over H
                h[l] = jnp.where(v, h_new, h[l])   # freeze past each sequence length
                c[l] = jnp.where(v, c_new, c[l])
                if l < num_layers - 1:
                    # pad_packed_sequence zero-pads past each length
                    new_y[l] = jnp.where(v, h_new, zeros_BH)
            y = new_y

        hN_ref[...] = h[num_layers - 1]            # == hn[num_layers - 1]

    return kernel


def _prep_gate_weights(w):
    """Permute last-axis gate blocks from PyTorch (i, f, g, o) to (i, f, o, g) and fold
    the sigmoid 0.5 pre-scale into the i/f/o columns (one tanh per step in-kernel)."""
    H = w.shape[-1] // 4
    w = jnp.concatenate([w[..., :2 * H], w[..., 3 * H:], w[..., 2 * H:3 * H]], axis=-1)
    scale = jnp.concatenate([jnp.full((3 * H,), 0.5, w.dtype),
                             jnp.ones((H,), w.dtype)])
    return w * scale


# -----------------------------------------------------------------------------
# Wrapper
# -----------------------------------------------------------------------------
def deepfake_lstm_forward(x, lengths, params):
    """x: [B, T, E] padded batch_first input, lengths: [B]. Returns hn[-1][-1] -> [H]."""
    B, T, E = x.shape
    H = params[0][1].shape[0]
    num_layers = len(params)

    # Pad batch to the f32 sublane width so every per-step tile is a full vreg; padded
    # rows get length 0 so their state stays frozen at zero.
    B_pad = max(8, ((B + 7) // 8) * 8)
    x_p = jnp.zeros((B_pad, T, E), jnp.float32).at[:B].set(x)
    len_p = jnp.zeros((B_pad,), jnp.int32).at[:B].set(lengths.astype(jnp.int32))

    x_flat = jnp.transpose(x_p, (1, 0, 2)).reshape(T * B_pad, E)   # time-major row blocks
    lens_2d = len_p[:, None]

    kernel_args = [lens_2d, x_flat]
    for (wih_t, whh_t, bias) in params:
        kernel_args += [_prep_gate_weights(wih_t),
                        _prep_gate_weights(whh_t),
                        _prep_gate_weights(bias)]

    kernel = _make_wavefront_lstm_kernel(num_layers, T, B_pad, H)
    h_final = pl.pallas_call(
        kernel,
        out_shape=jax.ShapeDtypeStruct((B_pad, H), jnp.float32),
        in_specs=[pl.BlockSpec(memory_space=pltpu.MemorySpace.VMEM)] * len(kernel_args),
        out_specs=pl.BlockSpec(memory_space=pltpu.MemorySpace.VMEM),
    )(*kernel_args)

    return h_final[B - 1]                       # final_hidden_state[-1] -> [H]


# -----------------------------------------------------------------------------
# Params (PyTorch nn.LSTM layout / gate order) and pure-JAX reference
# -----------------------------------------------------------------------------
def init_params(key, embedding_size, hidden_size, num_layers):
    """Deterministic init matching nn.LSTM param shapes (uniform(-1/sqrt(H), 1/sqrt(H)))."""
    params = []
    k = 1.0 / float(hidden_size) ** 0.5
    for layer in range(num_layers):
        d_in = embedding_size if layer == 0 else hidden_size
        key, k1, k2, k3, k4 = jax.random.split(key, 5)
        w_ih = jax.random.uniform(k1, (4 * hidden_size, d_in), jnp.float32, -k, k)
        w_hh = jax.random.uniform(k2, (4 * hidden_size, hidden_size), jnp.float32, -k, k)
        b_ih = jax.random.uniform(k3, (4 * hidden_size,), jnp.float32, -k, k)
        b_hh = jax.random.uniform(k4, (4 * hidden_size,), jnp.float32, -k, k)
        # stored pre-transposed, PyTorch gate order (i, f, g, o)
        params.append((w_ih.T, w_hh.T, (b_ih + b_hh)[None, :]))
    return params


def _sigmoid(x):
    return 1.0 / (1.0 + jnp.exp(-x))


def reference_forward(x, lengths, params):
    """Pure-JAX reference of the same semantics (no Pallas, PyTorch gate order)."""
    B, T, _ = x.shape
    cur = x
    h = None
    for (wih_t, whh_t, bias) in params:
        H = whh_t.shape[0]
        h = jnp.zeros((B, H), jnp.float32)
        c = jnp.zeros((B, H), jnp.float32)
        ys = []
        for t in range(T):
            g = cur[:, t, :] @ wih_t + h @ whh_t + bias
            i_g = _sigmoid(g[:, :H])
            f_g = _sigmoid(g[:, H:2 * H])
            g_g = jnp.tanh(g[:, 2 * H:3 * H])
            o_g = _sigmoid(g[:, 3 * H:])
            c_new = f_g * c + i_g * g_g
            h_new = o_g * jnp.tanh(c_new)
            valid = (t < lengths)[:, None]
            h = jnp.where(valid, h_new, h)
            c = jnp.where(valid, c_new, c)
            ys.append(jnp.where(valid, h_new, 0.0))
        cur = jnp.stack(ys, axis=1)
    return h[-1]


if __name__ == "__main__":
    B, T, E, H = 2, 8, 16, 32
    NUM_CLASSES, NUM_LAYERS = 2, 3

    key = jax.random.PRNGKey(0)
    key, kx = jax.random.split(key)
    x = jax.random.normal(kx, (B, T, E), jnp.float32)     # padded batch_first sequences
    lengths = jnp.array([T, 5], jnp.int32)                 # variable (packed) lengths
    params = init_params(key, E, H, NUM_LAYERS)

    out = deepfake_lstm_forward(x, lengths, params)
    out = jax.block_until_ready(out)

    ref = reference_forward(x, lengths, params)
    assert out.shape == (H,), out.shape
    assert jnp.allclose(out, ref, atol=1e-3, rtol=1e-3), "mismatch vs pure-JAX reference"
    print("KERNEL_OK")
</pallas_src>

<mosaic_0001>
module attributes {stable_mosaic.version = 11 : i64} {
  func.func @kernel(%arg0: memref<8x1xi32, #tpu.memory_space<vmem>>, %arg1: memref<64x16xf32, #tpu.memory_space<vmem>>, %arg2: memref<16x128xf32, #tpu.memory_space<vmem>>, %arg3: memref<32x128xf32, #tpu.memory_space<vmem>>, %arg4: memref<1x128xf32, #tpu.memory_space<vmem>>, %arg5: memref<32x128xf32, #tpu.memory_space<vmem>>, %arg6: memref<32x128xf32, #tpu.memory_space<vmem>>, %arg7: memref<1x128xf32, #tpu.memory_space<vmem>>, %arg8: memref<32x128xf32, #tpu.memory_space<vmem>>, %arg9: memref<32x128xf32, #tpu.memory_space<vmem>>, %arg10: memref<1x128xf32, #tpu.memory_space<vmem>>, %arg11: memref<8x32xf32, #tpu.memory_space<vmem>>) attributes {dimension_semantics = [], scalar_prefetch = 0 : i64, scratch_operands = 0 : i64, tpu.core_type = #tpu.core_type<tc>} {
    %c0 = arith.constant 0 : index
    %c0_0 = arith.constant 0 : index
    %0 = vector.load %arg0[%c0, %c0_0] : memref<8x1xi32, #tpu.memory_space<vmem>>, vector<8x1xi32>
    %c0_i32 = arith.constant 0 : i32
    %1 = vector.broadcast %c0_i32 : i32 to vector<8x1xi32>
    %2 = arith.cmpi sgt, %0, %1 : vector<8x1xi32>
    %c1_i32 = arith.constant 1 : i32
    %3 = vector.broadcast %c1_i32 : i32 to vector<8x1xi32>
    %4 = arith.cmpi sgt, %0, %3 : vector<8x1xi32>
    %c2_i32 = arith.constant 2 : i32
    %5 = vector.broadcast %c2_i32 : i32 to vector<8x1xi32>
    %6 = arith.cmpi sgt, %0, %5 : vector<8x1xi32>
    %c3_i32 = arith.constant 3 : i32
    %7 = vector.broadcast %c3_i32 : i32 to vector<8x1xi32>
    %8 = arith.cmpi sgt, %0, %7 : vector<8x1xi32>
    %c4_i32 = arith.constant 4 : i32
    %9 = vector.broadcast %c4_i32 : i32 to vector<8x1xi32>
    %10 = arith.cmpi sgt, %0, %9 : vector<8x1xi32>
    %c5_i32 = arith.constant 5 : i32
    %11 = vector.broadcast %c5_i32 : i32 to vector<8x1xi32>
    %12 = arith.cmpi sgt, %0, %11 : vector<8x1xi32>
    %c6_i32 = arith.constant 6 : i32
    %13 = vector.broadcast %c6_i32 : i32 to vector<8x1xi32>
    %14 = arith.cmpi sgt, %0, %13 : vector<8x1xi32>
    %c7_i32 = arith.constant 7 : i32
    %15 = vector.broadcast %c7_i32 : i32 to vector<8x1xi32>
    %16 = arith.cmpi sgt, %0, %15 : vector<8x1xi32>
    %17 = tpu.iota {dimensions = array<i32: 1>} : vector<8x128xi32>
    %c96_i32 = arith.constant 96 : i32
    %18 = vector.broadcast %c96_i32 : i32 to vector<8x128xi32>
    %19 = arith.cmpi slt, %17, %18 : vector<8x128xi32>
    %cst = arith.constant 5.000000e-01 : f32
    %cst_1 = arith.constant 1.000000e+00 : f32
    %20 = vector.broadcast %cst : f32 to vector<8x128xf32>
    %21 = vector.broadcast %cst_1 : f32 to vector<8x128xf32>
    %22 = arith.select %19, %20, %21 : vector<8x128xi1>, vector<8x128xf32>
    %cst_2 = arith.constant 5.000000e-01 : f32
    %cst_3 = arith.constant 0.000000e+00 : f32
    %23 = vector.broadcast %cst_2 : f32 to vector<8x128xf32>
    %24 = vector.broadcast %cst_3 : f32 to vector<8x128xf32>
    %25 = arith.select %19, %23, %24 : vector<8x128xi1>, vector<8x128xf32>
    %c0_4 = arith.constant 0 : index
    %c0_5 = arith.constant 0 : index
    %26 = vector.load %arg1[%c0_4, %c0_5] : memref<64x16xf32, #tpu.memory_space<vmem>>, vector<64x16xf32>
    %c0_6 = arith.constant 0 : index
    %c0_7 = arith.constant 0 : index
    %27 = vector.load %arg2[%c0_6, %c0_7] : memref<16x128xf32, #tpu.memory_space<vmem>>, vector<16x128xf32>
    %cst_8 = arith.constant dense<0.000000e+00> : vector<64x128xf32>
    %28 = tpu.matmul %26, %27, %cst_8 {dimension_numbers = #tpu.dot_dimension_numbers<[1], [0], [0], [1], [0, 0, 1, 1], [], []>} : vector<64x16xf32>, vector<16x128xf32>, vector<64x128xf32> -> vector<64x128xf32>
    %c0_9 = arith.constant 0 : index
    %c0_10 = arith.constant 0 : index
    %29 = vector.load %arg4[%c0_9, %c0_10] : memref<1x128xf32, #tpu.memory_space<vmem>>, vector<1x128xf32>
    %30 = vector.broadcast %29 : vector<1x128xf32> to vector<64x128xf32>
    %31 = arith.addf %28, %30 : vector<64x128xf32>
    %cst_11 = arith.constant 0.000000e+00 : f32
    %32 = vector.broadcast %cst_11 : f32 to vector<8x32xf32>
    %33 = vector.extract_strided_slice %31 {offsets = [0, 0], sizes = [8, 128], strides = [1, 1]} : vector<64x128xf32> to vector<8x128xf32>
    %c0_12 = arith.constant 0 : index
    %c0_13 = arith.constant 0 : index
    %34 = vector.load %arg3[%c0_12, %c0_13] : memref<32x128xf32, #tpu.memory_space<vmem>>, vector<32x128xf32>
    %cst_14 = arith.constant dense<0.000000e+00> : vector<8x128xf32>
    %35 = tpu.matmul %32, %34, %cst_14 {dimension_numbers = #tpu.dot_dimension_numbers<[1], [0], [0], [1], [0, 0, 1, 1], [], []>} : vector<8x32xf32>, vector<32x128xf32>, vector<8x128xf32> -> vector<8x128xf32>
    %36 = arith.addf %33, %35 : vector<8x128xf32>
    %37 = math.tanh %36 : vector<8x128xf32>
    %38 = arith.mulf %37, %22 : vector<8x128xf32>
    %39 = arith.addf %38, %25 : vector<8x128xf32>
    %40 = vector.extract_strided_slice %39 {offsets = [0, 0], sizes = [8, 32], strides = [1, 1]} : vector<8x128xf32> to vector<8x32xf32>
    %41 = vector.extract_strided_slice %39 {offsets = [0, 32], sizes = [8, 32], strides = [1, 1]} : vector<8x128xf32> to vector<8x32xf32>
    %42 = vector.extract_strided_slice %39 {offsets = [0, 64], sizes = [8, 32], strides = [1, 1]} : vector<8x128xf32> to vector<8x32xf32>
    %43 = vector.extract_strided_slice %39 {offsets = [0, 96], sizes = [8, 32], strides = [1, 1]} : vector<8x128xf32> to vector<8x32xf32>
    %44 = arith.mulf %41, %32 : vector<8x32xf32>
    %45 = arith.mulf %40, %43 : vector<8x32xf32>
    %46 = arith.addf %44, %45 : vector<8x32xf32>
    %47 = math.tanh %46 : vector<8x32xf32>
    %48 = arith.mulf %42, %47 : vector<8x32xf32>
    %49 = vector.shape_cast %2 : vector<8x1xi1> to vector<8x1xi1>
    %50 = vector.broadcast %49 : vector<8x1xi1> to vector<8x32xi1>
    %51 = arith.select %50, %48, %32 : vector<8x32xi1>, vector<8x32xf32>
    %52 = vector.shape_cast %2 : vector<8x1xi1> to vector<8x1xi1>
    %53 = vector.broadcast %52 : vector<8x1xi1> to vector<8x32xi1>
    %54 = arith.select %53, %46, %32 : vector<8x32xi1>, vector<8x32xf32>
    %55 = vector.shape_cast %2 : vector<8x1xi1> to vector<8x1xi1>
    %56 = vector.broadcast %55 : vector<8x1xi1> to vector<8x32xi1>
    %57 = arith.select %56, %48, %32 : vector<8x32xi1>, vector<8x32xf32>
    %58 = vector.extract_strided_slice %31 {offsets = [8, 0], sizes = [8, 128], strides = [1, 1]} : vector<64x128xf32> to vector<8x128xf32>
    %c0_15 = arith.constant 0 : index
    %c0_16 = arith.constant 0 : index
    %59 = vector.load %arg3[%c0_15, %c0_16] : memref<32x128xf32, #tpu.memory_space<vmem>>, vector<32x128xf32>
    %cst_17 = arith.constant dense<0.000000e+00> : vector<8x128xf32>
    %60 = tpu.matmul %51, %59, %cst_17 {dimension_numbers = #tpu.dot_dimension_numbers<[1], [0], [0], [1], [0, 0, 1, 1], [], []>} : vector<8x32xf32>, vector<32x128xf32>, vector<8x128xf32> -> vector<8x128xf32>
    %61 = arith.addf %58, %60 : vector<8x128xf32>
    %62 = math.tanh %61 : vector<8x128xf32>
    %63 = arith.mulf %62, %22 : vector<8x128xf32>
    %64 = arith.addf %63, %25 : vector<8x128xf32>
    %65 = vector.extract_strided_slice %64 {offsets = [0, 0], sizes = [8, 32], strides = [1, 1]} : vector<8x128xf32> to vector<8x32xf32>
    %66 = vector.extract_strided_slice %64 {offsets = [0, 32], sizes = [8, 32], strides = [1, 1]} : vector<8x128xf32> to vector<8x32xf32>
    %67 = vector.extract_strided_slice %64 {offsets = [0, 64], sizes = [8, 32], strides = [1, 1]} : vector<8x128xf32> to vector<8x32xf32>
    %68 = vector.extract_strided_slice %64 {offsets = [0, 96], sizes = [8, 32], strides = [1, 1]} : vector<8x128xf32> to vector<8x32xf32>
    %69 = arith.mulf %66, %54 : vector<8x32xf32>
    %70 = arith.mulf %65, %68 : vector<8x32xf32>
    %71 = arith.addf %69, %70 : vector<8x32xf32>
    %72 = math.tanh %71 : vector<8x32xf32>
    %73 = arith.mulf %67, %72 : vector<8x32xf32>
    %74 = vector.shape_cast %4 : vector<8x1xi1> to vector<8x1xi1>
    %75 = vector.broadcast %74 : vector<8x1xi1> to vector<8x32xi1>
    %76 = arith.select %75, %73, %51 : vector<8x32xi1>, vector<8x32xf32>
    %77 = vector.shape_cast %4 : vector<8x1xi1> to vector<8x1xi1>
    %78 = vector.broadcast %77 : vector<8x1xi1> to vector<8x32xi1>
    %79 = arith.select %78, %71, %54 : vector<8x32xi1>, vector<8x32xf32>
    %80 = vector.shape_cast %4 : vector<8x1xi1> to vector<8x1xi1>
    %81 = vector.broadcast %80 : vector<8x1xi1> to vector<8x32xi1>
    %82 = arith.select %81, %73, %32 : vector<8x32xi1>, vector<8x32xf32>
    %c0_18 = arith.constant 0 : index
    %c0_19 = arith.constant 0 : index
    %83 = vector.load %arg5[%c0_18, %c0_19] : memref<32x128xf32, #tpu.memory_space<vmem>>, vector<32x128xf32>
    %cst_20 = arith.constant dense<0.000000e+00> : vector<8x128xf32>
    %84 = tpu.matmul %57, %83, %cst_20 {dimension_numbers = #tpu.dot_dimension_numbers<[1], [0], [0], [1], [0, 0, 1, 1], [], []>} : vector<8x32xf32>, vector<32x128xf32>, vector<8x128xf32> -> vector<8x128xf32>
    %c0_21 = arith.constant 0 : index
    %c0_22 = arith.constant 0 : index
    %85 = vector.load %arg7[%c0_21, %c0_22] : memref<1x128xf32, #tpu.memory_space<vmem>>, vector<1x128xf32>
    %86 = vector.broadcast %85 : vector<1x128xf32> to vector<8x128xf32>
    %87 = arith.addf %84, %86 : vector<8x128xf32>
    %c0_23 = arith.constant 0 : index
    %c0_24 = arith.constant 0 : index
    %88 = vector.load %arg6[%c0_23, %c0_24] : memref<32x128xf32, #tpu.memory_space<vmem>>, vector<32x128xf32>
    %cst_25 = arith.constant dense<0.000000e+00> : vector<8x128xf32>
    %89 = tpu.matmul %32, %88, %cst_25 {dimension_numbers = #tpu.dot_dimension_numbers<[1], [0], [0], [1], [0, 0, 1, 1], [], []>} : vector<8x32xf32>, vector<32x128xf32>, vector<8x128xf32> -> vector<8x128xf32>
    %90 = arith.addf %87, %89 : vector<8x128xf32>
    %91 = math.tanh %90 : vector<8x128xf32>
    %92 = arith.mulf %91, %22 : vector<8x128xf32>
    %93 = arith.addf %92, %25 : vector<8x128xf32>
    %94 = vector.extract_strided_slice %93 {offsets = [0, 0], sizes = [8, 32], strides = [1, 1]} : vector<8x128xf32> to vector<8x32xf32>
    %95 = vector.extract_strided_slice %93 {offsets = [0, 32], sizes = [8, 32], strides = [1, 1]} : vector<8x128xf32> to vector<8x32xf32>
    %96 = vector.extract_strided_slice %93 {offsets = [0, 64], sizes = [8, 32], strides = [1, 1]} : vector<8x128xf32> to vector<8x32xf32>
    %97 = vector.extract_strided_slice %93 {offsets = [0, 96], sizes = [8, 32], strides = [1, 1]} : vector<8x128xf32> to vector<8x32xf32>
    %98 = arith.mulf %95, %32 : vector<8x32xf32>
    %99 = arith.mulf %94, %97 : vector<8x32xf32>
    %100 = arith.addf %98, %99 : vector<8x32xf32>
    %101 = math.tanh %100 : vector<8x32xf32>
    %102 = arith.mulf %96, %101 : vector<8x32xf32>
    %103 = vector.shape_cast %2 : vector<8x1xi1> to vector<8x1xi1>
    %104 = vector.broadcast %103 : vector<8x1xi1> to vector<8x32xi1>
    %105 = arith.select %104, %102, %32 : vector<8x32xi1>, vector<8x32xf32>
    %106 = vector.shape_cast %2 : vector<8x1xi1> to vector<8x1xi1>
    %107 = vector.broadcast %106 : vector<8x1xi1> to vector<8x32xi1>
    %108 = arith.select %107, %100, %32 : vector<8x32xi1>, vector<8x32xf32>
    %109 = vector.shape_cast %2 : vector<8x1xi1> to vector<8x1xi1>
    %110 = vector.broadcast %109 : vector<8x1xi1> to vector<8x32xi1>
    %111 = arith.select %110, %102, %32 : vector<8x32xi1>, vector<8x32xf32>
    %112 = vector.extract_strided_slice %31 {offsets = [16, 0], sizes = [8, 128], strides = [1, 1]} : vector<64x128xf32> to vector<8x128xf32>
    %c0_26 = arith.constant 0 : index
    %c0_27 = arith.constant 0 : index
    %113 = vector.load %arg3[%c0_26, %c0_27] : memref<32x128xf32, #tpu.memory_space<vmem>>, vector<32x128xf32>
    %cst_28 = arith.constant dense<0.000000e+00> : vector<8x128xf32>
    %114 = tpu.matmul %76, %113, %cst_28 {dimension_numbers = #tpu.dot_dimension_numbers<[1], [0], [0], [1], [0, 0, 1, 1], [], []>} : vector<8x32xf32>, vector<32x128xf32>, vector<8x128xf32> -> vector<8x128xf32>
    %115 = arith.addf %112, %114 : vector<8x128xf32>
    %116 = math.tanh %115 : vector<8x128xf32>
    %117 = arith.mulf %116, %22 : vector<8x128xf32>
    %118 = arith.addf %117, %25 : vector<8x128xf32>
    %119 = vector.extract_strided_slice %118 {offsets = [0, 0], sizes = [8, 32], strides = [1, 1]} : vector<8x128xf32> to vector<8x32xf32>
    %120 = vector.extract_strided_slice %118 {offsets = [0, 32], sizes = [8, 32], strides = [1, 1]} : vector<8x128xf32> to vector<8x32xf32>
    %121 = vector.extract_strided_slice %118 {offsets = [0, 64], sizes = [8, 32], strides = [1, 1]} : vector<8x128xf32> to vector<8x32xf32>
    %122 = vector.extract_strided_slice %118 {offsets = [0, 96], sizes = [8, 32], strides = [1, 1]} : vector<8x128xf32> to vector<8x32xf32>
    %123 = arith.mulf %120, %79 : vector<8x32xf32>
    %124 = arith.mulf %119, %122 : vector<8x32xf32>
    %125 = arith.addf %123, %124 : vector<8x32xf32>
    %126 = math.tanh %125 : vector<8x32xf32>
    %127 = arith.mulf %121, %126 : vector<8x32xf32>
    %128 = vector.shape_cast %6 : vector<8x1xi1> to vector<8x1xi1>
    %129 = vector.broadcast %128 : vector<8x1xi1> to vector<8x32xi1>
    %130 = arith.select %129, %127, %76 : vector<8x32xi1>, vector<8x32xf32>
    %131 = vector.shape_cast %6 : vector<8x1xi1> to vector<8x1xi1>
    %132 = vector.broadcast %131 : vector<8x1xi1> to vector<8x32xi1>
    %133 = arith.select %132, %125, %79 : vector<8x32xi1>, vector<8x32xf32>
    %134 = vector.shape_cast %6 : vector<8x1xi1> to vector<8x1xi1>
    %135 = vector.broadcast %134 : vector<8x1xi1> to vector<8x32xi1>
    %136 = arith.select %135, %127, %32 : vector<8x32xi1>, vector<8x32xf32>
    %c0_29 = arith.constant 0 : index
    %c0_30 = arith.constant 0 : index
    %137 = vector.load %arg5[%c0_29, %c0_30] : memref<32x128xf32, #tpu.memory_space<vmem>>, vector<32x128xf32>
    %cst_31 = arith.constant dense<0.000000e+00> : vector<8x128xf32>
    %138 = tpu.matmul %82, %137, %cst_31 {dimension_numbers = #tpu.dot_dimension_numbers<[1], [0], [0], [1], [0, 0, 1, 1], [], []>} : vector<8x32xf32>, vector<32x128xf32>, vector<8x128xf32> -> vector<8x128xf32>
    %c0_32 = arith.constant 0 : index
    %c0_33 = arith.constant 0 : index
    %139 = vector.load %arg7[%c0_32, %c0_33] : memref<1x128xf32, #tpu.memory_space<vmem>>, vector<1x128xf32>
    %140 = vector.broadcast %139 : vector<1x128xf32> to vector<8x128xf32>
    %141 = arith.addf %138, %140 : vector<8x128xf32>
    %c0_34 = arith.constant 0 : index
    %c0_35 = arith.constant 0 : index
    %142 = vector.load %arg6[%c0_34, %c0_35] : memref<32x128xf32, #tpu.memory_space<vmem>>, vector<32x128xf32>
    %cst_36 = arith.constant dense<0.000000e+00> : vector<8x128xf32>
    %143 = tpu.matmul %105, %142, %cst_36 {dimension_numbers = #tpu.dot_dimension_numbers<[1], [0], [0], [1], [0, 0, 1, 1], [], []>} : vector<8x32xf32>, vector<32x128xf32>, vector<8x128xf32> -> vector<8x128xf32>
    %144 = arith.addf %141, %143 : vector<8x128xf32>
    %145 = math.tanh %144 : vector<8x128xf32>
    %146 = arith.mulf %145, %22 : vector<8x128xf32>
    %147 = arith.addf %146, %25 : vector<8x128xf32>
    %148 = vector.extract_strided_slice %147 {offsets = [0, 0], sizes = [8, 32], strides = [1, 1]} : vector<8x128xf32> to vector<8x32xf32>
    %149 = vector.extract_strided_slice %147 {offsets = [0, 32], sizes = [8, 32], strides = [1, 1]} : vector<8x128xf32> to vector<8x32xf32>
    %150 = vector.extract_strided_slice %147 {offsets = [0, 64], sizes = [8, 32], strides = [1, 1]} : vector<8x128xf32> to vector<8x32xf32>
    %151 = vector.extract_strided_slice %147 {offsets = [0, 96], sizes = [8, 32], strides = [1, 1]} : vector<8x128xf32> to vector<8x32xf32>
    %152 = arith.mulf %149, %108 : vector<8x32xf32>
    %153 = arith.mulf %148, %151 : vector<8x32xf32>
    %154 = arith.addf %152, %153 : vector<8x32xf32>
    %155 = math.tanh %154 : vector<8x32xf32>
    %156 = arith.mulf %150, %155 : vector<8x32xf32>
    %157 = vector.shape_cast %4 : vector<8x1xi1> to vector<8x1xi1>
    %158 = vector.broadcast %157 : vector<8x1xi1> to vector<8x32xi1>
    %159 = arith.select %158, %156, %105 : vector<8x32xi1>, vector<8x32xf32>
    %160 = vector.shape_cast %4 : vector<8x1xi1> to vector<8x1xi1>
    %161 = vector.broadcast %160 : vector<8x1xi1> to vector<8x32xi1>
    %162 = arith.select %161, %154, %108 : vector<8x32xi1>, vector<8x32xf32>
    %163 = vector.shape_cast %4 : vector<8x1xi1> to vector<8x1xi1>
    %164 = vector.broadcast %163 : vector<8x1xi1> to vector<8x32xi1>
    %165 = arith.select %164, %156, %32 : vector<8x32xi1>, vector<8x32xf32>
    %c0_37 = arith.constant 0 : index
    %c0_38 = arith.constant 0 : index
    %166 = vector.load %arg8[%c0_37, %c0_38] : memref<32x128xf32, #tpu.memory_space<vmem>>, vector<32x128xf32>
    %cst_39 = arith.constant dense<0.000000e+00> : vector<8x128xf32>
    %167 = tpu.matmul %111, %166, %cst_39 {dimension_numbers = #tpu.dot_dimension_numbers<[1], [0], [0], [1], [0, 0, 1, 1], [], []>} : vector<8x32xf32>, vector<32x128xf32>, vector<8x128xf32> -> vector<8x128xf32>
    %c0_40 = arith.constant 0 : index
    %c0_41 = arith.constant 0 : index
    %168 = vector.load %arg10[%c0_40, %c0_41] : memref<1x128xf32, #tpu.memory_space<vmem>>, vector<1x128xf32>
    %169 = vector.broadcast %168 : vector<1x128xf32> to vector<8x128xf32>
    %170 = arith.addf %167, %169 : vector<8x128xf32>
    %c0_42 = arith.constant 0 : index
    %c0_43 = arith.constant 0 : index
    %171 = vector.load %arg9[%c0_42, %c0_43] : memref<32x128xf32, #tpu.memory_space<vmem>>, vector<32x128xf32>
    %cst_44 = arith.constant dense<0.000000e+00> : vector<8x128xf32>
    %172 = tpu.matmul %32, %171, %cst_44 {dimension_numbers = #tpu.dot_dimension_numbers<[1], [0], [0], [1], [0, 0, 1, 1], [], []>} : vector<8x32xf32>, vector<32x128xf32>, vector<8x128xf32> -> vector<8x128xf32>
    %173 = arith.addf %170, %172 : vector<8x128xf32>
    %174 = math.tanh %173 : vector<8x128xf32>
    %175 = arith.mulf %174, %22 : vector<8x128xf32>
    %176 = arith.addf %175, %25 : vector<8x128xf32>
    %177 = vector.extract_strided_slice %176 {offsets = [0, 0], sizes = [8, 32], strides = [1, 1]} : vector<8x128xf32> to vector<8x32xf32>
    %178 = vector.extract_strided_slice %176 {offsets = [0, 32], sizes = [8, 32], strides = [1, 1]} : vector<8x128xf32> to vector<8x32xf32>
    %179 = vector.extract_strided_slice %176 {offsets = [0, 64], sizes = [8, 32], strides = [1, 1]} : vector<8x128xf32> to vector<8x32xf32>
    %180 = vector.extract_strided_slice %176 {offsets = [0, 96], sizes = [8, 32], strides = [1, 1]} : vector<8x128xf32> to vector<8x32xf32>
    %181 = arith.mulf %178, %32 : vector<8x32xf32>
    %182 = arith.mulf %177, %180 : vector<8x32xf32>
    %183 = arith.addf %181, %182 : vector<8x32xf32>
    %184 = math.tanh %183 : vector<8x32xf32>
    %185 = arith.mulf %179, %184 : vector<8x32xf32>
    %186 = vector.shape_cast %2 : vector<8x1xi1> to vector<8x1xi1>
    %187 = vector.broadcast %186 : vector<8x1xi1> to vector<8x32xi1>
    %188 = arith.select %187, %185, %32 : vector<8x32xi1>, vector<8x32xf32>
    %189 = vector.shape_cast %2 : vector<8x1xi1> to vector<8x1xi1>
    %190 = vector.broadcast %189 : vector<8x1xi1> to vector<8x32xi1>
    %191 = arith.select %190, %183, %32 : vector<8x32xi1>, vector<8x32xf32>
    %192 = vector.extract_strided_slice %31 {offsets = [24, 0], sizes = [8, 128], strides = [1, 1]} : vector<64x128xf32> to vector<8x128xf32>
    %c0_45 = arith.constant 0 : index
    %c0_46 = arith.constant 0 : index
    %193 = vector.load %arg3[%c0_45, %c0_46] : memref<32x128xf32, #tpu.memory_space<vmem>>, vector<32x128xf32>
    %cst_47 = arith.constant dense<0.000000e+00> : vector<8x128xf32>
    %194 = tpu.matmul %130, %193, %cst_47 {dimension_numbers = #tpu.dot_dimension_numbers<[1], [0], [0], [1], [0, 0, 1, 1], [], []>} : vector<8x32xf32>, vector<32x128xf32>, vector<8x128xf32> -> vector<8x128xf32>
    %195 = arith.addf %192, %194 : vector<8x128xf32>
    %196 = math.tanh %195 : vector<8x128xf32>
    %197 = arith.mulf %196, %22 : vector<8x128xf32>
    %198 = arith.addf %197, %25 : vector<8x128xf32>
    %199 = vector.extract_strided_slice %198 {offsets = [0, 0], sizes = [8, 32], strides = [1, 1]} : vector<8x128xf32> to vector<8x32xf32>
    %200 = vector.extract_strided_slice %198 {offsets = [0, 32], sizes = [8, 32], strides = [1, 1]} : vector<8x128xf32> to vector<8x32xf32>
    %201 = vector.extract_strided_slice %198 {offsets = [0, 64], sizes = [8, 32], strides = [1, 1]} : vector<8x128xf32> to vector<8x32xf32>
    %202 = vector.extract_strided_slice %198 {offsets = [0, 96], sizes = [8, 32], strides = [1, 1]} : vector<8x128xf32> to vector<8x32xf32>
    %203 = arith.mulf %200, %133 : vector<8x32xf32>
    %204 = arith.mulf %199, %202 : vector<8x32xf32>
    %205 = arith.addf %203, %204 : vector<8x32xf32>
    %206 = math.tanh %205 : vector<8x32xf32>
    %207 = arith.mulf %201, %206 : vector<8x32xf32>
    %208 = vector.shape_cast %8 : vector<8x1xi1> to vector<8x1xi1>
    %209 = vector.broadcast %208 : vector<8x1xi1> to vector<8x32xi1>
    %210 = arith.select %209, %207, %130 : vector<8x32xi1>, vector<8x32xf32>
    %211 = vector.shape_cast %8 : vector<8x1xi1> to vector<8x1xi1>
    %212 = vector.broadcast %211 : vector<8x1xi1> to vector<8x32xi1>
    %213 = arith.select %212, %205, %133 : vector<8x32xi1>, vector<8x32xf32>
    %214 = vector.shape_cast %8 : vector<8x1xi1> to vector<8x1xi1>
    %215 = vector.broadcast %214 : vector<8x1xi1> to vector<8x32xi1>
    %216 = arith.select %215, %207, %32 : vector<8x32xi1>, vector<8x32xf32>
    %c0_48 = arith.constant 0 : index
    %c0_49 = arith.constant 0 : index
    %217 = vector.load %arg5[%c0_48, %c0_49] : memref<32x128xf32, #tpu.memory_space<vmem>>, vector<32x128xf32>
    %cst_50 = arith.constant dense<0.000000e+00> : vector<8x128xf32>
    %218 = tpu.matmul %136, %217, %cst_50 {dimension_numbers = #tpu.dot_dimension_numbers<[1], [0], [0], [1], [0, 0, 1, 1], [], []>} : vector<8x32xf32>, vector<32x128xf32>, vector<8x128xf32> -> vector<8x128xf32>
    %c0_51 = arith.constant 0 : index
    %c0_52 = arith.constant 0 : index
    %219 = vector.load %arg7[%c0_51, %c0_52] : memref<1x128xf32, #tpu.memory_space<vmem>>, vector<1x128xf32>
    %220 = vector.broadcast %219 : vector<1x128xf32> to vector<8x128xf32>
    %221 = arith.addf %218, %220 : vector<8x128xf32>
    %c0_53 = arith.constant 0 : index
    %c0_54 = arith.constant 0 : index
    %222 = vector.load %arg6[%c0_53, %c0_54] : memref<32x128xf32, #tpu.memory_space<vmem>>, vector<32x128xf32>
    %cst_55 = arith.constant dense<0.000000e+00> : vector<8x128xf32>
    %223 = tpu.matmul %159, %222, %cst_55 {dimension_numbers = #tpu.dot_dimension_numbers<[1], [0], [0], [1], [0, 0, 1, 1], [], []>} : vector<8x32xf32>, vector<32x128xf32>, vector<8x128xf32> -> vector<8x128xf32>
    %224 = arith.addf %221, %223 : vector<8x128xf32>
    %225 = math.tanh %224 : vector<8x128xf32>
    %226 = arith.mulf %225, %22 : vector<8x128xf32>
    %227 = arith.addf %226, %25 : vector<8x128xf32>
    %228 = vector.extract_strided_slice %227 {offsets = [0, 0], sizes = [8, 32], strides = [1, 1]} : vector<8x128xf32> to vector<8x32xf32>
    %229 = vector.extract_strided_slice %227 {offsets = [0, 32], sizes = [8, 32], strides = [1, 1]} : vector<8x128xf32> to vector<8x32xf32>
    %230 = vector.extract_strided_slice %227 {offsets = [0, 64], sizes = [8, 32], strides = [1, 1]} : vector<8x128xf32> to vector<8x32xf32>
    %231 = vector.extract_strided_slice %227 {offsets = [0, 96], sizes = [8, 32], strides = [1, 1]} : vector<8x128xf32> to vector<8x32xf32>
    %232 = arith.mulf %229, %162 : vector<8x32xf32>
    %233 = arith.mulf %228, %231 : vector<8x32xf32>
    %234 = arith.addf %232, %233 : vector<8x32xf32>
    %235 = math.tanh %234 : vector<8x32xf32>
    %236 = arith.mulf %230, %235 : vector<8x32xf32>
    %237 = vector.shape_cast %6 : vector<8x1xi1> to vector<8x1xi1>
    %238 = vector.broadcast %237 : vector<8x1xi1> to vector<8x32xi1>
    %239 = arith.select %238, %236, %159 : vector<8x32xi1>, vector<8x32xf32>
    %240 = vector.shape_cast %6 : vector<8x1xi1> to vector<8x1xi1>
    %241 = vector.broadcast %240 : vector<8x1xi1> to vector<8x32xi1>
    %242 = arith.select %241, %234, %162 : vector<8x32xi1>, vector<8x32xf32>
    %243 = vector.shape_cast %6 : vector<8x1xi1> to vector<8x1xi1>
    %244 = vector.broadcast %243 : vector<8x1xi1> to vector<8x32xi1>
    %245 = arith.select %244, %236, %32 : vector<8x32xi1>, vector<8x32xf32>
    %c0_56 = arith.constant 0 : index
    %c0_57 = arith.constant 0 : index
    %246 = vector.load %arg8[%c0_56, %c0_57] : memref<32x128xf32, #tpu.memory_space<vmem>>, vector<32x128xf32>
    %cst_58 = arith.constant dense<0.000000e+00> : vector<8x128xf32>
    %247 = tpu.matmul %165, %246, %cst_58 {dimension_numbers = #tpu.dot_dimension_numbers<[1], [0], [0], [1], [0, 0, 1, 1], [], []>} : vector<8x32xf32>, vector<32x128xf32>, vector<8x128xf32> -> vector<8x128xf32>
    %c0_59 = arith.constant 0 : index
    %c0_60 = arith.constant 0 : index
    %248 = vector.load %arg10[%c0_59, %c0_60] : memref<1x128xf32, #tpu.memory_space<vmem>>, vector<1x128xf32>
    %249 = vector.broadcast %248 : vector<1x128xf32> to vector<8x128xf32>
    %250 = arith.addf %247, %249 : vector<8x128xf32>
    %c0_61 = arith.constant 0 : index
    %c0_62 = arith.constant 0 : index
    %251 = vector.load %arg9[%c0_61, %c0_62] : memref<32x128xf32, #tpu.memory_space<vmem>>, vector<32x128xf32>
    %cst_63 = arith.constant dense<0.000000e+00> : vector<8x128xf32>
    %252 = tpu.matmul %188, %251, %cst_63 {dimension_numbers = #tpu.dot_dimension_numbers<[1], [0], [0], [1], [0, 0, 1, 1], [], []>} : vector<8x32xf32>, vector<32x128xf32>, vector<8x128xf32> -> vector<8x128xf32>
    %253 = arith.addf %250, %252 : vector<8x128xf32>
    %254 = math.tanh %253 : vector<8x128xf32>
    %255 = arith.mulf %254, %22 : vector<8x128xf32>
    %256 = arith.addf %255, %25 : vector<8x128xf32>
    %257 = vector.extract_strided_slice %256 {offsets = [0, 0], sizes = [8, 32], strides = [1, 1]} : vector<8x128xf32> to vector<8x32xf32>
    %258 = vector.extract_strided_slice %256 {offsets = [0, 32], sizes = [8, 32], strides = [1, 1]} : vector<8x128xf32> to vector<8x32xf32>
    %259 = vector.extract_strided_slice %256 {offsets = [0, 64], sizes = [8, 32], strides = [1, 1]} : vector<8x128xf32> to vector<8x32xf32>
    %260 = vector.extract_strided_slice %256 {offsets = [0, 96], sizes = [8, 32], strides = [1, 1]} : vector<8x128xf32> to vector<8x32xf32>
    %261 = arith.mulf %258, %191 : vector<8x32xf32>
    %262 = arith.mulf %257, %260 : vector<8x32xf32>
    %263 = arith.addf %261, %262 : vector<8x32xf32>
    %264 = math.tanh %263 : vector<8x32xf32>
    %265 = arith.mulf %259, %264 : vector<8x32xf32>
    %266 = vector.shape_cast %4 : vector<8x1xi1> to vector<8x1xi1>
    %267 = vector.broadcast %266 : vector<8x1xi1> to vector<8x32xi1>
    %268 = arith.select %267, %265, %188 : vector<8x32xi1>, vector<8x32xf32>
    %269 = vector.shape_cast %4 : vector<8x1xi1> to vector<8x1xi1>
    %270 = vector.broadcast %269 : vector<8x1xi1> to vector<8x32xi1>
    %271 = arith.select %270, %263, %191 : vector<8x32xi1>, vector<8x32xf32>
    %272 = vector.extract_strided_slice %31 {offsets = [32, 0], sizes = [8, 128], strides = [1, 1]} : vector<64x128xf32> to vector<8x128xf32>
    %c0_64 = arith.constant 0 : index
    %c0_65 = arith.constant 0 : index
    %273 = vector.load %arg3[%c0_64, %c0_65] : memref<32x128xf32, #tpu.memory_space<vmem>>, vector<32x128xf32>
    %cst_66 = arith.constant dense<0.000000e+00> : vector<8x128xf32>
    %274 = tpu.matmul %210, %273, %cst_66 {dimension_numbers = #tpu.dot_dimension_numbers<[1], [0], [0], [1], [0, 0, 1, 1], [], []>} : vector<8x32xf32>, vector<32x128xf32>, vector<8x128xf32> -> vector<8x128xf32>
    %275 = arith.addf %272, %274 : vector<8x128xf32>
    %276 = math.tanh %275 : vector<8x128xf32>
    %277 = arith.mulf %276, %22 : vector<8x128xf32>
    %278 = arith.addf %277, %25 : vector<8x128xf32>
    %279 = vector.extract_strided_slice %278 {offsets = [0, 0], sizes = [8, 32], strides = [1, 1]} : vector<8x128xf32> to vector<8x32xf32>
    %280 = vector.extract_strided_slice %278 {offsets = [0, 32], sizes = [8, 32], strides = [1, 1]} : vector<8x128xf32> to vector<8x32xf32>
    %281 = vector.extract_strided_slice %278 {offsets = [0, 64], sizes = [8, 32], strides = [1, 1]} : vector<8x128xf32> to vector<8x32xf32>
    %282 = vector.extract_strided_slice %278 {offsets = [0, 96], sizes = [8, 32], strides = [1, 1]} : vector<8x128xf32> to vector<8x32xf32>
    %283 = arith.mulf %280, %213 : vector<8x32xf32>
    %284 = arith.mulf %279, %282 : vector<8x32xf32>
    %285 = arith.addf %283, %284 : vector<8x32xf32>
    %286 = math.tanh %285 : vector<8x32xf32>
    %287 = arith.mulf %281, %286 : vector<8x32xf32>
    %288 = vector.shape_cast %10 : vector<8x1xi1> to vector<8x1xi1>
    %289 = vector.broadcast %288 : vector<8x1xi1> to vector<8x32xi1>
    %290 = arith.select %289, %287, %210 : vector<8x32xi1>, vector<8x32xf32>
    %291 = vector.shape_cast %10 : vector<8x1xi1> to vector<8x1xi1>
    %292 = vector.broadcast %291 : vector<8x1xi1> to vector<8x32xi1>
    %293 = arith.select %292, %285, %213 : vector<8x32xi1>, vector<8x32xf32>
    %294 = vector.shape_cast %10 : vector<8x1xi1> to vector<8x1xi1>
    %295 = vector.broadcast %294 : vector<8x1xi1> to vector<8x32xi1>
    %296 = arith.select %295, %287, %32 : vector<8x32xi1>, vector<8x32xf32>
    %c0_67 = arith.constant 0 : index
    %c0_68 = arith.constant 0 : index
    %297 = vector.load %arg5[%c0_67, %c0_68] : memref<32x128xf32, #tpu.memory_space<vmem>>, vector<32x128xf32>
    %cst_69 = arith.constant dense<0.000000e+00> : vector<8x128xf32>
    %298 = tpu.matmul %216, %297, %cst_69 {dimension_numbers = #tpu.dot_dimension_numbers<[1], [0], [0], [1], [0, 0, 1, 1], [], []>} : vector<8x32xf32>, vector<32x128xf32>, vector<8x128xf32> -> vector<8x128xf32>
    %c0_70 = arith.constant 0 : index
    %c0_71 = arith.constant 0 : index
    %299 = vector.load %arg7[%c0_70, %c0_71] : memref<1x128xf32, #tpu.memory_space<vmem>>, vector<1x128xf32>
    %300 = vector.broadcast %299 : vector<1x128xf32> to vector<8x128xf32>
    %301 = arith.addf %298, %300 : vector<8x128xf32>
    %c0_72 = arith.constant 0 : index
    %c0_73 = arith.constant 0 : index
    %302 = vector.load %arg6[%c0_72, %c0_73] : memref<32x128xf32, #tpu.memory_space<vmem>>, vector<32x128xf32>
    %cst_74 = arith.constant dense<0.000000e+00> : vector<8x128xf32>
    %303 = tpu.matmul %239, %302, %cst_74 {dimension_numbers = #tpu.dot_dimension_numbers<[1], [0], [0], [1], [0, 0, 1, 1], [], []>} : vector<8x32xf32>, vector<32x128xf32>, vector<8x128xf32> -> vector<8x128xf32>
    %304 = arith.addf %301, %303 : vector<8x128xf32>
    %305 = math.tanh %304 : vector<8x128xf32>
    %306 = arith.mulf %305, %22 : vector<8x128xf32>
    %307 = arith.addf %306, %25 : vector<8x128xf32>
    %308 = vector.extract_strided_slice %307 {offsets = [0, 0], sizes = [8, 32], strides = [1, 1]} : vector<8x128xf32> to vector<8x32xf32>
    %309 = vector.extract_strided_slice %307 {offsets = [0, 32], sizes = [8, 32], strides = [1, 1]} : vector<8x128xf32> to vector<8x32xf32>
    %310 = vector.extract_strided_slice %307 {offsets = [0, 64], sizes = [8, 32], strides = [1, 1]} : vector<8x128xf32> to vector<8x32xf32>
    %311 = vector.extract_strided_slice %307 {offsets = [0, 96], sizes = [8, 32], strides = [1, 1]} : vector<8x128xf32> to vector<8x32xf32>
    %312 = arith.mulf %309, %242 : vector<8x32xf32>
    %313 = arith.mulf %308, %311 : vector<8x32xf32>
    %314 = arith.addf %312, %313 : vector<8x32xf32>
    %315 = math.tanh %314 : vector<8x32xf32>
    %316 = arith.mulf %310, %315 : vector<8x32xf32>
    %317 = vector.shape_cast %8 : vector<8x1xi1> to vector<8x1xi1>
    %318 = vector.broadcast %317 : vector<8x1xi1> to vector<8x32xi1>
    %319 = arith.select %318, %316, %239 : vector<8x32xi1>, vector<8x32xf32>
    %320 = vector.shape_cast %8 : vector<8x1xi1> to vector<8x1xi1>
    %321 = vector.broadcast %320 : vector<8x1xi1> to vector<8x32xi1>
    %322 = arith.select %321, %314, %242 : vector<8x32xi1>, vector<8x32xf32>
    %323 = vector.shape_cast %8 : vector<8x1xi1> to vector<8x1xi1>
    %324 = vector.broadcast %323 : vector<8x1xi1> to vector<8x32xi1>
    %325 = arith.select %324, %316, %32 : vector<8x32xi1>, vector<8x32xf32>
    %c0_75 = arith.constant 0 : index
    %c0_76 = arith.constant 0 : index
    %326 = vector.load %arg8[%c0_75, %c0_76] : memref<32x128xf32, #tpu.memory_space<vmem>>, vector<32x128xf32>
    %cst_77 = arith.constant dense<0.000000e+00> : vector<8x128xf32>
    %327 = tpu.matmul %245, %326, %cst_77 {dimension_numbers = #tpu.dot_dimension_numbers<[1], [0], [0], [1], [0, 0, 1, 1], [], []>} : vector<8x32xf32>, vector<32x128xf32>, vector<8x128xf32> -> vector<8x128xf32>
    %c0_78 = arith.constant 0 : index
    %c0_79 = arith.constant 0 : index
    %328 = vector.load %arg10[%c0_78, %c0_79] : memref<1x128xf32, #tpu.memory_space<vmem>>, vector<1x128xf32>
    %329 = vector.broadcast %328 : vector<1x128xf32> to vector<8x128xf32>
    %330 = arith.addf %327, %329 : vector<8x128xf32>
    %c0_80 = arith.constant 0 : index
    %c0_81 = arith.constant 0 : index
    %331 = vector.load %arg9[%c0_80, %c0_81] : memref<32x128xf32, #tpu.memory_space<vmem>>, vector<32x128xf32>
    %cst_82 = arith.constant dense<0.000000e+00> : vector<8x128xf32>
    %332 = tpu.matmul %268, %331, %cst_82 {dimension_numbers = #tpu.dot_dimension_numbers<[1], [0], [0], [1], [0, 0, 1, 1], [], []>} : vector<8x32xf32>, vector<32x128xf32>, vector<8x128xf32> -> vector<8x128xf32>
    %333 = arith.addf %330, %332 : vector<8x128xf32>
    %334 = math.tanh %333 : vector<8x128xf32>
    %335 = arith.mulf %334, %22 : vector<8x128xf32>
    %336 = arith.addf %335, %25 : vector<8x128xf32>
    %337 = vector.extract_strided_slice %336 {offsets = [0, 0], sizes = [8, 32], strides = [1, 1]} : vector<8x128xf32> to vector<8x32xf32>
    %338 = vector.extract_strided_slice %336 {offsets = [0, 32], sizes = [8, 32], strides = [1, 1]} : vector<8x128xf32> to vector<8x32xf32>
    %339 = vector.extract_strided_slice %336 {offsets = [0, 64], sizes = [8, 32], strides = [1, 1]} : vector<8x128xf32> to vector<8x32xf32>
    %340 = vector.extract_strided_slice %336 {offsets = [0, 96], sizes = [8, 32], strides = [1, 1]} : vector<8x128xf32> to vector<8x32xf32>
    %341 = arith.mulf %338, %271 : vector<8x32xf32>
    %342 = arith.mulf %337, %340 : vector<8x32xf32>
    %343 = arith.addf %341, %342 : vector<8x32xf32>
    %344 = math.tanh %343 : vector<8x32xf32>
    %345 = arith.mulf %339, %344 : vector<8x32xf32>
    %346 = vector.shape_cast %6 : vector<8x1xi1> to vector<8x1xi1>
    %347 = vector.broadcast %346 : vector<8x1xi1> to vector<8x32xi1>
    %348 = arith.select %347, %345, %268 : vector<8x32xi1>, vector<8x32xf32>
    %349 = vector.shape_cast %6 : vector<8x1xi1> to vector<8x1xi1>
    %350 = vector.broadcast %349 : vector<8x1xi1> to vector<8x32xi1>
    %351 = arith.select %350, %343, %271 : vector<8x32xi1>, vector<8x32xf32>
    %352 = vector.extract_strided_slice %31 {offsets = [40, 0], sizes = [8, 128], strides = [1, 1]} : vector<64x128xf32> to vector<8x128xf32>
    %c0_83 = arith.constant 0 : index
    %c0_84 = arith.constant 0 : index
    %353 = vector.load %arg3[%c0_83, %c0_84] : memref<32x128xf32, #tpu.memory_space<vmem>>, vector<32x128xf32>
    %cst_85 = arith.constant dense<0.000000e+00> : vector<8x128xf32>
    %354 = tpu.matmul %290, %353, %cst_85 {dimension_numbers = #tpu.dot_dimension_numbers<[1], [0], [0], [1], [0, 0, 1, 1], [], []>} : vector<8x32xf32>, vector<32x128xf32>, vector<8x128xf32> -> vector<8x128xf32>
    %355 = arith.addf %352, %354 : vector<8x128xf32>
    %356 = math.tanh %355 : vector<8x128xf32>
    %357 = arith.mulf %356, %22 : vector<8x128xf32>
    %358 = arith.addf %357, %25 : vector<8x128xf32>
    %359 = vector.extract_strided_slice %358 {offsets = [0, 0], sizes = [8, 32], strides = [1, 1]} : vector<8x128xf32> to vector<8x32xf32>
    %360 = vector.extract_strided_slice %358 {offsets = [0, 32], sizes = [8, 32], strides = [1, 1]} : vector<8x128xf32> to vector<8x32xf32>
    %361 = vector.extract_strided_slice %358 {offsets = [0, 64], sizes = [8, 32], strides = [1, 1]} : vector<8x128xf32> to vector<8x32xf32>
    %362 = vector.extract_strided_slice %358 {offsets = [0, 96], sizes = [8, 32], strides = [1, 1]} : vector<8x128xf32> to vector<8x32xf32>
    %363 = arith.mulf %360, %293 : vector<8x32xf32>
    %364 = arith.mulf %359, %362 : vector<8x32xf32>
    %365 = arith.addf %363, %364 : vector<8x32xf32>
    %366 = math.tanh %365 : vector<8x32xf32>
    %367 = arith.mulf %361, %366 : vector<8x32xf32>
    %368 = vector.shape_cast %12 : vector<8x1xi1> to vector<8x1xi1>
    %369 = vector.broadcast %368 : vector<8x1xi1> to vector<8x32xi1>
    %370 = arith.select %369, %367, %290 : vector<8x32xi1>, vector<8x32xf32>
    %371 = vector.shape_cast %12 : vector<8x1xi1> to vector<8x1xi1>
    %372 = vector.broadcast %371 : vector<8x1xi1> to vector<8x32xi1>
    %373 = arith.select %372, %365, %293 : vector<8x32xi1>, vector<8x32xf32>
    %374 = vector.shape_cast %12 : vector<8x1xi1> to vector<8x1xi1>
    %375 = vector.broadcast %374 : vector<8x1xi1> to vector<8x32xi1>
    %376 = arith.select %375, %367, %32 : vector<8x32xi1>, vector<8x32xf32>
    %c0_86 = arith.constant 0 : index
    %c0_87 = arith.constant 0 : index
    %377 = vector.load %arg5[%c0_86, %c0_87] : memref<32x128xf32, #tpu.memory_space<vmem>>, vector<32x128xf32>
    %cst_88 = arith.constant dense<0.000000e+00> : vector<8x128xf32>
    %378 = tpu.matmul %296, %377, %cst_88 {dimension_numbers = #tpu.dot_dimension_numbers<[1], [0], [0], [1], [0, 0, 1, 1], [], []>} : vector<8x32xf32>, vector<32x128xf32>, vector<8x128xf32> -> vector<8x128xf32>
    %c0_89 = arith.constant 0 : index
    %c0_90 = arith.constant 0 : index
    %379 = vector.load %arg7[%c0_89, %c0_90] : memref<1x128xf32, #tpu.memory_space<vmem>>, vector<1x128xf32>
    %380 = vector.broadcast %379 : vector<1x128xf32> to vector<8x128xf32>
    %381 = arith.addf %378, %380 : vector<8x128xf32>
    %c0_91 = arith.constant 0 : index
    %c0_92 = arith.constant 0 : index
    %382 = vector.load %arg6[%c0_91, %c0_92] : memref<32x128xf32, #tpu.memory_space<vmem>>, vector<32x128xf32>
    %cst_93 = arith.constant dense<0.000000e+00> : vector<8x128xf32>
    %383 = tpu.matmul %319, %382, %cst_93 {dimension_numbers = #tpu.dot_dimension_numbers<[1], [0], [0], [1], [0, 0, 1, 1], [], []>} : vector<8x32xf32>, vector<32x128xf32>, vector<8x128xf32> -> vector<8x128xf32>
    %384 = arith.addf %381, %383 : vector<8x128xf32>
    %385 = math.tanh %384 : vector<8x128xf32>
    %386 = arith.mulf %385, %22 : vector<8x128xf32>
    %387 = arith.addf %386, %25 : vector<8x128xf32>
    %388 = vector.extract_strided_slice %387 {offsets = [0, 0], sizes = [8, 32], strides = [1, 1]} : vector<8x128xf32> to vector<8x32xf32>
    %389 = vector.extract_strided_slice %387 {offsets = [0, 32], sizes = [8, 32], strides = [1, 1]} : vector<8x128xf32> to vector<8x32xf32>
    %390 = vector.extract_strided_slice %387 {offsets = [0, 64], sizes = [8, 32], strides = [1, 1]} : vector<8x128xf32> to vector<8x32xf32>
    %391 = vector.extract_strided_slice %387 {offsets = [0, 96], sizes = [8, 32], strides = [1, 1]} : vector<8x128xf32> to vector<8x32xf32>
    %392 = arith.mulf %389, %322 : vector<8x32xf32>
    %393 = arith.mulf %388, %391 : vector<8x32xf32>
    %394 = arith.addf %392, %393 : vector<8x32xf32>
    %395 = math.tanh %394 : vector<8x32xf32>
    %396 = arith.mulf %390, %395 : vector<8x32xf32>
    %397 = vector.shape_cast %10 : vector<8x1xi1> to vector<8x1xi1>
    %398 = vector.broadcast %397 : vector<8x1xi1> to vector<8x32xi1>
    %399 = arith.select %398, %396, %319 : vector<8x32xi1>, vector<8x32xf32>
    %400 = vector.shape_cast %10 : vector<8x1xi1> to vector<8x1xi1>
    %401 = vector.broadcast %400 : vector<8x1xi1> to vector<8x32xi1>
    %402 = arith.select %401, %394, %322 : vector<8x32xi1>, vector<8x32xf32>
    %403 = vector.shape_cast %10 : vector<8x1xi1> to vector<8x1xi1>
    %404 = vector.broadcast %403 : vector<8x1xi1> to vector<8x32xi1>
    %405 = arith.select %404, %396, %32 : vector<8x32xi1>, vector<8x32xf32>
    %c0_94 = arith.constant 0 : index
    %c0_95 = arith.constant 0 : index
    %406 = vector.load %arg8[%c0_94, %c0_95] : memref<32x128xf32, #tpu.memory_space<vmem>>, vector<32x128xf32>
    %cst_96 = arith.constant dense<0.000000e+00> : vector<8x128xf32>
    %407 = tpu.matmul %325, %406, %cst_96 {dimension_numbers = #tpu.dot_dimension_numbers<[1], [0], [0], [1], [0, 0, 1, 1], [], []>} : vector<8x32xf32>, vector<32x128xf32>, vector<8x128xf32> -> vector<8x128xf32>
    %c0_97 = arith.constant 0 : index
    %c0_98 = arith.constant 0 : index
    %408 = vector.load %arg10[%c0_97, %c0_98] : memref<1x128xf32, #tpu.memory_space<vmem>>, vector<1x128xf32>
    %409 = vector.broadcast %408 : vector<1x128xf32> to vector<8x128xf32>
    %410 = arith.addf %407, %409 : vector<8x128xf32>
    %c0_99 = arith.constant 0 : index
    %c0_100 = arith.constant 0 : index
    %411 = vector.load %arg9[%c0_99, %c0_100] : memref<32x128xf32, #tpu.memory_space<vmem>>, vector<32x128xf32>
    %cst_101 = arith.constant dense<0.000000e+00> : vector<8x128xf32>
    %412 = tpu.matmul %348, %411, %cst_101 {dimension_numbers = #tpu.dot_dimension_numbers<[1], [0], [0], [1], [0, 0, 1, 1], [], []>} : vector<8x32xf32>, vector<32x128xf32>, vector<8x128xf32> -> vector<8x128xf32>
    %413 = arith.addf %410, %412 : vector<8x128xf32>
    %414 = math.tanh %413 : vector<8x128xf32>
    %415 = arith.mulf %414, %22 : vector<8x128xf32>
    %416 = arith.addf %415, %25 : vector<8x128xf32>
    %417 = vector.extract_strided_slice %416 {offsets = [0, 0], sizes = [8, 32], strides = [1, 1]} : vector<8x128xf32> to vector<8x32xf32>
    %418 = vector.extract_strided_slice %416 {offsets = [0, 32], sizes = [8, 32], strides = [1, 1]} : vector<8x128xf32> to vector<8x32xf32>
    %419 = vector.extract_strided_slice %416 {offsets = [0, 64], sizes = [8, 32], strides = [1, 1]} : vector<8x128xf32> to vector<8x32xf32>
    %420 = vector.extract_strided_slice %416 {offsets = [0, 96], sizes = [8, 32], strides = [1, 1]} : vector<8x128xf32> to vector<8x32xf32>
    %421 = arith.mulf %418, %351 : vector<8x32xf32>
    %422 = arith.mulf %417, %420 : vector<8x32xf32>
    %423 = arith.addf %421, %422 : vector<8x32xf32>
    %424 = math.tanh %423 : vector<8x32xf32>
    %425 = arith.mulf %419, %424 : vector<8x32xf32>
    %426 = vector.shape_cast %8 : vector<8x1xi1> to vector<8x1xi1>
    %427 = vector.broadcast %426 : vector<8x1xi1> to vector<8x32xi1>
    %428 = arith.select %427, %425, %348 : vector<8x32xi1>, vector<8x32xf32>
    %429 = vector.shape_cast %8 : vector<8x1xi1> to vector<8x1xi1>
    %430 = vector.broadcast %429 : vector<8x1xi1> to vector<8x32xi1>
    %431 = arith.select %430, %423, %351 : vector<8x32xi1>, vector<8x32xf32>
    %432 = vector.extract_strided_slice %31 {offsets = [48, 0], sizes = [8, 128], strides = [1, 1]} : vector<64x128xf32> to vector<8x128xf32>
    %c0_102 = arith.constant 0 : index
    %c0_103 = arith.constant 0 : index
    %433 = vector.load %arg3[%c0_102, %c0_103] : memref<32x128xf32, #tpu.memory_space<vmem>>, vector<32x128xf32>
    %cst_104 = arith.constant dense<0.000000e+00> : vector<8x128xf32>
    %434 = tpu.matmul %370, %433, %cst_104 {dimension_numbers = #tpu.dot_dimension_numbers<[1], [0], [0], [1], [0, 0, 1, 1], [], []>} : vector<8x32xf32>, vector<32x128xf32>, vector<8x128xf32> -> vector<8x128xf32>
    %435 = arith.addf %432, %434 : vector<8x128xf32>
    %436 = math.tanh %435 : vector<8x128xf32>
    %437 = arith.mulf %436, %22 : vector<8x128xf32>
    %438 = arith.addf %437, %25 : vector<8x128xf32>
    %439 = vector.extract_strided_slice %438 {offsets = [0, 0], sizes = [8, 32], strides = [1, 1]} : vector<8x128xf32> to vector<8x32xf32>
    %440 = vector.extract_strided_slice %438 {offsets = [0, 32], sizes = [8, 32], strides = [1, 1]} : vector<8x128xf32> to vector<8x32xf32>
    %441 = vector.extract_strided_slice %438 {offsets = [0, 64], sizes = [8, 32], strides = [1, 1]} : vector<8x128xf32> to vector<8x32xf32>
    %442 = vector.extract_strided_slice %438 {offsets = [0, 96], sizes = [8, 32], strides = [1, 1]} : vector<8x128xf32> to vector<8x32xf32>
    %443 = arith.mulf %440, %373 : vector<8x32xf32>
    %444 = arith.mulf %439, %442 : vector<8x32xf32>
    %445 = arith.addf %443, %444 : vector<8x32xf32>
    %446 = math.tanh %445 : vector<8x32xf32>
    %447 = arith.mulf %441, %446 : vector<8x32xf32>
    %448 = vector.shape_cast %14 : vector<8x1xi1> to vector<8x1xi1>
    %449 = vector.broadcast %448 : vector<8x1xi1> to vector<8x32xi1>
    %450 = arith.select %449, %447, %370 : vector<8x32xi1>, vector<8x32xf32>
    %451 = vector.shape_cast %14 : vector<8x1xi1> to vector<8x1xi1>
    %452 = vector.broadcast %451 : vector<8x1xi1> to vector<8x32xi1>
    %453 = arith.select %452, %445, %373 : vector<8x32xi1>, vector<8x32xf32>
    %454 = vector.shape_cast %14 : vector<8x1xi1> to vector<8x1xi1>
    %455 = vector.broadcast %454 : vector<8x1xi1> to vector<8x32xi1>
    %456 = arith.select %455, %447, %32 : vector<8x32xi1>, vector<8x32xf32>
    %c0_105 = arith.constant 0 : index
    %c0_106 = arith.constant 0 : index
    %457 = vector.load %arg5[%c0_105, %c0_106] : memref<32x128xf32, #tpu.memory_space<vmem>>, vector<32x128xf32>
    %cst_107 = arith.constant dense<0.000000e+00> : vector<8x128xf32>
    %458 = tpu.matmul %376, %457, %cst_107 {dimension_numbers = #tpu.dot_dimension_numbers<[1], [0], [0], [1], [0, 0, 1, 1], [], []>} : vector<8x32xf32>, vector<32x128xf32>, vector<8x128xf32> -> vector<8x128xf32>
    %c0_108 = arith.constant 0 : index
    %c0_109 = arith.constant 0 : index
    %459 = vector.load %arg7[%c0_108, %c0_109] : memref<1x128xf32, #tpu.memory_space<vmem>>, vector<1x128xf32>
    %460 = vector.broadcast %459 : vector<1x128xf32> to vector<8x128xf32>
    %461 = arith.addf %458, %460 : vector<8x128xf32>
    %c0_110 = arith.constant 0 : index
    %c0_111 = arith.constant 0 : index
    %462 = vector.load %arg6[%c0_110, %c0_111] : memref<32x128xf32, #tpu.memory_space<vmem>>, vector<32x128xf32>
    %cst_112 = arith.constant dense<0.000000e+00> : vector<8x128xf32>
    %463 = tpu.matmul %399, %462, %cst_112 {dimension_numbers = #tpu.dot_dimension_numbers<[1], [0], [0], [1], [0, 0, 1, 1], [], []>} : vector<8x32xf32>, vector<32x128xf32>, vector<8x128xf32> -> vector<8x128xf32>
    %464 = arith.addf %461, %463 : vector<8x128xf32>
    %465 = math.tanh %464 : vector<8x128xf32>
    %466 = arith.mulf %465, %22 : vector<8x128xf32>
    %467 = arith.addf %466, %25 : vector<8x128xf32>
    %468 = vector.extract_strided_slice %467 {offsets = [0, 0], sizes = [8, 32], strides = [1, 1]} : vector<8x128xf32> to vector<8x32xf32>
    %469 = vector.extract_strided_slice %467 {offsets = [0, 32], sizes = [8, 32], strides = [1, 1]} : vector<8x128xf32> to vector<8x32xf32>
    %470 = vector.extract_strided_slice %467 {offsets = [0, 64], sizes = [8, 32], strides = [1, 1]} : vector<8x128xf32> to vector<8x32xf32>
    %471 = vector.extract_strided_slice %467 {offsets = [0, 96], sizes = [8, 32], strides = [1, 1]} : vector<8x128xf32> to vector<8x32xf32>
    %472 = arith.mulf %469, %402 : vector<8x32xf32>
    %473 = arith.mulf %468, %471 : vector<8x32xf32>
    %474 = arith.addf %472, %473 : vector<8x32xf32>
    %475 = math.tanh %474 : vector<8x32xf32>
    %476 = arith.mulf %470, %475 : vector<8x32xf32>
    %477 = vector.shape_cast %12 : vector<8x1xi1> to vector<8x1xi1>
    %478 = vector.broadcast %477 : vector<8x1xi1> to vector<8x32xi1>
    %479 = arith.select %478, %476, %399 : vector<8x32xi1>, vector<8x32xf32>
    %480 = vector.shape_cast %12 : vector<8x1xi1> to vector<8x1xi1>
    %481 = vector.broadcast %480 : vector<8x1xi1> to vector<8x32xi1>
    %482 = arith.select %481, %474, %402 : vector<8x32xi1>, vector<8x32xf32>
    %483 = vector.shape_cast %12 : vector<8x1xi1> to vector<8x1xi1>
    %484 = vector.broadcast %483 : vector<8x1xi1> to vector<8x32xi1>
    %485 = arith.select %484, %476, %32 : vector<8x32xi1>, vector<8x32xf32>
    %c0_113 = arith.constant 0 : index
    %c0_114 = arith.constant 0 : index
    %486 = vector.load %arg8[%c0_113, %c0_114] : memref<32x128xf32, #tpu.memory_space<vmem>>, vector<32x128xf32>
    %cst_115 = arith.constant dense<0.000000e+00> : vector<8x128xf32>
    %487 = tpu.matmul %405, %486, %cst_115 {dimension_numbers = #tpu.dot_dimension_numbers<[1], [0], [0], [1], [0, 0, 1, 1], [], []>} : vector<8x32xf32>, vector<32x128xf32>, vector<8x128xf32> -> vector<8x128xf32>
    %c0_116 = arith.constant 0 : index
    %c0_117 = arith.constant 0 : index
    %488 = vector.load %arg10[%c0_116, %c0_117] : memref<1x128xf32, #tpu.memory_space<vmem>>, vector<1x128xf32>
    %489 = vector.broadcast %488 : vector<1x128xf32> to vector<8x128xf32>
    %490 = arith.addf %487, %489 : vector<8x128xf32>
    %c0_118 = arith.constant 0 : index
    %c0_119 = arith.constant 0 : index
    %491 = vector.load %arg9[%c0_118, %c0_119] : memref<32x128xf32, #tpu.memory_space<vmem>>, vector<32x128xf32>
    %cst_120 = arith.constant dense<0.000000e+00> : vector<8x128xf32>
    %492 = tpu.matmul %428, %491, %cst_120 {dimension_numbers = #tpu.dot_dimension_numbers<[1], [0], [0], [1], [0, 0, 1, 1], [], []>} : vector<8x32xf32>, vector<32x128xf32>, vector<8x128xf32> -> vector<8x128xf32>
    %493 = arith.addf %490, %492 : vector<8x128xf32>
    %494 = math.tanh %493 : vector<8x128xf32>
    %495 = arith.mulf %494, %22 : vector<8x128xf32>
    %496 = arith.addf %495, %25 : vector<8x128xf32>
    %497 = vector.extract_strided_slice %496 {offsets = [0, 0], sizes = [8, 32], strides = [1, 1]} : vector<8x128xf32> to vector<8x32xf32>
    %498 = vector.extract_strided_slice %496 {offsets = [0, 32], sizes = [8, 32], strides = [1, 1]} : vector<8x128xf32> to vector<8x32xf32>
    %499 = vector.extract_strided_slice %496 {offsets = [0, 64], sizes = [8, 32], strides = [1, 1]} : vector<8x128xf32> to vector<8x32xf32>
    %500 = vector.extract_strided_slice %496 {offsets = [0, 96], sizes = [8, 32], strides = [1, 1]} : vector<8x128xf32> to vector<8x32xf32>
    %501 = arith.mulf %498, %431 : vector<8x32xf32>
    %502 = arith.mulf %497, %500 : vector<8x32xf32>
    %503 = arith.addf %501, %502 : vector<8x32xf32>
    %504 = math.tanh %503 : vector<8x32xf32>
    %505 = arith.mulf %499, %504 : vector<8x32xf32>
    %506 = vector.shape_cast %10 : vector<8x1xi1> to vector<8x1xi1>
    %507 = vector.broadcast %506 : vector<8x1xi1> to vector<8x32xi1>
    %508 = arith.select %507, %505, %428 : vector<8x32xi1>, vector<8x32xf32>
    %509 = vector.shape_cast %10 : vector<8x1xi1> to vector<8x1xi1>
    %510 = vector.broadcast %509 : vector<8x1xi1> to vector<8x32xi1>
    %511 = arith.select %510, %503, %431 : vector<8x32xi1>, vector<8x32xf32>
    %512 = vector.extract_strided_slice %31 {offsets = [56, 0], sizes = [8, 128], strides = [1, 1]} : vector<64x128xf32> to vector<8x128xf32>
    %c0_121 = arith.constant 0 : index
    %c0_122 = arith.constant 0 : index
    %513 = vector.load %arg3[%c0_121, %c0_122] : memref<32x128xf32, #tpu.memory_space<vmem>>, vector<32x128xf32>
    %cst_123 = arith.constant dense<0.000000e+00> : vector<8x128xf32>
    %514 = tpu.matmul %450, %513, %cst_123 {dimension_numbers = #tpu.dot_dimension_numbers<[1], [0], [0], [1], [0, 0, 1, 1], [], []>} : vector<8x32xf32>, vector<32x128xf32>, vector<8x128xf32> -> vector<8x128xf32>
    %515 = arith.addf %512, %514 : vector<8x128xf32>
    %516 = math.tanh %515 : vector<8x128xf32>
    %517 = arith.mulf %516, %22 : vector<8x128xf32>
    %518 = arith.addf %517, %25 : vector<8x128xf32>
    %519 = vector.extract_strided_slice %518 {offsets = [0, 0], sizes = [8, 32], strides = [1, 1]} : vector<8x128xf32> to vector<8x32xf32>
    %520 = vector.extract_strided_slice %518 {offsets = [0, 32], sizes = [8, 32], strides = [1, 1]} : vector<8x128xf32> to vector<8x32xf32>
    %521 = vector.extract_strided_slice %518 {offsets = [0, 64], sizes = [8, 32], strides = [1, 1]} : vector<8x128xf32> to vector<8x32xf32>
    %522 = vector.extract_strided_slice %518 {offsets = [0, 96], sizes = [8, 32], strides = [1, 1]} : vector<8x128xf32> to vector<8x32xf32>
    %523 = arith.mulf %520, %453 : vector<8x32xf32>
    %524 = arith.mulf %519, %522 : vector<8x32xf32>
    %525 = arith.addf %523, %524 : vector<8x32xf32>
    %526 = math.tanh %525 : vector<8x32xf32>
    %527 = arith.mulf %521, %526 : vector<8x32xf32>
    %528 = vector.shape_cast %16 : vector<8x1xi1> to vector<8x1xi1>
    %529 = vector.broadcast %528 : vector<8x1xi1> to vector<8x32xi1>
    %530 = arith.select %529, %527, %32 : vector<8x32xi1>, vector<8x32xf32>
    %c0_124 = arith.constant 0 : index
    %c0_125 = arith.constant 0 : index
    %531 = vector.load %arg5[%c0_124, %c0_125] : memref<32x128xf32, #tpu.memory_space<vmem>>, vector<32x128xf32>
    %cst_126 = arith.constant dense<0.000000e+00> : vector<8x128xf32>
    %532 = tpu.matmul %456, %531, %cst_126 {dimension_numbers = #tpu.dot_dimension_numbers<[1], [0], [0], [1], [0, 0, 1, 1], [], []>} : vector<8x32xf32>, vector<32x128xf32>, vector<8x128xf32> -> vector<8x128xf32>
    %c0_127 = arith.constant 0 : index
    %c0_128 = arith.constant 0 : index
    %533 = vector.load %arg7[%c0_127, %c0_128] : memref<1x128xf32, #tpu.memory_space<vmem>>, vector<1x128xf32>
    %534 = vector.broadcast %533 : vector<1x128xf32> to vector<8x128xf32>
    %535 = arith.addf %532, %534 : vector<8x128xf32>
    %c0_129 = arith.constant 0 : index
    %c0_130 = arith.constant 0 : index
    %536 = vector.load %arg6[%c0_129, %c0_130] : memref<32x128xf32, #tpu.memory_space<vmem>>, vector<32x128xf32>
    %cst_131 = arith.constant dense<0.000000e+00> : vector<8x128xf32>
    %537 = tpu.matmul %479, %536, %cst_131 {dimension_numbers = #tpu.dot_dimension_numbers<[1], [0], [0], [1], [0, 0, 1, 1], [], []>} : vector<8x32xf32>, vector<32x128xf32>, vector<8x128xf32> -> vector<8x128xf32>
    %538 = arith.addf %535, %537 : vector<8x128xf32>
    %539 = math.tanh %538 : vector<8x128xf32>
    %540 = arith.mulf %539, %22 : vector<8x128xf32>
    %541 = arith.addf %540, %25 : vector<8x128xf32>
    %542 = vector.extract_strided_slice %541 {offsets = [0, 0], sizes = [8, 32], strides = [1, 1]} : vector<8x128xf32> to vector<8x32xf32>
    %543 = vector.extract_strided_slice %541 {offsets = [0, 32], sizes = [8, 32], strides = [1, 1]} : vector<8x128xf32> to vector<8x32xf32>
    %544 = vector.extract_strided_slice %541 {offsets = [0, 64], sizes = [8, 32], strides = [1, 1]} : vector<8x128xf32> to vector<8x32xf32>
    %545 = vector.extract_strided_slice %541 {offsets = [0, 96], sizes = [8, 32], strides = [1, 1]} : vector<8x128xf32> to vector<8x32xf32>
    %546 = arith.mulf %543, %482 : vector<8x32xf32>
    %547 = arith.mulf %542, %545 : vector<8x32xf32>
    %548 = arith.addf %546, %547 : vector<8x32xf32>
    %549 = math.tanh %548 : vector<8x32xf32>
    %550 = arith.mulf %544, %549 : vector<8x32xf32>
    %551 = vector.shape_cast %14 : vector<8x1xi1> to vector<8x1xi1>
    %552 = vector.broadcast %551 : vector<8x1xi1> to vector<8x32xi1>
    %553 = arith.select %552, %550, %479 : vector<8x32xi1>, vector<8x32xf32>
    %554 = vector.shape_cast %14 : vector<8x1xi1> to vector<8x1xi1>
    %555 = vector.broadcast %554 : vector<8x1xi1> to vector<8x32xi1>
    %556 = arith.select %555, %548, %482 : vector<8x32xi1>, vector<8x32xf32>
    %557 = vector.shape_cast %14 : vector<8x1xi1> to vector<8x1xi1>
    %558 = vector.broadcast %557 : vector<8x1xi1> to vector<8x32xi1>
    %559 = arith.select %558, %550, %32 : vector<8x32xi1>, vector<8x32xf32>
    %c0_132 = arith.constant 0 : index
    %c0_133 = arith.constant 0 : index
    %560 = vector.load %arg8[%c0_132, %c0_133] : memref<32x128xf32, #tpu.memory_space<vmem>>, vector<32x128xf32>
    %cst_134 = arith.constant dense<0.000000e+00> : vector<8x128xf32>
    %561 = tpu.matmul %485, %560, %cst_134 {dimension_numbers = #tpu.dot_dimension_numbers<[1], [0], [0], [1], [0, 0, 1, 1], [], []>} : vector<8x32xf32>, vector<32x128xf32>, vector<8x128xf32> -> vector<8x128xf32>
    %c0_135 = arith.constant 0 : index
    %c0_136 = arith.constant 0 : index
    %562 = vector.load %arg10[%c0_135, %c0_136] : memref<1x128xf32, #tpu.memory_space<vmem>>, vector<1x128xf32>
    %563 = vector.broadcast %562 : vector<1x128xf32> to vector<8x128xf32>
    %564 = arith.addf %561, %563 : vector<8x128xf32>
    %c0_137 = arith.constant 0 : index
    %c0_138 = arith.constant 0 : index
    %565 = vector.load %arg9[%c0_137, %c0_138] : memref<32x128xf32, #tpu.memory_space<vmem>>, vector<32x128xf32>
    %cst_139 = arith.constant dense<0.000000e+00> : vector<8x128xf32>
    %566 = tpu.matmul %508, %565, %cst_139 {dimension_numbers = #tpu.dot_dimension_numbers<[1], [0], [0], [1], [0, 0, 1, 1], [], []>} : vector<8x32xf32>, vector<32x128xf32>, vector<8x128xf32> -> vector<8x128xf32>
    %567 = arith.addf %564, %566 : vector<8x128xf32>
    %568 = math.tanh %567 : vector<8x128xf32>
    %569 = arith.mulf %568, %22 : vector<8x128xf32>
    %570 = arith.addf %569, %25 : vector<8x128xf32>
    %571 = vector.extract_strided_slice %570 {offsets = [0, 0], sizes = [8, 32], strides = [1, 1]} : vector<8x128xf32> to vector<8x32xf32>
    %572 = vector.extract_strided_slice %570 {offsets = [0, 32], sizes = [8, 32], strides = [1, 1]} : vector<8x128xf32> to vector<8x32xf32>
    %573 = vector.extract_strided_slice %570 {offsets = [0, 64], sizes = [8, 32], strides = [1, 1]} : vector<8x128xf32> to vector<8x32xf32>
    %574 = vector.extract_strided_slice %570 {offsets = [0, 96], sizes = [8, 32], strides = [1, 1]} : vector<8x128xf32> to vector<8x32xf32>
    %575 = arith.mulf %572, %511 : vector<8x32xf32>
    %576 = arith.mulf %571, %574 : vector<8x32xf32>
    %577 = arith.addf %575, %576 : vector<8x32xf32>
    %578 = math.tanh %577 : vector<8x32xf32>
    %579 = arith.mulf %573, %578 : vector<8x32xf32>
    %580 = vector.shape_cast %12 : vector<8x1xi1> to vector<8x1xi1>
    %581 = vector.broadcast %580 : vector<8x1xi1> to vector<8x32xi1>
    %582 = arith.select %581, %579, %508 : vector<8x32xi1>, vector<8x32xf32>
    %583 = vector.shape_cast %12 : vector<8x1xi1> to vector<8x1xi1>
    %584 = vector.broadcast %583 : vector<8x1xi1> to vector<8x32xi1>
    %585 = arith.select %584, %577, %511 : vector<8x32xi1>, vector<8x32xf32>
    %c0_140 = arith.constant 0 : index
    %c0_141 = arith.constant 0 : index
    %586 = vector.load %arg5[%c0_140, %c0_141] : memref<32x128xf32, #tpu.memory_space<vmem>>, vector<32x128xf32>
    %cst_142 = arith.constant dense<0.000000e+00> : vector<8x128xf32>
    %587 = tpu.matmul %530, %586, %cst_142 {dimension_numbers = #tpu.dot_dimension_numbers<[1], [0], [0], [1], [0, 0, 1, 1], [], []>} : vector<8x32xf32>, vector<32x128xf32>, vector<8x128xf32> -> vector<8x128xf32>
    %c0_143 = arith.constant 0 : index
    %c0_144 = arith.constant 0 : index
    %588 = vector.load %arg7[%c0_143, %c0_144] : memref<1x128xf32, #tpu.memory_space<vmem>>, vector<1x128xf32>
    %589 = vector.broadcast %588 : vector<1x128xf32> to vector<8x128xf32>
    %590 = arith.addf %587, %589 : vector<8x128xf32>
    %c0_145 = arith.constant 0 : index
    %c0_146 = arith.constant 0 : index
    %591 = vector.load %arg6[%c0_145, %c0_146] : memref<32x128xf32, #tpu.memory_space<vmem>>, vector<32x128xf32>
    %cst_147 = arith.constant dense<0.000000e+00> : vector<8x128xf32>
    %592 = tpu.matmul %553, %591, %cst_147 {dimension_numbers = #tpu.dot_dimension_numbers<[1], [0], [0], [1], [0, 0, 1, 1], [], []>} : vector<8x32xf32>, vector<32x128xf32>, vector<8x128xf32> -> vector<8x128xf32>
    %593 = arith.addf %590, %592 : vector<8x128xf32>
    %594 = math.tanh %593 : vector<8x128xf32>
    %595 = arith.mulf %594, %22 : vector<8x128xf32>
    %596 = arith.addf %595, %25 : vector<8x128xf32>
    %597 = vector.extract_strided_slice %596 {offsets = [0, 0], sizes = [8, 32], strides = [1, 1]} : vector<8x128xf32> to vector<8x32xf32>
    %598 = vector.extract_strided_slice %596 {offsets = [0, 32], sizes = [8, 32], strides = [1, 1]} : vector<8x128xf32> to vector<8x32xf32>
    %599 = vector.extract_strided_slice %596 {offsets = [0, 64], sizes = [8, 32], strides = [1, 1]} : vector<8x128xf32> to vector<8x32xf32>
    %600 = vector.extract_strided_slice %596 {offsets = [0, 96], sizes = [8, 32], strides = [1, 1]} : vector<8x128xf32> to vector<8x32xf32>
    %601 = arith.mulf %598, %556 : vector<8x32xf32>
    %602 = arith.mulf %597, %600 : vector<8x32xf32>
    %603 = arith.addf %601, %602 : vector<8x32xf32>
    %604 = math.tanh %603 : vector<8x32xf32>
    %605 = arith.mulf %599, %604 : vector<8x32xf32>
    %606 = vector.shape_cast %16 : vector<8x1xi1> to vector<8x1xi1>
    %607 = vector.broadcast %606 : vector<8x1xi1> to vector<8x32xi1>
    %608 = arith.select %607, %605, %32 : vector<8x32xi1>, vector<8x32xf32>
    %c0_148 = arith.constant 0 : index
    %c0_149 = arith.constant 0 : index
    %609 = vector.load %arg8[%c0_148, %c0_149] : memref<32x128xf32, #tpu.memory_space<vmem>>, vector<32x128xf32>
    %cst_150 = arith.constant dense<0.000000e+00> : vector<8x128xf32>
    %610 = tpu.matmul %559, %609, %cst_150 {dimension_numbers = #tpu.dot_dimension_numbers<[1], [0], [0], [1], [0, 0, 1, 1], [], []>} : vector<8x32xf32>, vector<32x128xf32>, vector<8x128xf32> -> vector<8x128xf32>
    %c0_151 = arith.constant 0 : index
    %c0_152 = arith.constant 0 : index
    %611 = vector.load %arg10[%c0_151, %c0_152] : memref<1x128xf32, #tpu.memory_space<vmem>>, vector<1x128xf32>
    %612 = vector.broadcast %611 : vector<1x128xf32> to vector<8x128xf32>
    %613 = arith.addf %610, %612 : vector<8x128xf32>
    %c0_153 = arith.constant 0 : index
    %c0_154 = arith.constant 0 : index
    %614 = vector.load %arg9[%c0_153, %c0_154] : memref<32x128xf32, #tpu.memory_space<vmem>>, vector<32x128xf32>
    %cst_155 = arith.constant dense<0.000000e+00> : vector<8x128xf32>
    %615 = tpu.matmul %582, %614, %cst_155 {dimension_numbers = #tpu.dot_dimension_numbers<[1], [0], [0], [1], [0, 0, 1, 1], [], []>} : vector<8x32xf32>, vector<32x128xf32>, vector<8x128xf32> -> vector<8x128xf32>
    %616 = arith.addf %613, %615 : vector<8x128xf32>
    %617 = math.tanh %616 : vector<8x128xf32>
    %618 = arith.mulf %617, %22 : vector<8x128xf32>
    %619 = arith.addf %618, %25 : vector<8x128xf32>
    %620 = vector.extract_strided_slice %619 {offsets = [0, 0], sizes = [8, 32], strides = [1, 1]} : vector<8x128xf32> to vector<8x32xf32>
    %621 = vector.extract_strided_slice %619 {offsets = [0, 32], sizes = [8, 32], strides = [1, 1]} : vector<8x128xf32> to vector<8x32xf32>
    %622 = vector.extract_strided_slice %619 {offsets = [0, 64], sizes = [8, 32], strides = [1, 1]} : vector<8x128xf32> to vector<8x32xf32>
    %623 = vector.extract_strided_slice %619 {offsets = [0, 96], sizes = [8, 32], strides = [1, 1]} : vector<8x128xf32> to vector<8x32xf32>
    %624 = arith.mulf %621, %585 : vector<8x32xf32>
    %625 = arith.mulf %620, %623 : vector<8x32xf32>
    %626 = arith.addf %624, %625 : vector<8x32xf32>
    %627 = math.tanh %626 : vector<8x32xf32>
    %628 = arith.mulf %622, %627 : vector<8x32xf32>
    %629 = vector.shape_cast %14 : vector<8x1xi1> to vector<8x1xi1>
    %630 = vector.broadcast %629 : vector<8x1xi1> to vector<8x32xi1>
    %631 = arith.select %630, %628, %582 : vector<8x32xi1>, vector<8x32xf32>
    %632 = vector.shape_cast %14 : vector<8x1xi1> to vector<8x1xi1>
    %633 = vector.broadcast %632 : vector<8x1xi1> to vector<8x32xi1>
    %634 = arith.select %633, %626, %585 : vector<8x32xi1>, vector<8x32xf32>
    %c0_156 = arith.constant 0 : index
    %c0_157 = arith.constant 0 : index
    %635 = vector.load %arg8[%c0_156, %c0_157] : memref<32x128xf32, #tpu.memory_space<vmem>>, vector<32x128xf32>
    %cst_158 = arith.constant dense<0.000000e+00> : vector<8x128xf32>
    %636 = tpu.matmul %608, %635, %cst_158 {dimension_numbers = #tpu.dot_dimension_numbers<[1], [0], [0], [1], [0, 0, 1, 1], [], []>} : vector<8x32xf32>, vector<32x128xf32>, vector<8x128xf32> -> vector<8x128xf32>
    %c0_159 = arith.constant 0 : index
    %c0_160 = arith.constant 0 : index
    %637 = vector.load %arg10[%c0_159, %c0_160] : memref<1x128xf32, #tpu.memory_space<vmem>>, vector<1x128xf32>
    %638 = vector.broadcast %637 : vector<1x128xf32> to vector<8x128xf32>
    %639 = arith.addf %636, %638 : vector<8x128xf32>
    %c0_161 = arith.constant 0 : index
    %c0_162 = arith.constant 0 : index
    %640 = vector.load %arg9[%c0_161, %c0_162] : memref<32x128xf32, #tpu.memory_space<vmem>>, vector<32x128xf32>
    %cst_163 = arith.constant dense<0.000000e+00> : vector<8x128xf32>
    %641 = tpu.matmul %631, %640, %cst_163 {dimension_numbers = #tpu.dot_dimension_numbers<[1], [0], [0], [1], [0, 0, 1, 1], [], []>} : vector<8x32xf32>, vector<32x128xf32>, vector<8x128xf32> -> vector<8x128xf32>
    %642 = arith.addf %639, %641 : vector<8x128xf32>
    %643 = math.tanh %642 : vector<8x128xf32>
    %644 = arith.mulf %643, %22 : vector<8x128xf32>
    %645 = arith.addf %644, %25 : vector<8x128xf32>
    %646 = vector.extract_strided_slice %645 {offsets = [0, 0], sizes = [8, 32], strides = [1, 1]} : vector<8x128xf32> to vector<8x32xf32>
    %647 = vector.extract_strided_slice %645 {offsets = [0, 32], sizes = [8, 32], strides = [1, 1]} : vector<8x128xf32> to vector<8x32xf32>
    %648 = vector.extract_strided_slice %645 {offsets = [0, 64], sizes = [8, 32], strides = [1, 1]} : vector<8x128xf32> to vector<8x32xf32>
    %649 = vector.extract_strided_slice %645 {offsets = [0, 96], sizes = [8, 32], strides = [1, 1]} : vector<8x128xf32> to vector<8x32xf32>
    %650 = arith.mulf %647, %634 : vector<8x32xf32>
    %651 = arith.mulf %646, %649 : vector<8x32xf32>
    %652 = arith.addf %650, %651 : vector<8x32xf32>
    %653 = math.tanh %652 : vector<8x32xf32>
    %654 = arith.mulf %648, %653 : vector<8x32xf32>
    %655 = vector.shape_cast %16 : vector<8x1xi1> to vector<8x1xi1>
    %656 = vector.broadcast %655 : vector<8x1xi1> to vector<8x32xi1>
    %657 = arith.select %656, %654, %631 : vector<8x32xi1>, vector<8x32xf32>
    %c0_164 = arith.constant 0 : index
    %c0_165 = arith.constant 0 : index
    %658 = vector.load %arg11[%c0_164, %c0_165] : memref<8x32xf32, #tpu.memory_space<vmem>>, vector<8x32xf32>
    tpu.vector_store %arg11[%c0_164, %c0_165], %657 {strides = array<i32>} : memref<8x32xf32, #tpu.memory_space<vmem>>, vector<8x32xf32>,
    return
  }
}

</mosaic_0001>

<llo_original>
// kernel: tpu_custom_call.1
$region0: #{tpu_custom_call.1}
  #allocation0 [shape = 'u32[]', space=smem, size = 0x4, offset = 0x4, fixed_abs, tag = 'smem constant byte address 0x4 - core index']
  #allocation1 [shape = 'u32[144,128]{1,0:T(1,128)}', space=vmem, size = 0x12000, scoped, tag = 'internal scratch']
  %s0 = inlined_call_operand.vmem [shape: s32[8,1], index: 0, kind: input, shape index: {}]
  %s1 = inlined_call_operand.vmem [shape: f32[64,16], index: 1, kind: input, shape index: {}]
  %s2 = inlined_call_operand.hbm [shape: f32[16,128], index: 2, kind: input, shape index: {}]
  %s3 = inlined_call_operand.vmem [shape: f32[32,128], index: 3, kind: input, shape index: {}]
  %s4 = inlined_call_operand.vmem [shape: f32[1,128], index: 4, kind: input, shape index: {}]
  %s5 = inlined_call_operand.vmem [shape: f32[32,128], index: 5, kind: input, shape index: {}]
  %s6 = inlined_call_operand.vmem [shape: f32[32,128], index: 6, kind: input, shape index: {}]
  %s7 = inlined_call_operand.vmem [shape: f32[1,128], index: 7, kind: input, shape index: {}]
  %s8 = inlined_call_operand.hbm [shape: f32[32,128], index: 8, kind: input, shape index: {}]
  %s9 = inlined_call_operand.hbm [shape: f32[32,128], index: 9, kind: input, shape index: {}]
  %s10 = inlined_call_operand.vmem [shape: f32[1,128], index: 10, kind: input, shape index: {}]
  %s11 = inlined_call_operand.hbm [shape: f32[8,32], index: 11, kind: output, shape index: {}]
  %s12 = sld [smem:[#allocation0]]
  $region66: #{tpu_custom_call.1} parent=0
    _
  %s14 = ssub.s32 1, %s12
  %s15 = scalar_select 0, %s14, %s12
  $region1: #{tpu_custom_call.1} parent=0
    #allocation2 [shape = 'u8[8192]{0}', space=vmem, size = 0x2000, scoped, tag = 'input window, operand 2, single buffered']
    #allocation3 [shape = 's32[1]{0}', space=sflag, size = 0x4, scoped, tag = 'scoped memory for tpu_custom_call.1']
    #allocation4 [shape = 's32[1]{0}', space=sflag, size = 0x4, scoped, tag = 'scoped memory for tpu_custom_call.1']
    #allocation5 [shape = 'u8[16384]{0}', space=vmem, size = 0x4000, scoped, tag = 'input window, operand 8, single buffered']
    #allocation6 [shape = 's32[1]{0}', space=sflag, size = 0x4, scoped, tag = 'scoped memory for tpu_custom_call.1']
    #allocation7 [shape = 'u8[16384]{0}', space=vmem, size = 0x4000, scoped, tag = 'input window, operand 9, single buffered']
    #allocation8 [shape = 'u8[4096]{0}', space=vmem, size = 0x1000, scoped, tag = 'output window, operand 0, single buffered']
    %16 = vsyncpa [#allocation3], 0
    %17 = vsyncpa [#allocation6], 0
    %18 = vsyncpa [#allocation4], 0
    // Predicated region
    $region2: #{tpu_custom_call.1} parent=1 // pred_check
      _
    $region3: #{tpu_custom_call.1} parent=1 // pred_check_branch
      %20 = sbr.rel (0) target = $region5
    $region4: #{tpu_custom_call.1} parent=1 // pred_region
      _
    $region5: #{tpu_custom_call.1} parent=1 // pred_fallthru
      _
    // Predicated region
    $region6: #{tpu_custom_call.1} parent=1 // pred_check
      _
    $region7: #{tpu_custom_call.1} parent=1 // pred_check_branch
      %22 = sbr.rel (0) target = $region9
    $region8: #{tpu_custom_call.1} parent=1 // pred_region
      _
    $region9: #{tpu_custom_call.1} parent=1 // pred_fallthru
      _
    // Predicated region
    $region10: #{tpu_custom_call.1} parent=1 // pred_check
      _
    $region11: #{tpu_custom_call.1} parent=1 // pred_check_branch
      %24 = sbr.rel (0) target = $region13
    $region12: #{tpu_custom_call.1} parent=1 // pred_region
      %s26 = ssub.s32 256, 256
      %27 = vsyncadd [#allocation3], %s26
      %s28 = sshll.u32 [#allocation2], 4
      %s29 = int_to_ptr.vmem [resolvable:$true] %s28
      %34 = dma.hbm_to_vmem [thread:$0]  %s2, 256, %s29, [#allocation3], 128, 128, 8
    $region13: #{tpu_custom_call.1} parent=1 // pred_fallthru
      _
    // Predicated region
    $region14: #{tpu_custom_call.1} parent=1 // pred_check
      _
    $region15: #{tpu_custom_call.1} parent=1 // pred_check_branch
      %36 = sbr.rel (0) target = $region17
    $region16: #{tpu_custom_call.1} parent=1 // pred_region
      _
    $region17: #{tpu_custom_call.1} parent=1 // pred_fallthru
      _
    // Predicated region
    $region18: #{tpu_custom_call.1} parent=1 // pred_check
      _
    $region19: #{tpu_custom_call.1} parent=1 // pred_check_branch
      %38 = sbr.rel (0) target = $region21
    $region20: #{tpu_custom_call.1} parent=1 // pred_region
      _
    $region21: #{tpu_custom_call.1} parent=1 // pred_fallthru
      _
    // Predicated region
    $region22: #{tpu_custom_call.1} parent=1 // pred_check
      _
    $region23: #{tpu_custom_call.1} parent=1 // pred_check_branch
      %40 = sbr.rel (0) target = $region25
    $region24: #{tpu_custom_call.1} parent=1 // pred_region
      _
    $region25: #{tpu_custom_call.1} parent=1 // pred_fallthru
      _
    // Predicated region
    $region26: #{tpu_custom_call.1} parent=1 // pred_check
      _
    $region27: #{tpu_custom_call.1} parent=1 // pred_check_branch
      %42 = sbr.rel (0) target = $region29
    $region28: #{tpu_custom_call.1} parent=1 // pred_region
      _
    $region29: #{tpu_custom_call.1} parent=1 // pred_fallthru
      _
    // Predicated region
    $region30: #{tpu_custom_call.1} parent=1 // pred_check
      _
    $region31: #{tpu_custom_call.1} parent=1 // pred_check_branch
      %44 = sbr.rel (0) target = $region33
    $region32: #{tpu_custom_call.1} parent=1 // pred_region
      _
    $region33: #{tpu_custom_call.1} parent=1 // pred_fallthru
      _
    // Predicated region
    $region34: #{tpu_custom_call.1} parent=1 // pred_check
      _
    $region35: #{tpu_custom_call.1} parent=1 // pred_check_branch
      %46 = sbr.rel (0) target = $region37
    $region36: #{tpu_custom_call.1} parent=1 // pred_region
      %s48 = ssub.s32 512, 512
      %49 = vsyncadd [#allocation6], %s48
      %s50 = sshll.u32 [#allocation5], 4
      %s51 = int_to_ptr.vmem [resolvable:$true] %s50
      %56 = dma.hbm_to_vmem [thread:$0]  %s8, 512, %s51, [#allocation6], 128, 128, 8
    $region37: #{tpu_custom_call.1} parent=1 // pred_fallthru
      _
    // Predicated region
    $region38: #{tpu_custom_call.1} parent=1 // pred_check
      _
    $region39: #{tpu_custom_call.1} parent=1 // pred_check_branch
      %58 = sbr.rel (0) target = $region41
    $region40: #{tpu_custom_call.1} parent=1 // pred_region
      %s60 = ssub.s32 512, 512
      %61 = vsyncadd [#allocation6], %s60
      %s62 = sshll.u32 [#allocation7], 4
      %s63 = int_to_ptr.vmem [resolvable:$true] %s62
      %68 = dma.hbm_to_vmem [thread:$0]  %s9, 512, %s63, [#allocation6], 128, 128, 8
    $region41: #{tpu_custom_call.1} parent=1 // pred_fallthru
      _
    // Predicated region
    $region42: #{tpu_custom_call.1} parent=1 // pred_check
      _
    $region43: #{tpu_custom_call.1} parent=1 // pred_check_branch
      %70 = sbr.rel (0) target = $region45
    $region44: #{tpu_custom_call.1} parent=1 // pred_region
      _
    $region45: #{tpu_custom_call.1} parent=1 // pred_fallthru
      _
    // Predicated region
    $region46: #{tpu_custom_call.1} parent=1 // pred_check
      _
    $region47: #{tpu_custom_call.1} parent=1 // pred_check_branch
      %72 = sbr.rel (0) target = $region49
    $region48: #{tpu_custom_call.1} parent=1 // pred_region
      %73 = dma.done [#allocation3], 256
    $region49: #{tpu_custom_call.1} parent=1 // pred_fallthru
      _
    // Predicated region
    $region50: #{tpu_custom_call.1} parent=1 // pred_check
      _
    $region51: #{tpu_custom_call.1} parent=1 // pred_check_branch
      %75 = sbr.rel (0) target = $region53
    $region52: #{tpu_custom_call.1} parent=1 // pred_region
      %76 = dma.done [#allocation6], 512
    $region53: #{tpu_custom_call.1} parent=1 // pred_fallthru
      _
    // Predicated region
    $region54: #{tpu_custom_call.1} parent=1 // pred_check
      _
    $region55: #{tpu_custom_call.1} parent=1 // pred_check_branch
      %78 = sbr.rel (0) target = $region57
    $region56: #{tpu_custom_call.1} parent=1 // pred_region
      %79 = dma.done [#allocation6], 512
    $region57: #{tpu_custom_call.1} parent=1 // pred_fallthru
      _
    %v80 = vld [vmem:[%s0] sm:$0xff]
    %vm81 = vcmp.gt.s32.totalorder %v80, 0
    %vm82 = vcmp.gt.s32.totalorder %v80, 1
    %vm83 = vcmp.gt.s32.totalorder %v80, 2
    %vm84 = vcmp.gt.s32.totalorder %v80, 3
    %vm85 = vcmp.gt.s32.totalorder %v80, 4
    %vm86 = vcmp.gt.s32.totalorder %v80, 5
    %vm87 = vcmp.gt.s32.totalorder %v80, 6
    %vm88 = vcmp.gt.s32.totalorder %v80, 7
    %v89 = vlaneseq
    %v90 = vand.u32 %v89, 127
    %vm91 = vcmp.lt.s32.totalorder %v90, 96
    %v92 = vsel %vm91, 0.5, 1.0
    %v93 = vsel %vm91, 0.5, 0.0
    %v94 = vld [vmem:[%s1] sm:$0xff]
    %v95 = vld [vmem:[%s1 + $0x8] sm:$0xff]
    %v96 = vld [vmem:[%s1 + $0x10] sm:$0xff]
    %v97 = vld [vmem:[%s1 + $0x18] sm:$0xff]
    %v98 = vld [vmem:[%s1 + $0x20] sm:$0xff]
    %v99 = vld [vmem:[%s1 + $0x28] sm:$0xff]
    %v100 = vld [vmem:[%s1 + $0x30] sm:$0xff]
    %v101 = vld [vmem:[%s1 + $0x38] sm:$0xff]
    %v102 = vld [vmem:[#allocation2] sm:$0xff]
    %v103 = vld [vmem:[#allocation2 + $0x8] sm:$0xff]
    %v104 = vld [vmem:[%s4] sm:$0x1]
    %v106 = vlaneseq
    %v107 = vshrl.u32 %v106, 7
    %v108 = vsub.s32 0, %v107
    %v109 = vrot.slane %v104, %v108
    %vm111 = vcmask 130048
    %v113 = vsel %vm111, %v94, 0
    %v116 = vsel %vm111, %v95, 0
    %v119 = vsel %vm111, %v96, 0
    %v122 = vsel %vm111, %v97, 0
    %v125 = vsel %vm111, %v98, 0
    %v128 = vsel %vm111, %v99, 0
    %v131 = vsel %vm111, %v100, 0
    %v134 = vsel %vm111, %v101, 0
    %136 = vmatprep.subr.mxu0 0.0
    %137 = vmatpush1.msra.mxu0 %v102
    %138 = vmatprep.subr.mxu0 0.0
    %139 = vmatpush1.msra.mxu0 %v103
    %140 = vmatprep.subr.mxu0 0.0
    %141 = vmatpush1.msra.mxu0 0.0
    %142 = vmatprep.subr.mxu0 0.0
    %143 = vmatpush1.msra.mxu0 0.0
    %144 = vmatprep.subr.mxu0 0.0
    %145 = vmatpush1.msra.mxu0 0.0
    %146 = vmatprep.subr.mxu0 0.0
    %147 = vmatpush1.msra.mxu0 0.0
    %148 = vmatprep.subr.mxu0 0.0
    %149 = vmatpush1.msra.mxu0 0.0
    %150 = vmatprep.subr.mxu0 0.0
    %151 = vmatpush1.msra.mxu0 0.0
    %152 = vmatprep.subr.mxu0 0.0
    %153 = vmatpush1.msra.mxu0 0.0
    %154 = vmatprep.subr.mxu0 0.0
    %155 = vmatpush1.msra.mxu0 0.0
    %156 = vmatprep.subr.mxu0 0.0
    %157 = vmatpush1.msra.mxu0 0.0
    %158 = vmatprep.subr.mxu0 0.0
    %159 = vmatpush1.msra.mxu0 0.0
    %160 = vmatprep.subr.mxu0 0.0
    %161 = vmatpush1.msra.mxu0 0.0
    %162 = vmatprep.subr.mxu0 0.0
    %163 = vmatpush1.msra.mxu0 0.0
    %164 = vmatprep.subr.mxu0 0.0
    %165 = vmatpush1.msra.mxu0 0.0
    %166 = vmatprep.subr.mxu0 0.0
    %167 = vmatpush1.msra.mxu0 0.0
    %168 = vmatprep.subr.mxu0 0.0
    %169 = vmatpush1.msra.mxu0 0.0
    %170 = vmatprep.subr.mxu0 0.0
    %171 = vmatpush1.msra.mxu0 0.0
    %172 = vmatprep.subr.mxu0 0.0
    %173 = vmatpush1.msra.mxu0 0.0
    %174 = vmatprep.subr.mxu0 0.0
    %175 = vmatpush1.msra.mxu0 0.0
    %176 = vmatprep.subr.mxu0 0.0
    %177 = vmatpush1.msra.mxu0 0.0
    %178 = vmatprep.subr.mxu0 0.0
    %179 = vmatpush1.msra.mxu0 0.0
    %180 = vmatprep.subr.mxu0 0.0
    %181 = vmatpush1.msra.mxu0 0.0
    %182 = vmatprep.subr.mxu0 0.0
    %183 = vmatpush1.msra.mxu0 0.0
    %184 = vmatprep.subr.mxu0 0.0
    %185 = vmatpush1.msra.mxu0 0.0
    %186 = vmatprep.subr.mxu0 0.0
    %187 = vmatpush1.msra.mxu0 0.0
    %188 = vmatprep.subr.mxu0 0.0
    %189 = vmatpush1.msra.mxu0 0.0
    %190 = vmatprep.subr.mxu0 0.0
    %191 = vmatpush1.msra.mxu0 0.0
    %192 = vmatprep.subr.mxu0 0.0
    %193 = vmatpush1.msra.mxu0 0.0
    %194 = vmatprep.subr.mxu0 0.0
    %195 = vmatpush1.msra.mxu0 0.0
    %196 = vmatprep.subr.mxu0 0.0
    %197 = vmatpush1.msra.mxu0 0.0
    %198 = vmatprep.subr.mxu0 0.0
    %199 = vmatpush1.msra.mxu0 0.0
    %200 = vmatprep.mubr.f32.mxu0 0.0
    %201 = vmatmul.mubr.f32.gmra.mrb[0].mxu0 %v113
    %v202 = vpop.f32.mrb[0].mxu0
    %v203 = vadd.f32 %v109, %v202
    %v204 = vpop.f32.mrb[0].mxu0
    %205 = vmatprep.mubr.f32.mxu0 0.0
    %206 = vmatmul.mubr.f32.gmra.mrb[0].mxu0 %v116
    %v207 = vpop.f32.mrb[0].mxu0
    %v208 = vadd.f32 %v109, %v207
    %v209 = vpop.f32.mrb[0].mxu0
    %210 = vmatprep.mubr.f32.mxu0 0.0
    %211 = vmatmul.mubr.f32.gmra.mrb[0].mxu0 %v119
    %v212 = vpop.f32.mrb[0].mxu0
    %v213 = vadd.f32 %v109, %v212
    %v214 = vpop.f32.mrb[0].mxu0
    %215 = vmatprep.mubr.f32.mxu0 0.0
    %216 = vmatmul.mubr.f32.gmra.mrb[0].mxu0 %v122
    %v217 = vpop.f32.mrb[0].mxu0
    %v218 = vadd.f32 %v109, %v217
    %v219 = vpop.f32.mrb[0].mxu0
    %220 = vmatprep.mubr.f32.mxu0 0.0
    %221 = vmatmul.mubr.f32.gmra.mrb[0].mxu0 %v125
    %v222 = vpop.f32.mrb[0].mxu0
    %v223 = vadd.f32 %v109, %v222
    %v224 = vpop.f32.mrb[0].mxu0
    %225 = vmatprep.mubr.f32.mxu0 0.0
    %226 = vmatmul.mubr.f32.gmra.mrb[0].mxu0 %v128
    %v227 = vpop.f32.mrb[0].mxu0
    %v228 = vadd.f32 %v109, %v227
    %v229 = vpop.f32.mrb[0].mxu0
    %230 = vmatprep.mubr.f32.mxu0 0.0
    %231 = vmatmul.mubr.f32.gmra.mrb[0].mxu0 %v131
    %v232 = vpop.f32.mrb[0].mxu0
    %v233 = vadd.f32 %v109, %v232
    %v234 = vpop.f32.mrb[0].mxu0
    %235 = vmatprep.mubr.f32.mxu0 0.0
    %236 = vmatmul.mubr.f32.gmra.mrb[0].mxu0 %v134
    %v237 = vpop.f32.mrb[0].mxu0
    %v238 = vadd.f32 %v109, %v237
    %v239 = vpop.f32.mrb[0].mxu0
    %240 = vdwg.mxu0
    %v241 = vld [vmem:[%s3] sm:$0xff]
    %v242 = vld [vmem:[%s3 + $0x8] sm:$0xff]
    %v243 = vld [vmem:[%s3 + $0x10] sm:$0xff]
    %v244 = vld [vmem:[%s3 + $0x18] sm:$0xff]
    %vm245 = vcmask 261120
    %v247 = vsel %vm245, 0.0, 0
    %249 = vmatprep.subr.mxu0 0.0
    %250 = vmatpush1.msra.mxu0 %v241
    %251 = vmatprep.subr.mxu0 0.0
    %252 = vmatpush1.msra.mxu0 %v242
    %253 = vmatprep.subr.mxu0 0.0
    %254 = vmatpush1.msra.mxu0 %v243
    %255 = vmatprep.subr.mxu0 0.0
    %256 = vmatpush1.msra.mxu0 %v244
    %257 = vmatprep.subr.mxu0 0.0
    %258 = vmatpush1.msra.mxu0 0.0
    %259 = vmatprep.subr.mxu0 0.0
    %260 = vmatpush1.msra.mxu0 0.0
    %261 = vmatprep.subr.mxu0 0.0
    %262 = vmatpush1.msra.mxu0 0.0
    %263 = vmatprep.subr.mxu0 0.0
    %264 = vmatpush1.msra.mxu0 0.0
    %265 = vmatprep.subr.mxu0 0.0
    %266 = vmatpush1.msra.mxu0 0.0
    %267 = vmatprep.subr.mxu0 0.0
    %268 = vmatpush1.msra.mxu0 0.0
    %269 = vmatprep.subr.mxu0 0.0
    %270 = vmatpush1.msra.mxu0 0.0
    %271 = vmatprep.subr.mxu0 0.0
    %272 = vmatpush1.msra.mxu0 0.0
    %273 = vmatprep.subr.mxu0 0.0
    %274 = vmatpush1.msra.mxu0 0.0
    %275 = vmatprep.subr.mxu0 0.0
    %276 = vmatpush1.msra.mxu0 0.0
    %277 = vmatprep.subr.mxu0 0.0
    %278 = vmatpush1.msra.mxu0 0.0
    %279 = vmatprep.subr.mxu0 0.0
    %280 = vmatpush1.msra.mxu0 0.0
    %281 = vmatprep.subr.mxu0 0.0
    %282 = vmatpush1.msra.mxu0 0.0
    %283 = vmatprep.subr.mxu0 0.0
    %284 = vmatpush1.msra.mxu0 0.0
    %285 = vmatprep.subr.mxu0 0.0
    %286 = vmatpush1.msra.mxu0 0.0
    %287 = vmatprep.subr.mxu0 0.0
    %288 = vmatpush1.msra.mxu0 0.0
    %289 = vmatprep.subr.mxu0 0.0
    %290 = vmatpush1.msra.mxu0 0.0
    %291 = vmatprep.subr.mxu0 0.0
    %292 = vmatpush1.msra.mxu0 0.0
    %293 = vmatprep.subr.mxu0 0.0
    %294 = vmatpush1.msra.mxu0 0.0
    %295 = vmatprep.subr.mxu0 0.0
    %296 = vmatpush1.msra.mxu0 0.0
    %297 = vmatprep.subr.mxu0 0.0
    %298 = vmatpush1.msra.mxu0 0.0
    %299 = vmatprep.subr.mxu0 0.0
    %300 = vmatpush1.msra.mxu0 0.0
    %301 = vmatprep.subr.mxu0 0.0
    %302 = vmatpush1.msra.mxu0 0.0
    %303 = vmatprep.subr.mxu0 0.0
    %304 = vmatpush1.msra.mxu0 0.0
    %305 = vmatprep.subr.mxu0 0.0
    %306 = vmatpush1.msra.mxu0 0.0
    %307 = vmatprep.subr.mxu0 0.0
    %308 = vmatpush1.msra.mxu0 0.0
    %309 = vmatprep.subr.mxu0 0.0
    %310 = vmatpush1.msra.mxu0 0.0
    %311 = vmatprep.subr.mxu0 0.0
    %312 = vmatpush1.msra.mxu0 0.0
    %313 = vmatprep.mubr.f32.mxu0 0.0
    %314 = vmatmul.mubr.f32.gmra.mrb[0].mxu0 %v247
    %v315 = vpop.f32.mrb[0].mxu0
    %v316 = vadd.f32 0.0, %v315
    %v317 = vpop.f32.mrb[0].mxu0
    %318 = vdwg.mxu0
    %v319 = vadd.f32 %v203, %v316
    %v320 = vtanh.pop %v319
    %v321 = vmul.f32 %v320, %v92
    %v322 = vadd.f32 %v321, %v93
    %v323 = vmul.f32 %v322, 0.0
    %325 = vrot.lane.b32.xlu0 %v322, 32
    %v326 = vpop.permute.xlu0 %325
    %v328 = vmul.f32 %v322, %v326
    %330 = vrot.lane.b32.xlu0 %v328, 32
    %v331 = vpop.permute.xlu0 %330
    %v333 = vadd.f32 %v323, %v331
    %v334 = vtanh.pop %v333
    %336 = vrot.lane.b32.xlu0 %v334, 32
    %v337 = vpop.permute.xlu0 %336
    %v339 = vmul.f32 %v322, %v337
    %v340 = vsel %vm81, 1, 0
    %341 = vset.pattern.permute.xlu0 0
    %342 = vperm.xlu0 %341, %v340
    %v343 = vpop.permute.xlu0 %342
    %vm344 = vcmp.eq.s32.totalorder %v343, 1
    %v345 = vsel %vm344, %v339, 0.0
    %v346 = vsel %vm344, %v333, 0.0
    %348 = vrot.lane.b32.xlu0 %v345, 64
    %v349 = vpop.permute.xlu0 %348
    %v350 = vsel %vm245, %v349, 0
    %352 = vmatprep.subr.mxu0 0.0
    %353 = vmatpush1.msra.mxu0 %v241
    %354 = vmatprep.subr.mxu0 0.0
    %355 = vmatpush1.msra.mxu0 %v242
    %356 = vmatprep.subr.mxu0 0.0
    %357 = vmatpush1.msra.mxu0 %v243
    %358 = vmatprep.subr.mxu0 0.0
    %359 = vmatpush1.msra.mxu0 %v244
    %360 = vmatprep.subr.mxu0 0.0
    %361 = vmatpush1.msra.mxu0 0.0
    %362 = vmatprep.subr.mxu0 0.0
    %363 = vmatpush1.msra.mxu0 0.0
    %364 = vmatprep.subr.mxu0 0.0
    %365 = vmatpush1.msra.mxu0 0.0
    %366 = vmatprep.subr.mxu0 0.0
    %367 = vmatpush1.msra.mxu0 0.0
    %368 = vmatprep.subr.mxu0 0.0
    %369 = vmatpush1.msra.mxu0 0.0
    %370 = vmatprep.subr.mxu0 0.0
    %371 = vmatpush1.msra.mxu0 0.0
    %372 = vmatprep.subr.mxu0 0.0
    %373 = vmatpush1.msra.mxu0 0.0
    %374 = vmatprep.subr.mxu0 0.0
    %375 = vmatpush1.msra.mxu0 0.0
    %376 = vmatprep.subr.mxu0 0.0
    %377 = vmatpush1.msra.mxu0 0.0
    %378 = vmatprep.subr.mxu0 0.0
    %379 = vmatpush1.msra.mxu0 0.0
    %380 = vmatprep.subr.mxu0 0.0
    %381 = vmatpush1.msra.mxu0 0.0
    %382 = vmatprep.subr.mxu0 0.0
    %383 = vmatpush1.msra.mxu0 0.0
    %384 = vmatprep.subr.mxu0 0.0
    %385 = vmatpush1.msra.mxu0 0.0
    %386 = vmatprep.subr.mxu0 0.0
    %387 = vmatpush1.msra.mxu0 0.0
    %388 = vmatprep.subr.mxu0 0.0
    %389 = vmatpush1.msra.mxu0 0.0
    %390 = vmatprep.subr.mxu0 0.0
    %391 = vmatpush1.msra.mxu0 0.0
    %392 = vmatprep.subr.mxu0 0.0
    %393 = vmatpush1.msra.mxu0 0.0
    %394 = vmatprep.subr.mxu0 0.0
    %395 = vmatpush1.msra.mxu0 0.0
    %396 = vmatprep.subr.mxu0 0.0
    %397 = vmatpush1.msra.mxu0 0.0
    %398 = vmatprep.subr.mxu0 0.0
    %399 = vmatpush1.msra.mxu0 0.0
    %400 = vmatprep.subr.mxu0 0.0
    %401 = vmatpush1.msra.mxu0 0.0
    %402 = vmatprep.subr.mxu0 0.0
    %403 = vmatpush1.msra.mxu0 0.0
    %404 = vmatprep.subr.mxu0 0.0
    %405 = vmatpush1.msra.mxu0 0.0
    %406 = vmatprep.subr.mxu0 0.0
    %407 = vmatpush1.msra.mxu0 0.0
    %408 = vmatprep.subr.mxu0 0.0
    %409 = vmatpush1.msra.mxu0 0.0
    %410 = vmatprep.subr.mxu0 0.0
    %411 = vmatpush1.msra.mxu0 0.0
    %412 = vmatprep.subr.mxu0 0.0
    %413 = vmatpush1.msra.mxu0 0.0
    %414 = vmatprep.subr.mxu0 0.0
    %415 = vmatpush1.msra.mxu0 0.0
    %416 = vmatprep.mubr.f32.mxu0 0.0
    %417 = vmatmul.mubr.f32.gmra.mrb[0].mxu0 %v350
    %v418 = vpop.f32.mrb[0].mxu0
    %v419 = vadd.f32 0.0, %v418
    %v420 = vpop.f32.mrb[0].mxu0
    %421 = vdwg.mxu0
    %v422 = vadd.f32 %v208, %v419
    %v423 = vtanh.pop %v422
    %v424 = vmul.f32 %v423, %v92
    %v425 = vadd.f32 %v424, %v93
    %v426 = vmul.f32 %v425, %v346
    %428 = vrot.lane.b32.xlu0 %v425, 32
    %v429 = vpop.permute.xlu0 %428
    %v431 = vmul.f32 %v425, %v429
    %433 = vrot.lane.b32.xlu0 %v431, 32
    %v434 = vpop.permute.xlu0 %433
    %v436 = vadd.f32 %v426, %v434
    %v437 = vtanh.pop %v436
    %439 = vrot.lane.b32.xlu0 %v437, 32
    %v440 = vpop.permute.xlu0 %439
    %v442 = vmul.f32 %v425, %v440
    %v443 = vsel %vm82, 1, 0
    %444 = vset.pattern.permute.xlu0 0
    %445 = vperm.xlu0 %444, %v443
    %v446 = vpop.permute.xlu0 %445
    %vm447 = vcmp.eq.s32.totalorder %v446, 1
    %v448 = vsel %vm447, %v442, %v345
    %v449 = vsel %vm447, %v436, %v346
    %v450 = vsel %vm447, %v442, 0.0
    %v451 = vld [vmem:[%s5] sm:$0xff]
    %v452 = vld [vmem:[%s5 + $0x8] sm:$0xff]
    %v453 = vld [vmem:[%s5 + $0x10] sm:$0xff]
    %v454 = vld [vmem:[%s5 + $0x18] sm:$0xff]
    %v455 = vld [vmem:[%s7] sm:$0x1]
    %v457 = vlaneseq
    %v458 = vshrl.u32 %v457, 7
    %v459 = vsub.s32 0, %v458
    %v460 = vrot.slane %v455, %v459
    %462 = vmatprep.subr.mxu0 0.0
    %463 = vmatpush1.msra.mxu0 %v451
    %464 = vmatprep.subr.mxu0 0.0
    %465 = vmatpush1.msra.mxu0 %v452
    %466 = vmatprep.subr.mxu0 0.0
    %467 = vmatpush1.msra.mxu0 %v453
    %468 = vmatprep.subr.mxu0 0.0
    %469 = vmatpush1.msra.mxu0 %v454
    %470 = vmatprep.subr.mxu0 0.0
    %471 = vmatpush1.msra.mxu0 0.0
    %472 = vmatprep.subr.mxu0 0.0
    %473 = vmatpush1.msra.mxu0 0.0
    %474 = vmatprep.subr.mxu0 0.0
    %475 = vmatpush1.msra.mxu0 0.0
    %476 = vmatprep.subr.mxu0 0.0
    %477 = vmatpush1.msra.mxu0 0.0
    %478 = vmatprep.subr.mxu0 0.0
    %479 = vmatpush1.msra.mxu0 0.0
    %480 = vmatprep.subr.mxu0 0.0
    %481 = vmatpush1.msra.mxu0 0.0
    %482 = vmatprep.subr.mxu0 0.0
    %483 = vmatpush1.msra.mxu0 0.0
    %484 = vmatprep.subr.mxu0 0.0
    %485 = vmatpush1.msra.mxu0 0.0
    %486 = vmatprep.subr.mxu0 0.0
    %487 = vmatpush1.msra.mxu0 0.0
    %488 = vmatprep.subr.mxu0 0.0
    %489 = vmatpush1.msra.mxu0 0.0
    %490 = vmatprep.subr.mxu0 0.0
    %491 = vmatpush1.msra.mxu0 0.0
    %492 = vmatprep.subr.mxu0 0.0
    %493 = vmatpush1.msra.mxu0 0.0
    %494 = vmatprep.subr.mxu0 0.0
    %495 = vmatpush1.msra.mxu0 0.0
    %496 = vmatprep.subr.mxu0 0.0
    %497 = vmatpush1.msra.mxu0 0.0
    %498 = vmatprep.subr.mxu0 0.0
    %499 = vmatpush1.msra.mxu0 0.0
    %500 = vmatprep.subr.mxu0 0.0
    %501 = vmatpush1.msra.mxu0 0.0
    %502 = vmatprep.subr.mxu0 0.0
    %503 = vmatpush1.msra.mxu0 0.0
    %504 = vmatprep.subr.mxu0 0.0
    %505 = vmatpush1.msra.mxu0 0.0
    %506 = vmatprep.subr.mxu0 0.0
    %507 = vmatpush1.msra.mxu0 0.0
    %508 = vmatprep.subr.mxu0 0.0
    %509 = vmatpush1.msra.mxu0 0.0
    %510 = vmatprep.subr.mxu0 0.0
    %511 = vmatpush1.msra.mxu0 0.0
    %512 = vmatprep.subr.mxu0 0.0
    %513 = vmatpush1.msra.mxu0 0.0
    %514 = vmatprep.subr.mxu0 0.0
    %515 = vmatpush1.msra.mxu0 0.0
    %516 = vmatprep.subr.mxu0 0.0
    %517 = vmatpush1.msra.mxu0 0.0
    %518 = vmatprep.subr.mxu0 0.0
    %519 = vmatpush1.msra.mxu0 0.0
    %520 = vmatprep.subr.mxu0 0.0
    %521 = vmatpush1.msra.mxu0 0.0
    %522 = vmatprep.subr.mxu0 0.0
    %523 = vmatpush1.msra.mxu0 0.0
    %524 = vmatprep.subr.mxu0 0.0
    %525 = vmatpush1.msra.mxu0 0.0
    %526 = vmatprep.mubr.f32.mxu0 0.0
    %527 = vmatmul.mubr.f32.gmra.mrb[0].mxu0 %v350
    %v528 = vpop.f32.mrb[0].mxu0
    %v529 = vadd.f32 %v460, %v528
    %v530 = vpop.f32.mrb[0].mxu0
    %531 = vdwg.mxu0
    %v532 = vld [vmem:[%s6] sm:$0xff]
    %v533 = vld [vmem:[%s6 + $0x8] sm:$0xff]
    %v534 = vld [vmem:[%s6 + $0x10] sm:$0xff]
    %v535 = vld [vmem:[%s6 + $0x18] sm:$0xff]
    %536 = vmatprep.subr.mxu0 0.0
    %537 = vmatpush1.msra.mxu0 %v532
    %538 = vmatprep.subr.mxu0 0.0
    %539 = vmatpush1.msra.mxu0 %v533
    %540 = vmatprep.subr.mxu0 0.0
    %541 = vmatpush1.msra.mxu0 %v534
    %542 = vmatprep.subr.mxu0 0.0
    %543 = vmatpush1.msra.mxu0 %v535
    %544 = vmatprep.subr.mxu0 0.0
    %545 = vmatpush1.msra.mxu0 0.0
    %546 = vmatprep.subr.mxu0 0.0
    %547 = vmatpush1.msra.mxu0 0.0
    %548 = vmatprep.subr.mxu0 0.0
    %549 = vmatpush1.msra.mxu0 0.0
    %550 = vmatprep.subr.mxu0 0.0
    %551 = vmatpush1.msra.mxu0 0.0
    %552 = vmatprep.subr.mxu0 0.0
    %553 = vmatpush1.msra.mxu0 0.0
    %554 = vmatprep.subr.mxu0 0.0
    %555 = vmatpush1.msra.mxu0 0.0
    %556 = vmatprep.subr.mxu0 0.0
    %557 = vmatpush1.msra.mxu0 0.0
    %558 = vmatprep.subr.mxu0 0.0
    %559 = vmatpush1.msra.mxu0 0.0
    %560 = vmatprep.subr.mxu0 0.0
    %561 = vmatpush1.msra.mxu0 0.0
    %562 = vmatprep.subr.mxu0 0.0
    %563 = vmatpush1.msra.mxu0 0.0
    %564 = vmatprep.subr.mxu0 0.0
    %565 = vmatpush1.msra.mxu0 0.0
    %566 = vmatprep.subr.mxu0 0.0
    %567 = vmatpush1.msra.mxu0 0.0
    %568 = vmatprep.subr.mxu0 0.0
    %569 = vmatpush1.msra.mxu0 0.0
    %570 = vmatprep.subr.mxu0 0.0
    %571 = vmatpush1.msra.mxu0 0.0
    %572 = vmatprep.subr.mxu0 0.0
    %573 = vmatpush1.msra.mxu0 0.0
    %574 = vmatprep.subr.mxu0 0.0
    %575 = vmatpush1.msra.mxu0 0.0
    %576 = vmatprep.subr.mxu0 0.0
    %577 = vmatpush1.msra.mxu0 0.0
    %578 = vmatprep.subr.mxu0 0.0
    %579 = vmatpush1.msra.mxu0 0.0
    %580 = vmatprep.subr.mxu0 0.0
    %581 = vmatpush1.msra.mxu0 0.0
    %582 = vmatprep.subr.mxu0 0.0
    %583 = vmatpush1.msra.mxu0 0.0
    %584 = vmatprep.subr.mxu0 0.0
    %585 = vmatpush1.msra.mxu0 0.0
    %586 = vmatprep.subr.mxu0 0.0
    %587 = vmatpush1.msra.mxu0 0.0
    %588 = vmatprep.subr.mxu0 0.0
    %589 = vmatpush1.msra.mxu0 0.0
    %590 = vmatprep.subr.mxu0 0.0
    %591 = vmatpush1.msra.mxu0 0.0
    %592 = vmatprep.subr.mxu0 0.0
    %593 = vmatpush1.msra.mxu0 0.0
    %594 = vmatprep.subr.mxu0 0.0
    %595 = vmatpush1.msra.mxu0 0.0
    %596 = vmatprep.subr.mxu0 0.0
    %597 = vmatpush1.msra.mxu0 0.0
    %598 = vmatprep.subr.mxu0 0.0
    %599 = vmatpush1.msra.mxu0 0.0
    %600 = vmatprep.mubr.f32.mxu0 0.0
    %601 = vmatmul.mubr.f32.gmra.mrb[0].mxu0 %v247
    %v602 = vpop.f32.mrb[0].mxu0
    %v603 = vadd.f32 0.0, %v602
    %v604 = vpop.f32.mrb[0].mxu0
    %605 = vdwg.mxu0
    %v606 = vadd.f32 %v529, %v603
    %v607 = vtanh.pop %v606
    %v608 = vmul.f32 %v607, %v92
    %v609 = vadd.f32 %v608, %v93
    %v610 = vmul.f32 %v609, 0.0
    %612 = vrot.lane.b32.xlu0 %v609, 32
    %v613 = vpop.permute.xlu0 %612
    %v615 = vmul.f32 %v609, %v613
    %617 = vrot.lane.b32.xlu0 %v615, 32
    %v618 = vpop.permute.xlu0 %617
    %v620 = vadd.f32 %v610, %v618
    %v621 = vtanh.pop %v620
    %623 = vrot.lane.b32.xlu0 %v621, 32
    %v624 = vpop.permute.xlu0 %623
    %v626 = vmul.f32 %v609, %v624
    %v627 = vsel %vm344, %v626, 0.0
    %v628 = vsel %vm344, %v620, 0.0
    %630 = vrot.lane.b32.xlu0 %v448, 64
    %v631 = vpop.permute.xlu0 %630
    %v632 = vsel %vm245, %v631, 0
    %634 = vmatprep.subr.mxu0 0.0
    %635 = vmatpush1.msra.mxu0 %v241
    %636 = vmatprep.subr.mxu0 0.0
    %637 = vmatpush1.msra.mxu0 %v242
    %638 = vmatprep.subr.mxu0 0.0
    %639 = vmatpush1.msra.mxu0 %v243
    %640 = vmatprep.subr.mxu0 0.0
    %641 = vmatpush1.msra.mxu0 %v244
    %642 = vmatprep.subr.mxu0 0.0
    %643 = vmatpush1.msra.mxu0 0.0
    %644 = vmatprep.subr.mxu0 0.0
    %645 = vmatpush1.msra.mxu0 0.0
    %646 = vmatprep.subr.mxu0 0.0
    %647 = vmatpush1.msra.mxu0 0.0
    %648 = vmatprep.subr.mxu0 0.0
    %649 = vmatpush1.msra.mxu0 0.0
    %650 = vmatprep.subr.mxu0 0.0
    %651 = vmatpush1.msra.mxu0 0.0
    %652 = vmatprep.subr.mxu0 0.0
    %653 = vmatpush1.msra.mxu0 0.0
    %654 = vmatprep.subr.mxu0 0.0
    %655 = vmatpush1.msra.mxu0 0.0
    %656 = vmatprep.subr.mxu0 0.0
    %657 = vmatpush1.msra.mxu0 0.0
    %658 = vmatprep.subr.mxu0 0.0
    %659 = vmatpush1.msra.mxu0 0.0
    %660 = vmatprep.subr.mxu0 0.0
    %661 = vmatpush1.msra.mxu0 0.0
    %662 = vmatprep.subr.mxu0 0.0
    %663 = vmatpush1.msra.mxu0 0.0
    %664 = vmatprep.subr.mxu0 0.0
    %665 = vmatpush1.msra.mxu0 0.0
    %666 = vmatprep.subr.mxu0 0.0
    %667 = vmatpush1.msra.mxu0 0.0
    %668 = vmatprep.subr.mxu0 0.0
    %669 = vmatpush1.msra.mxu0 0.0
    %670 = vmatprep.subr.mxu0 0.0
    %671 = vmatpush1.msra.mxu0 0.0
    %672 = vmatprep.subr.mxu0 0.0
    %673 = vmatpush1.msra.mxu0 0.0
    %674 = vmatprep.subr.mxu0 0.0
    %675 = vmatpush1.msra.mxu0 0.0
    %676 = vmatprep.subr.mxu0 0.0
    %677 = vmatpush1.msra.mxu0 0.0
    %678 = vmatprep.subr.mxu0 0.0
    %679 = vmatpush1.msra.mxu0 0.0
    %680 = vmatprep.subr.mxu0 0.0
    %681 = vmatpush1.msra.mxu0 0.0
    %682 = vmatprep.subr.mxu0 0.0
    %683 = vmatpush1.msra.mxu0 0.0
    %684 = vmatprep.subr.mxu0 0.0
    %685 = vmatpush1.msra.mxu0 0.0
    %686 = vmatprep.subr.mxu0 0.0
    %687 = vmatpush1.msra.mxu0 0.0
    %688 = vmatprep.subr.mxu0 0.0
    %689 = vmatpush1.msra.mxu0 0.0
    %690 = vmatprep.subr.mxu0 0.0
    %691 = vmatpush1.msra.mxu0 0.0
    %692 = vmatprep.subr.mxu0 0.0
    %693 = vmatpush1.msra.mxu0 0.0
    %694 = vmatprep.subr.mxu0 0.0
    %695 = vmatpush1.msra.mxu0 0.0
    %696 = vmatprep.subr.mxu0 0.0
    %697 = vmatpush1.msra.mxu0 0.0
    %698 = vmatprep.mubr.f32.mxu0 0.0
    %699 = vmatmul.mubr.f32.gmra.mrb[0].mxu0 %v632
    %v700 = vpop.f32.mrb[0].mxu0
    %v701 = vadd.f32 0.0, %v700
    %v702 = vpop.f32.mrb[0].mxu0
    %703 = vdwg.mxu0
    %v704 = vadd.f32 %v213, %v701
    %v705 = vtanh.pop %v704
    %v706 = vmul.f32 %v705, %v92
    %v707 = vadd.f32 %v706, %v93
    %v708 = vmul.f32 %v707, %v449
    %710 = vrot.lane.b32.xlu0 %v707, 32
    %v711 = vpop.permute.xlu0 %710
    %v713 = vmul.f32 %v707, %v711
    %715 = vrot.lane.b32.xlu0 %v713, 32
    %v716 = vpop.permute.xlu0 %715
    %v718 = vadd.f32 %v708, %v716
    %v719 = vtanh.pop %v718
    %721 = vrot.lane.b32.xlu0 %v719, 32
    %v722 = vpop.permute.xlu0 %721
    %v724 = vmul.f32 %v707, %v722
    %v725 = vsel %vm83, 1, 0
    %726 = vset.pattern.permute.xlu0 0
    %727 = vperm.xlu0 %726, %v725
    %v728 = vpop.permute.xlu0 %727
    %vm729 = vcmp.eq.s32.totalorder %v728, 1
    %v730 = vsel %vm729, %v724, %v448
    %v731 = vsel %vm729, %v718, %v449
    %v732 = vsel %vm729, %v724, 0.0
    %734 = vrot.lane.b32.xlu0 %v450, 64
    %v735 = vpop.permute.xlu0 %734
    %v736 = vsel %vm245, %v735, 0
    %738 = vmatprep.subr.mxu0 0.0
    %739 = vmatpush1.msra.mxu0 %v451
    %740 = vmatprep.subr.mxu0 0.0
    %741 = vmatpush1.msra.mxu0 %v452
    %742 = vmatprep.subr.mxu0 0.0
    %743 = vmatpush1.msra.mxu0 %v453
    %744 = vmatprep.subr.mxu0 0.0
    %745 = vmatpush1.msra.mxu0 %v454
    %746 = vmatprep.subr.mxu0 0.0
    %747 = vmatpush1.msra.mxu0 0.0
    %748 = vmatprep.subr.mxu0 0.0
    %749 = vmatpush1.msra.mxu0 0.0
    %750 = vmatprep.subr.mxu0 0.0
    %751 = vmatpush1.msra.mxu0 0.0
    %752 = vmatprep.subr.mxu0 0.0
    %753 = vmatpush1.msra.mxu0 0.0
    %754 = vmatprep.subr.mxu0 0.0
    %755 = vmatpush1.msra.mxu0 0.0
    %756 = vmatprep.subr.mxu0 0.0
    %757 = vmatpush1.msra.mxu0 0.0
    %758 = vmatprep.subr.mxu0 0.0
    %759 = vmatpush1.msra.mxu0 0.0
    %760 = vmatprep.subr.mxu0 0.0
    %761 = vmatpush1.msra.mxu0 0.0
    %762 = vmatprep.subr.mxu0 0.0
    %763 = vmatpush1.msra.mxu0 0.0
    %764 = vmatprep.subr.mxu0 0.0
    %765 = vmatpush1.msra.mxu0 0.0
    %766 = vmatprep.subr.mxu0 0.0
    %767 = vmatpush1.msra.mxu0 0.0
    %768 = vmatprep.subr.mxu0 0.0
    %769 = vmatpush1.msra.mxu0 0.0
    %770 = vmatprep.subr.mxu0 0.0
    %771 = vmatpush1.msra.mxu0 0.0
    %772 = vmatprep.subr.mxu0 0.0
    %773 = vmatpush1.msra.mxu0 0.0
    %774 = vmatprep.subr.mxu0 0.0
    %775 = vmatpush1.msra.mxu0 0.0
    %776 = vmatprep.subr.mxu0 0.0
    %777 = vmatpush1.msra.mxu0 0.0
    %778 = vmatprep.subr.mxu0 0.0
    %779 = vmatpush1.msra.mxu0 0.0
    %780 = vmatprep.subr.mxu0 0.0
    %781 = vmatpush1.msra.mxu0 0.0
    %782 = vmatprep.subr.mxu0 0.0
    %783 = vmatpush1.msra.mxu0 0.0
    %784 = vmatprep.subr.mxu0 0.0
    %785 = vmatpush1.msra.mxu0 0.0
    %786 = vmatprep.subr.mxu0 0.0
    %787 = vmatpush1.msra.mxu0 0.0
    %788 = vmatprep.subr.mxu0 0.0
    %789 = vmatpush1.msra.mxu0 0.0
    %790 = vmatprep.subr.mxu0 0.0
    %791 = vmatpush1.msra.mxu0 0.0
    %792 = vmatprep.subr.mxu0 0.0
    %793 = vmatpush1.msra.mxu0 0.0
    %794 = vmatprep.subr.mxu0 0.0
    %795 = vmatpush1.msra.mxu0 0.0
    %796 = vmatprep.subr.mxu0 0.0
    %797 = vmatpush1.msra.mxu0 0.0
    %798 = vmatprep.subr.mxu0 0.0
    %799 = vmatpush1.msra.mxu0 0.0
    %800 = vmatprep.subr.mxu0 0.0
    %801 = vmatpush1.msra.mxu0 0.0
    %802 = vmatprep.mubr.f32.mxu0 0.0
    %803 = vmatmul.mubr.f32.gmra.mrb[0].mxu0 %v736
    %v804 = vpop.f32.mrb[0].mxu0
    %v805 = vadd.f32 %v460, %v804
    %v806 = vpop.f32.mrb[0].mxu0
    %807 = vdwg.mxu0
    %809 = vrot.lane.b32.xlu0 %v627, 64
    %v810 = vpop.permute.xlu0 %809
    %v811 = vsel %vm245, %v810, 0
    %813 = vmatprep.subr.mxu0 0.0
    %814 = vmatpush1.msra.mxu0 %v532
    %815 = vmatprep.subr.mxu0 0.0
    %816 = vmatpush1.msra.mxu0 %v533
    %817 = vmatprep.subr.mxu0 0.0
    %818 = vmatpush1.msra.mxu0 %v534
    %819 = vmatprep.subr.mxu0 0.0
    %820 = vmatpush1.msra.mxu0 %v535
    %821 = vmatprep.subr.mxu0 0.0
    %822 = vmatpush1.msra.mxu0 0.0
    %823 = vmatprep.subr.mxu0 0.0
    %824 = vmatpush1.msra.mxu0 0.0
    %825 = vmatprep.subr.mxu0 0.0
    %826 = vmatpush1.msra.mxu0 0.0
    %827 = vmatprep.subr.mxu0 0.0
    %828 = vmatpush1.msra.mxu0 0.0
    %829 = vmatprep.subr.mxu0 0.0
    %830 = vmatpush1.msra.mxu0 0.0
    %831 = vmatprep.subr.mxu0 0.0
    %832 = vmatpush1.msra.mxu0 0.0
    %833 = vmatprep.subr.mxu0 0.0
    %834 = vmatpush1.msra.mxu0 0.0
    %835 = vmatprep.subr.mxu0 0.0
    %836 = vmatpush1.msra.mxu0 0.0
    %837 = vmatprep.subr.mxu0 0.0
    %838 = vmatpush1.msra.mxu0 0.0
    %839 = vmatprep.subr.mxu0 0.0
    %840 = vmatpush1.msra.mxu0 0.0
    %841 = vmatprep.subr.mxu0 0.0
    %842 = vmatpush1.msra.mxu0 0.0
    %843 = vmatprep.subr.mxu0 0.0
    %844 = vmatpush1.msra.mxu0 0.0
    %845 = vmatprep.subr.mxu0 0.0
    %846 = vmatpush1.msra.mxu0 0.0
    %847 = vmatprep.subr.mxu0 0.0
    %848 = vmatpush1.msra.mxu0 0.0
    %849 = vmatprep.subr.mxu0 0.0
    %850 = vmatpush1.msra.mxu0 0.0
    %851 = vmatprep.subr.mxu0 0.0
    %852 = vmatpush1.msra.mxu0 0.0
    %853 = vmatprep.subr.mxu0 0.0
    %854 = vmatpush1.msra.mxu0 0.0
    %855 = vmatprep.subr.mxu0 0.0
    %856 = vmatpush1.msra.mxu0 0.0
    %857 = vmatprep.subr.mxu0 0.0
    %858 = vmatpush1.msra.mxu0 0.0
    %859 = vmatprep.subr.mxu0 0.0
    %860 = vmatpush1.msra.mxu0 0.0
    %861 = vmatprep.subr.mxu0 0.0
    %862 = vmatpush1.msra.mxu0 0.0
    %863 = vmatprep.subr.mxu0 0.0
    %864 = vmatpush1.msra.mxu0 0.0
    %865 = vmatprep.subr.mxu0 0.0
    %866 = vmatpush1.msra.mxu0 0.0
    %867 = vmatprep.subr.mxu0 0.0
    %868 = vmatpush1.msra.mxu0 0.0
    %869 = vmatprep.subr.mxu0 0.0
    %870 = vmatpush1.msra.mxu0 0.0
    %871 = vmatprep.subr.mxu0 0.0
    %872 = vmatpush1.msra.mxu0 0.0
    %873 = vmatprep.subr.mxu0 0.0
    %874 = vmatpush1.msra.mxu0 0.0
    %875 = vmatprep.subr.mxu0 0.0
    %876 = vmatpush1.msra.mxu0 0.0
    %877 = vmatprep.mubr.f32.mxu0 0.0
    %878 = vmatmul.mubr.f32.gmra.mrb[0].mxu0 %v811
    %v879 = vpop.f32.mrb[0].mxu0
    %v880 = vadd.f32 0.0, %v879
    %v881 = vpop.f32.mrb[0].mxu0
    %882 = vdwg.mxu0
    %v883 = vadd.f32 %v805, %v880
    %v884 = vtanh.pop %v883
    %v885 = vmul.f32 %v884, %v92
    %v886 = vadd.f32 %v885, %v93
    %v887 = vmul.f32 %v886, %v628
    %889 = vrot.lane.b32.xlu0 %v886, 32
    %v890 = vpop.permute.xlu0 %889
    %v892 = vmul.f32 %v886, %v890
    %894 = vrot.lane.b32.xlu0 %v892, 32
    %v895 = vpop.permute.xlu0 %894
    %v897 = vadd.f32 %v887, %v895
    %v898 = vtanh.pop %v897
    %900 = vrot.lane.b32.xlu0 %v898, 32
    %v901 = vpop.permute.xlu0 %900
    %v903 = vmul.f32 %v886, %v901
    %v904 = vsel %vm447, %v903, %v627
    %v905 = vsel %vm447, %v897, %v628
    %v906 = vsel %vm447, %v903, 0.0
    %v907 = vld [vmem:[#allocation5] sm:$0xff]
    %v908 = vld [vmem:[#allocation5 + $0x8] sm:$0xff]
    %v909 = vld [vmem:[#allocation5 + $0x10] sm:$0xff]
    %v910 = vld [vmem:[#allocation5 + $0x18] sm:$0xff]
    %v911 = vld [vmem:[%s10] sm:$0x1]
    %v913 = vlaneseq
    %v914 = vshrl.u32 %v913, 7
    %v915 = vsub.s32 0, %v914
    %v916 = vrot.slane %v911, %v915
    %918 = vmatprep.subr.mxu0 0.0
    %919 = vmatpush1.msra.mxu0 %v907
    %920 = vmatprep.subr.mxu0 0.0
    %921 = vmatpush1.msra.mxu0 %v908
    %922 = vmatprep.subr.mxu0 0.0
    %923 = vmatpush1.msra.mxu0 %v909
    %924 = vmatprep.subr.mxu0 0.0
    %925 = vmatpush1.msra.mxu0 %v910
    %926 = vmatprep.subr.mxu0 0.0
    %927 = vmatpush1.msra.mxu0 0.0
    %928 = vmatprep.subr.mxu0 0.0
    %929 = vmatpush1.msra.mxu0 0.0
    %930 = vmatprep.subr.mxu0 0.0
    %931 = vmatpush1.msra.mxu0 0.0
    %932 = vmatprep.subr.mxu0 0.0
    %933 = vmatpush1.msra.mxu0 0.0
    %934 = vmatprep.subr.mxu0 0.0
    %935 = vmatpush1.msra.mxu0 0.0
    %936 = vmatprep.subr.mxu0 0.0
    %937 = vmatpush1.msra.mxu0 0.0
    %938 = vmatprep.subr.mxu0 0.0
    %939 = vmatpush1.msra.mxu0 0.0
    %940 = vmatprep.subr.mxu0 0.0
    %941 = vmatpush1.msra.mxu0 0.0
    %942 = vmatprep.subr.mxu0 0.0
    %943 = vmatpush1.msra.mxu0 0.0
    %944 = vmatprep.subr.mxu0 0.0
    %945 = vmatpush1.msra.mxu0 0.0
    %946 = vmatprep.subr.mxu0 0.0
    %947 = vmatpush1.msra.mxu0 0.0
    %948 = vmatprep.subr.mxu0 0.0
    %949 = vmatpush1.msra.mxu0 0.0
    %950 = vmatprep.subr.mxu0 0.0
    %951 = vmatpush1.msra.mxu0 0.0
    %952 = vmatprep.subr.mxu0 0.0
    %953 = vmatpush1.msra.mxu0 0.0
    %954 = vmatprep.subr.mxu0 0.0
    %955 = vmatpush1.msra.mxu0 0.0
    %956 = vmatprep.subr.mxu0 0.0
    %957 = vmatpush1.msra.mxu0 0.0
    %958 = vmatprep.subr.mxu0 0.0
    %959 = vmatpush1.msra.mxu0 0.0
    %960 = vmatprep.subr.mxu0 0.0
    %961 = vmatpush1.msra.mxu0 0.0
    %962 = vmatprep.subr.mxu0 0.0
    %963 = vmatpush1.msra.mxu0 0.0
    %964 = vmatprep.subr.mxu0 0.0
    %965 = vmatpush1.msra.mxu0 0.0
    %966 = vmatprep.subr.mxu0 0.0
    %967 = vmatpush1.msra.mxu0 0.0
    %968 = vmatprep.subr.mxu0 0.0
    %969 = vmatpush1.msra.mxu0 0.0
    %970 = vmatprep.subr.mxu0 0.0
    %971 = vmatpush1.msra.mxu0 0.0
    %972 = vmatprep.subr.mxu0 0.0
    %973 = vmatpush1.msra.mxu0 0.0
    %974 = vmatprep.subr.mxu0 0.0
    %975 = vmatpush1.msra.mxu0 0.0
    %976 = vmatprep.subr.mxu0 0.0
    %977 = vmatpush1.msra.mxu0 0.0
    %978 = vmatprep.subr.mxu0 0.0
    %979 = vmatpush1.msra.mxu0 0.0
    %980 = vmatprep.subr.mxu0 0.0
    %981 = vmatpush1.msra.mxu0 0.0
    %982 = vmatprep.mubr.f32.mxu0 0.0
    %983 = vmatmul.mubr.f32.gmra.mrb[0].mxu0 %v811
    %v984 = vpop.f32.mrb[0].mxu0
    %v985 = vadd.f32 %v916, %v984
    %v986 = vpop.f32.mrb[0].mxu0
    %987 = vdwg.mxu0
    %v988 = vld [vmem:[#allocation7] sm:$0xff]
    %v989 = vld [vmem:[#allocation7 + $0x8] sm:$0xff]
    %v990 = vld [vmem:[#allocation7 + $0x10] sm:$0xff]
    %v991 = vld [vmem:[#allocation7 + $0x18] sm:$0xff]
    %992 = vmatprep.subr.mxu0 0.0
    %993 = vmatpush1.msra.mxu0 %v988
    %994 = vmatprep.subr.mxu0 0.0
    %995 = vmatpush1.msra.mxu0 %v989
    %996 = vmatprep.subr.mxu0 0.0
    %997 = vmatpush1.msra.mxu0 %v990
    %998 = vmatprep.subr.mxu0 0.0
    %999 = vmatpush1.msra.mxu0 %v991
    %1000 = vmatprep.subr.mxu0 0.0
    %1001 = vmatpush1.msra.mxu0 0.0
    %1002 = vmatprep.subr.mxu0 0.0
    %1003 = vmatpush1.msra.mxu0 0.0
    %1004 = vmatprep.subr.mxu0 0.0
    %1005 = vmatpush1.msra.mxu0 0.0
    %1006 = vmatprep.subr.mxu0 0.0
    %1007 = vmatpush1.msra.mxu0 0.0
    %1008 = vmatprep.subr.mxu0 0.0
    %1009 = vmatpush1.msra.mxu0 0.0
    %1010 = vmatprep.subr.mxu0 0.0
    %1011 = vmatpush1.msra.mxu0 0.0
    %1012 = vmatprep.subr.mxu0 0.0
    %1013 = vmatpush1.msra.mxu0 0.0
    %1014 = vmatprep.subr.mxu0 0.0
    %1015 = vmatpush1.msra.mxu0 0.0
    %1016 = vmatprep.subr.mxu0 0.0
    %1017 = vmatpush1.msra.mxu0 0.0
    %1018 = vmatprep.subr.mxu0 0.0
    %1019 = vmatpush1.msra.mxu0 0.0
    %1020 = vmatprep.subr.mxu0 0.0
    %1021 = vmatpush1.msra.mxu0 0.0
    %1022 = vmatprep.subr.mxu0 0.0
    %1023 = vmatpush1.msra.mxu0 0.0
    %1024 = vmatprep.subr.mxu0 0.0
    %1025 = vmatpush1.msra.mxu0 0.0
    %1026 = vmatprep.subr.mxu0 0.0
    %1027 = vmatpush1.msra.mxu0 0.0
    %1028 = vmatprep.subr.mxu0 0.0
    %1029 = vmatpush1.msra.mxu0 0.0
    %1030 = vmatprep.subr.mxu0 0.0
    %1031 = vmatpush1.msra.mxu0 0.0
    %1032 = vmatprep.subr.mxu0 0.0
    %1033 = vmatpush1.msra.mxu0 0.0
    %1034 = vmatprep.subr.mxu0 0.0
    %1035 = vmatpush1.msra.mxu0 0.0
    %1036 = vmatprep.subr.mxu0 0.0
    %1037 = vmatpush1.msra.mxu0 0.0
    %1038 = vmatprep.subr.mxu0 0.0
    %1039 = vmatpush1.msra.mxu0 0.0
    %1040 = vmatprep.subr.mxu0 0.0
    %1041 = vmatpush1.msra.mxu0 0.0
    %1042 = vmatprep.subr.mxu0 0.0
    %1043 = vmatpush1.msra.mxu0 0.0
    %1044 = vmatprep.subr.mxu0 0.0
    %1045 = vmatpush1.msra.mxu0 0.0
    %1046 = vmatprep.subr.mxu0 0.0
    %1047 = vmatpush1.msra.mxu0 0.0
    %1048 = vmatprep.subr.mxu0 0.0
    %1049 = vmatpush1.msra.mxu0 0.0
    %1050 = vmatprep.subr.mxu0 0.0
    %1051 = vmatpush1.msra.mxu0 0.0
    %1052 = vmatprep.subr.mxu0 0.0
    %1053 = vmatpush1.msra.mxu0 0.0
    %1054 = vmatprep.subr.mxu0 0.0
    %1055 = vmatpush1.msra.mxu0 0.0
    %1056 = vmatprep.mubr.f32.mxu0 0.0
    %1057 = vmatmul.mubr.f32.gmra.mrb[0].mxu0 %v247
    %v1058 = vpop.f32.mrb[0].mxu0
    %v1059 = vadd.f32 0.0, %v1058
    %v1060 = vpop.f32.mrb[0].mxu0
    %1061 = vdwg.mxu0
    %v1062 = vadd.f32 %v985, %v1059
    %v1063 = vtanh.pop %v1062
    %v1064 = vmul.f32 %v1063, %v92
    %v1065 = vadd.f32 %v1064, %v93
    %v1066 = vmul.f32 %v1065, 0.0
    %1068 = vrot.lane.b32.xlu0 %v1065, 32
    %v1069 = vpop.permute.xlu0 %1068
    %v1071 = vmul.f32 %v1065, %v1069
    %1073 = vrot.lane.b32.xlu0 %v1071, 32
    %v1074 = vpop.permute.xlu0 %1073
    %v1076 = vadd.f32 %v1066, %v1074
    %v1077 = vtanh.pop %v1076
    %1079 = vrot.lane.b32.xlu0 %v1077, 32
    %v1080 = vpop.permute.xlu0 %1079
    %v1082 = vmul.f32 %v1065, %v1080
    %v1083 = vsel %vm344, %v1082, 0.0
    %v1084 = vsel %vm344, %v1076, 0.0
    %1086 = vrot.lane.b32.xlu0 %v730, 64
    %v1087 = vpop.permute.xlu0 %1086
    %v1088 = vsel %vm245, %v1087, 0
    %1090 = vmatprep.subr.mxu0 0.0
    %1091 = vmatpush1.msra.mxu0 %v241
    %1092 = vmatprep.subr.mxu0 0.0
    %1093 = vmatpush1.msra.mxu0 %v242
    %1094 = vmatprep.subr.mxu0 0.0
    %1095 = vmatpush1.msra.mxu0 %v243
    %1096 = vmatprep.subr.mxu0 0.0
    %1097 = vmatpush1.msra.mxu0 %v244
    %1098 = vmatprep.subr.mxu0 0.0
    %1099 = vmatpush1.msra.mxu0 0.0
    %1100 = vmatprep.subr.mxu0 0.0
    %1101 = vmatpush1.msra.mxu0 0.0
    %1102 = vmatprep.subr.mxu0 0.0
    %1103 = vmatpush1.msra.mxu0 0.0
    %1104 = vmatprep.subr.mxu0 0.0
    %1105 = vmatpush1.msra.mxu0 0.0
    %1106 = vmatprep.subr.mxu0 0.0
    %1107 = vmatpush1.msra.mxu0 0.0
    %1108 = vmatprep.subr.mxu0 0.0
    %1109 = vmatpush1.msra.mxu0 0.0
    %1110 = vmatprep.subr.mxu0 0.0
    %1111 = vmatpush1.msra.mxu0 0.0
    %1112 = vmatprep.subr.mxu0 0.0
    %1113 = vmatpush1.msra.mxu0 0.0
    %1114 = vmatprep.subr.mxu0 0.0
    %1115 = vmatpush1.msra.mxu0 0.0
    %1116 = vmatprep.subr.mxu0 0.0
    %1117 = vmatpush1.msra.mxu0 0.0
    %1118 = vmatprep.subr.mxu0 0.0
    %1119 = vmatpush1.msra.mxu0 0.0
    %1120 = vmatprep.subr.mxu0 0.0
    %1121 = vmatpush1.msra.mxu0 0.0
    %1122 = vmatprep.subr.mxu0 0.0
    %1123 = vmatpush1.msra.mxu0 0.0
    %1124 = vmatprep.subr.mxu0 0.0
    %1125 = vmatpush1.msra.mxu0 0.0
    %1126 = vmatprep.subr.mxu0 0.0
    %1127 = vmatpush1.msra.mxu0 0.0
    %1128 = vmatprep.subr.mxu0 0.0
    %1129 = vmatpush1.msra.mxu0 0.0
    %1130 = vmatprep.subr.mxu0 0.0
    %1131 = vmatpush1.msra.mxu0 0.0
    %1132 = vmatprep.subr.mxu0 0.0
    %1133 = vmatpush1.msra.mxu0 0.0
    %1134 = vmatprep.subr.mxu0 0.0
    %1135 = vmatpush1.msra.mxu0 0.0
    %1136 = vmatprep.subr.mxu0 0.0
    %1137 = vmatpush1.msra.mxu0 0.0
    %1138 = vmatprep.subr.mxu0 0.0
    %1139 = vmatpush1.msra.mxu0 0.0
    %1140 = vmatprep.subr.mxu0 0.0
    %1141 = vmatpush1.msra.mxu0 0.0
    %1142 = vmatprep.subr.mxu0 0.0
    %1143 = vmatpush1.msra.mxu0 0.0
    %1144 = vmatprep.subr.mxu0 0.0
    %1145 = vmatpush1.msra.mxu0 0.0
    %1146 = vmatprep.subr.mxu0 0.0
    %1147 = vmatpush1.msra.mxu0 0.0
    %1148 = vmatprep.subr.mxu0 0.0
    %1149 = vmatpush1.msra.mxu0 0.0
    %1150 = vmatprep.subr.mxu0 0.0
    %1151 = vmatpush1.msra.mxu0 0.0
    %1152 = vmatprep.subr.mxu0 0.0
    %1153 = vmatpush1.msra.mxu0 0.0
    %1154 = vmatprep.mubr.f32.mxu0 0.0
    %1155 = vmatmul.mubr.f32.gmra.mrb[0].mxu0 %v1088
    %v1156 = vpop.f32.mrb[0].mxu0
    %v1157 = vadd.f32 0.0, %v1156
    %v1158 = vpop.f32.mrb[0].mxu0
    %1159 = vdwg.mxu0
    %v1160 = vadd.f32 %v218, %v1157
    %v1161 = vtanh.pop %v1160
    %v1162 = vmul.f32 %v1161, %v92
    %v1163 = vadd.f32 %v1162, %v93
    %v1164 = vmul.f32 %v1163, %v731
    %1166 = vrot.lane.b32.xlu0 %v1163, 32
    %v1167 = vpop.permute.xlu0 %1166
    %v1169 = vmul.f32 %v1163, %v1167
    %1171 = vrot.lane.b32.xlu0 %v1169, 32
    %v1172 = vpop.permute.xlu0 %1171
    %v1174 = vadd.f32 %v1164, %v1172
    %v1175 = vtanh.pop %v1174
    %1177 = vrot.lane.b32.xlu0 %v1175, 32
    %v1178 = vpop.permute.xlu0 %1177
    %v1180 = vmul.f32 %v1163, %v1178
    %v1181 = vsel %vm84, 1, 0
    %1182 = vset.pattern.permute.xlu0 0
    %1183 = vperm.xlu0 %1182, %v1181
    %v1184 = vpop.permute.xlu0 %1183
    %vm1185 = vcmp.eq.s32.totalorder %v1184, 1
    %v1186 = vsel %vm1185, %v1180, %v730
    %v1187 = vsel %vm1185, %v1174, %v731
    %v1188 = vsel %vm1185, %v1180, 0.0
    %1190 = vrot.lane.b32.xlu0 %v732, 64
    %v1191 = vpop.permute.xlu0 %1190
    %v1192 = vsel %vm245, %v1191, 0
    %1194 = vmatprep.subr.mxu0 0.0
    %1195 = vmatpush1.msra.mxu0 %v451
    %1196 = vmatprep.subr.mxu0 0.0
    %1197 = vmatpush1.msra.mxu0 %v452
    %1198 = vmatprep.subr.mxu0 0.0
    %1199 = vmatpush1.msra.mxu0 %v453
    %1200 = vmatprep.subr.mxu0 0.0
    %1201 = vmatpush1.msra.mxu0 %v454
    %1202 = vmatprep.subr.mxu0 0.0
    %1203 = vmatpush1.msra.mxu0 0.0
    %1204 = vmatprep.subr.mxu0 0.0
    %1205 = vmatpush1.msra.mxu0 0.0
    %1206 = vmatprep.subr.mxu0 0.0
    %1207 = vmatpush1.msra.mxu0 0.0
    %1208 = vmatprep.subr.mxu0 0.0
    %1209 = vmatpush1.msra.mxu0 0.0
    %1210 = vmatprep.subr.mxu0 0.0
    %1211 = vmatpush1.msra.mxu0 0.0
    %1212 = vmatprep.subr.mxu0 0.0
    %1213 = vmatpush1.msra.mxu0 0.0
    %1214 = vmatprep.subr.mxu0 0.0
    %1215 = vmatpush1.msra.mxu0 0.0
    %1216 = vmatprep.subr.mxu0 0.0
    %1217 = vmatpush1.msra.mxu0 0.0
    %1218 = vmatprep.subr.mxu0 0.0
    %1219 = vmatpush1.msra.mxu0 0.0
    %1220 = vmatprep.subr.mxu0 0.0
    %1221 = vmatpush1.msra.mxu0 0.0
    %1222 = vmatprep.subr.mxu0 0.0
    %1223 = vmatpush1.msra.mxu0 0.0
    %1224 = vmatprep.subr.mxu0 0.0
    %1225 = vmatpush1.msra.mxu0 0.0
    %1226 = vmatprep.subr.mxu0 0.0
    %1227 = vmatpush1.msra.mxu0 0.0
    %1228 = vmatprep.subr.mxu0 0.0
    %1229 = vmatpush1.msra.mxu0 0.0
    %1230 = vmatprep.subr.mxu0 0.0
    %1231 = vmatpush1.msra.mxu0 0.0
    %1232 = vmatprep.subr.mxu0 0.0
    %1233 = vmatpush1.msra.mxu0 0.0
    %1234 = vmatprep.subr.mxu0 0.0
    %1235 = vmatpush1.msra.mxu0 0.0
    %1236 = vmatprep.subr.mxu0 0.0
    %1237 = vmatpush1.msra.mxu0 0.0
    %1238 = vmatprep.subr.mxu0 0.0
    %1239 = vmatpush1.msra.mxu0 0.0
    %1240 = vmatprep.subr.mxu0 0.0
    %1241 = vmatpush1.msra.mxu0 0.0
    %1242 = vmatprep.subr.mxu0 0.0
    %1243 = vmatpush1.msra.mxu0 0.0
    %1244 = vmatprep.subr.mxu0 0.0
    %1245 = vmatpush1.msra.mxu0 0.0
    %1246 = vmatprep.subr.mxu0 0.0
    %1247 = vmatpush1.msra.mxu0 0.0
    %1248 = vmatprep.subr.mxu0 0.0
    %1249 = vmatpush1.msra.mxu0 0.0
    %1250 = vmatprep.subr.mxu0 0.0
    %1251 = vmatpush1.msra.mxu0 0.0
    %1252 = vmatprep.subr.mxu0 0.0
    %1253 = vmatpush1.msra.mxu0 0.0
    %1254 = vmatprep.subr.mxu0 0.0
    %1255 = vmatpush1.msra.mxu0 0.0
    %1256 = vmatprep.subr.mxu0 0.0
    %1257 = vmatpush1.msra.mxu0 0.0
    %1258 = vmatprep.mubr.f32.mxu0 0.0
    %1259 = vmatmul.mubr.f32.gmra.mrb[0].mxu0 %v1192
    %v1260 = vpop.f32.mrb[0].mxu0
    %v1261 = vadd.f32 %v460, %v1260
    %v1262 = vpop.f32.mrb[0].mxu0
    %1263 = vdwg.mxu0
    %1265 = vrot.lane.b32.xlu0 %v904, 64
    %v1266 = vpop.permute.xlu0 %1265
    %v1267 = vsel %vm245, %v1266, 0
    %1269 = vmatprep.subr.mxu0 0.0
    %1270 = vmatpush1.msra.mxu0 %v532
    %1271 = vmatprep.subr.mxu0 0.0
    %1272 = vmatpush1.msra.mxu0 %v533
    %1273 = vmatprep.subr.mxu0 0.0
    %1274 = vmatpush1.msra.mxu0 %v534
    %1275 = vmatprep.subr.mxu0 0.0
    %1276 = vmatpush1.msra.mxu0 %v535
    %1277 = vmatprep.subr.mxu0 0.0
    %1278 = vmatpush1.msra.mxu0 0.0
    %1279 = vmatprep.subr.mxu0 0.0
    %1280 = vmatpush1.msra.mxu0 0.0
    %1281 = vmatprep.subr.mxu0 0.0
    %1282 = vmatpush1.msra.mxu0 0.0
    %1283 = vmatprep.subr.mxu0 0.0
    %1284 = vmatpush1.msra.mxu0 0.0
    %1285 = vmatprep.subr.mxu0 0.0
    %1286 = vmatpush1.msra.mxu0 0.0
    %1287 = vmatprep.subr.mxu0 0.0
    %1288 = vmatpush1.msra.mxu0 0.0
    %1289 = vmatprep.subr.mxu0 0.0
    %1290 = vmatpush1.msra.mxu0 0.0
    %1291 = vmatprep.subr.mxu0 0.0
    %1292 = vmatpush1.msra.mxu0 0.0
    %1293 = vmatprep.subr.mxu0 0.0
    %1294 = vmatpush1.msra.mxu0 0.0
    %1295 = vmatprep.subr.mxu0 0.0
    %1296 = vmatpush1.msra.mxu0 0.0
    %1297 = vmatprep.subr.mxu0 0.0
    %1298 = vmatpush1.msra.mxu0 0.0
    %1299 = vmatprep.subr.mxu0 0.0
    %1300 = vmatpush1.msra.mxu0 0.0
    %1301 = vmatprep.subr.mxu0 0.0
    %1302 = vmatpush1.msra.mxu0 0.0
    %1303 = vmatprep.subr.mxu0 0.0
    %1304 = vmatpush1.msra.mxu0 0.0
    %1305 = vmatprep.subr.mxu0 0.0
    %1306 = vmatpush1.msra.mxu0 0.0
    %1307 = vmatprep.subr.mxu0 0.0
    %1308 = vmatpush1.msra.mxu0 0.0
    %1309 = vmatprep.subr.mxu0 0.0
    %1310 = vmatpush1.msra.mxu0 0.0
    %1311 = vmatprep.subr.mxu0 0.0
    %1312 = vmatpush1.msra.mxu0 0.0
    %1313 = vmatprep.subr.mxu0 0.0
    %1314 = vmatpush1.msra.mxu0 0.0
    %1315 = vmatprep.subr.mxu0 0.0
    %1316 = vmatpush1.msra.mxu0 0.0
    %1317 = vmatprep.subr.mxu0 0.0
    %1318 = vmatpush1.msra.mxu0 0.0
    %1319 = vmatprep.subr.mxu0 0.0
    %1320 = vmatpush1.msra.mxu0 0.0
    %1321 = vmatprep.subr.mxu0 0.0
    %1322 = vmatpush1.msra.mxu0 0.0
    %1323 = vmatprep.subr.mxu0 0.0
    %1324 = vmatpush1.msra.mxu0 0.0
    %1325 = vmatprep.subr.mxu0 0.0
    %1326 = vmatpush1.msra.mxu0 0.0
    %1327 = vmatprep.subr.mxu0 0.0
    %1328 = vmatpush1.msra.mxu0 0.0
    %1329 = vmatprep.subr.mxu0 0.0
    %1330 = vmatpush1.msra.mxu0 0.0
    %1331 = vmatprep.subr.mxu0 0.0
    %1332 = vmatpush1.msra.mxu0 0.0
    %1333 = vmatprep.mubr.f32.mxu0 0.0
    %1334 = vmatmul.mubr.f32.gmra.mrb[0].mxu0 %v1267
    %v1335 = vpop.f32.mrb[0].mxu0
    %v1336 = vadd.f32 0.0, %v1335
    %v1337 = vpop.f32.mrb[0].mxu0
    %1338 = vdwg.mxu0
    %v1339 = vadd.f32 %v1261, %v1336
    %v1340 = vtanh.pop %v1339
    %v1341 = vmul.f32 %v1340, %v92
    %v1342 = vadd.f32 %v1341, %v93
    %v1343 = vmul.f32 %v1342, %v905
    %1345 = vrot.lane.b32.xlu0 %v1342, 32
    %v1346 = vpop.permute.xlu0 %1345
    %v1348 = vmul.f32 %v1342, %v1346
    %1350 = vrot.lane.b32.xlu0 %v1348, 32
    %v1351 = vpop.permute.xlu0 %1350
    %v1353 = vadd.f32 %v1343, %v1351
    %v1354 = vtanh.pop %v1353
    %1356 = vrot.lane.b32.xlu0 %v1354, 32
    %v1357 = vpop.permute.xlu0 %1356
    %v1359 = vmul.f32 %v1342, %v1357
    %v1360 = vsel %vm729, %v1359, %v904
    %v1361 = vsel %vm729, %v1353, %v905
    %v1362 = vsel %vm729, %v1359, 0.0
    %1364 = vrot.lane.b32.xlu0 %v906, 64
    %v1365 = vpop.permute.xlu0 %1364
    %v1366 = vsel %vm245, %v1365, 0
    %1368 = vmatprep.subr.mxu0 0.0
    %1369 = vmatpush1.msra.mxu0 %v907
    %1370 = vmatprep.subr.mxu0 0.0
    %1371 = vmatpush1.msra.mxu0 %v908
    %1372 = vmatprep.subr.mxu0 0.0
    %1373 = vmatpush1.msra.mxu0 %v909
    %1374 = vmatprep.subr.mxu0 0.0
    %1375 = vmatpush1.msra.mxu0 %v910
    %1376 = vmatprep.subr.mxu0 0.0
    %1377 = vmatpush1.msra.mxu0 0.0
    %1378 = vmatprep.subr.mxu0 0.0
    %1379 = vmatpush1.msra.mxu0 0.0
    %1380 = vmatprep.subr.mxu0 0.0
    %1381 = vmatpush1.msra.mxu0 0.0
    %1382 = vmatprep.subr.mxu0 0.0
    %1383 = vmatpush1.msra.mxu0 0.0
    %1384 = vmatprep.subr.mxu0 0.0
    %1385 = vmatpush1.msra.mxu0 0.0
    %1386 = vmatprep.subr.mxu0 0.0
    %1387 = vmatpush1.msra.mxu0 0.0
    %1388 = vmatprep.subr.mxu0 0.0
    %1389 = vmatpush1.msra.mxu0 0.0
    %1390 = vmatprep.subr.mxu0 0.0
    %1391 = vmatpush1.msra.mxu0 0.0
    %1392 = vmatprep.subr.mxu0 0.0
    %1393 = vmatpush1.msra.mxu0 0.0
    %1394 = vmatprep.subr.mxu0 0.0
    %1395 = vmatpush1.msra.mxu0 0.0
    %1396 = vmatprep.subr.mxu0 0.0
    %1397 = vmatpush1.msra.mxu0 0.0
    %1398 = vmatprep.subr.mxu0 0.0
    %1399 = vmatpush1.msra.mxu0 0.0
    %1400 = vmatprep.subr.mxu0 0.0
    %1401 = vmatpush1.msra.mxu0 0.0
    %1402 = vmatprep.subr.mxu0 0.0
    %1403 = vmatpush1.msra.mxu0 0.0
    %1404 = vmatprep.subr.mxu0 0.0
    %1405 = vmatpush1.msra.mxu0 0.0
    %1406 = vmatprep.subr.mxu0 0.0
    %1407 = vmatpush1.msra.mxu0 0.0
    %1408 = vmatprep.subr.mxu0 0.0
    %1409 = vmatpush1.msra.mxu0 0.0
    %1410 = vmatprep.subr.mxu0 0.0
    %1411 = vmatpush1.msra.mxu0 0.0
    %1412 = vmatprep.subr.mxu0 0.0
    %1413 = vmatpush1.msra.mxu0 0.0
    %1414 = vmatprep.subr.mxu0 0.0
    %1415 = vmatpush1.msra.mxu0 0.0
    %1416 = vmatprep.subr.mxu0 0.0
    %1417 = vmatpush1.msra.mxu0 0.0
    %1418 = vmatprep.subr.mxu0 0.0
    %1419 = vmatpush1.msra.mxu0 0.0
    %1420 = vmatprep.subr.mxu0 0.0
    %1421 = vmatpush1.msra.mxu0 0.0
    %1422 = vmatprep.subr.mxu0 0.0
    %1423 = vmatpush1.msra.mxu0 0.0
    %1424 = vmatprep.subr.mxu0 0.0
    %1425 = vmatpush1.msra.mxu0 0.0
    %1426 = vmatprep.subr.mxu0 0.0
    %1427 = vmatpush1.msra.mxu0 0.0
    %1428 = vmatprep.subr.mxu0 0.0
    %1429 = vmatpush1.msra.mxu0 0.0
    %1430 = vmatprep.subr.mxu0 0.0
    %1431 = vmatpush1.msra.mxu0 0.0
    %1432 = vmatprep.mubr.f32.mxu0 0.0
    %1433 = vmatmul.mubr.f32.gmra.mrb[0].mxu0 %v1366
    %v1434 = vpop.f32.mrb[0].mxu0
    %v1435 = vadd.f32 %v916, %v1434
    %v1436 = vpop.f32.mrb[0].mxu0
    %1437 = vdwg.mxu0
    %1439 = vrot.lane.b32.xlu0 %v1083, 64
    %v1440 = vpop.permute.xlu0 %1439
    %v1441 = vsel %vm245, %v1440, 0
    %1443 = vmatprep.subr.mxu0 0.0
    %1444 = vmatpush1.msra.mxu0 %v988
    %1445 = vmatprep.subr.mxu0 0.0
    %1446 = vmatpush1.msra.mxu0 %v989
    %1447 = vmatprep.subr.mxu0 0.0
    %1448 = vmatpush1.msra.mxu0 %v990
    %1449 = vmatprep.subr.mxu0 0.0
    %1450 = vmatpush1.msra.mxu0 %v991
    %1451 = vmatprep.subr.mxu0 0.0
    %1452 = vmatpush1.msra.mxu0 0.0
    %1453 = vmatprep.subr.mxu0 0.0
    %1454 = vmatpush1.msra.mxu0 0.0
    %1455 = vmatprep.subr.mxu0 0.0
    %1456 = vmatpush1.msra.mxu0 0.0
    %1457 = vmatprep.subr.mxu0 0.0
    %1458 = vmatpush1.msra.mxu0 0.0
    %1459 = vmatprep.subr.mxu0 0.0
    %1460 = vmatpush1.msra.mxu0 0.0
    %1461 = vmatprep.subr.mxu0 0.0
    %1462 = vmatpush1.msra.mxu0 0.0
    %1463 = vmatprep.subr.mxu0 0.0
    %1464 = vmatpush1.msra.mxu0 0.0
    %1465 = vmatprep.subr.mxu0 0.0
    %1466 = vmatpush1.msra.mxu0 0.0
    %1467 = vmatprep.subr.mxu0 0.0
    %1468 = vmatpush1.msra.mxu0 0.0
    %1469 = vmatprep.subr.mxu0 0.0
    %1470 = vmatpush1.msra.mxu0 0.0
    %1471 = vmatprep.subr.mxu0 0.0
    %1472 = vmatpush1.msra.mxu0 0.0
    %1473 = vmatprep.subr.mxu0 0.0
    %1474 = vmatpush1.msra.mxu0 0.0
    %1475 = vmatprep.subr.mxu0 0.0
    %1476 = vmatpush1.msra.mxu0 0.0
    %1477 = vmatprep.subr.mxu0 0.0
    %1478 = vmatpush1.msra.mxu0 0.0
    %1479 = vmatprep.subr.mxu0 0.0
    %1480 = vmatpush1.msra.mxu0 0.0
    %1481 = vmatprep.subr.mxu0 0.0
    %1482 = vmatpush1.msra.mxu0 0.0
    %1483 = vmatprep.subr.mxu0 0.0
    %1484 = vmatpush1.msra.mxu0 0.0
    %1485 = vmatprep.subr.mxu0 0.0
    %1486 = vmatpush1.msra.mxu0 0.0
    %1487 = vmatprep.subr.mxu0 0.0
    %1488 = vmatpush1.msra.mxu0 0.0
    %1489 = vmatprep.subr.mxu0 0.0
    %1490 = vmatpush1.msra.mxu0 0.0
    %1491 = vmatprep.subr.mxu0 0.0
    %1492 = vmatpush1.msra.mxu0 0.0
    %1493 = vmatprep.subr.mxu0 0.0
    %1494 = vmatpush1.msra.mxu0 0.0
    %1495 = vmatprep.subr.mxu0 0.0
    %1496 = vmatpush1.msra.mxu0 0.0
    %1497 = vmatprep.subr.mxu0 0.0
    %1498 = vmatpush1.msra.mxu0 0.0
    %1499 = vmatprep.subr.mxu0 0.0
    %1500 = vmatpush1.msra.mxu0 0.0
    %1501 = vmatprep.subr.mxu0 0.0
    %1502 = vmatpush1.msra.mxu0 0.0
    %1503 = vmatprep.subr.mxu0 0.0
    %1504 = vmatpush1.msra.mxu0 0.0
    %1505 = vmatprep.subr.mxu0 0.0
    %1506 = vmatpush1.msra.mxu0 0.0
    %1507 = vmatprep.mubr.f32.mxu0 0.0
    %1508 = vmatmul.mubr.f32.gmra.mrb[0].mxu0 %v1441
    %v1509 = vpop.f32.mrb[0].mxu0
    %v1510 = vadd.f32 0.0, %v1509
    %v1511 = vpop.f32.mrb[0].mxu0
    %1512 = vdwg.mxu0
    %v1513 = vadd.f32 %v1435, %v1510
    %v1514 = vtanh.pop %v1513
    %v1515 = vmul.f32 %v1514, %v92
    %v1516 = vadd.f32 %v1515, %v93
    %v1517 = vmul.f32 %v1516, %v1084
    %1519 = vrot.lane.b32.xlu0 %v1516, 32
    %v1520 = vpop.permute.xlu0 %1519
    %v1522 = vmul.f32 %v1516, %v1520
    %1524 = vrot.lane.b32.xlu0 %v1522, 32
    %v1525 = vpop.permute.xlu0 %1524
    %v1527 = vadd.f32 %v1517, %v1525
    %v1528 = vtanh.pop %v1527
    %1530 = vrot.lane.b32.xlu0 %v1528, 32
    %v1531 = vpop.permute.xlu0 %1530
    %v1533 = vmul.f32 %v1516, %v1531
    %v1534 = vsel %vm447, %v1533, %v1083
    %v1535 = vsel %vm447, %v1527, %v1084
    %1537 = vrot.lane.b32.xlu0 %v1186, 64
    %v1538 = vpop.permute.xlu0 %1537
    %v1539 = vsel %vm245, %v1538, 0
    %1541 = vmatprep.subr.mxu0 0.0
    %1542 = vmatpush1.msra.mxu0 %v241
    %1543 = vmatprep.subr.mxu0 0.0
    %1544 = vmatpush1.msra.mxu0 %v242
    %1545 = vmatprep.subr.mxu0 0.0
    %1546 = vmatpush1.msra.mxu0 %v243
    %1547 = vmatprep.subr.mxu0 0.0
    %1548 = vmatpush1.msra.mxu0 %v244
    %1549 = vmatprep.subr.mxu0 0.0
    %1550 = vmatpush1.msra.mxu0 0.0
    %1551 = vmatprep.subr.mxu0 0.0
    %1552 = vmatpush1.msra.mxu0 0.0
    %1553 = vmatprep.subr.mxu0 0.0
    %1554 = vmatpush1.msra.mxu0 0.0
    %1555 = vmatprep.subr.mxu0 0.0
    %1556 = vmatpush1.msra.mxu0 0.0
    %1557 = vmatprep.subr.mxu0 0.0
    %1558 = vmatpush1.msra.mxu0 0.0
    %1559 = vmatprep.subr.mxu0 0.0
    %1560 = vmatpush1.msra.mxu0 0.0
    %1561 = vmatprep.subr.mxu0 0.0
    %1562 = vmatpush1.msra.mxu0 0.0
    %1563 = vmatprep.subr.mxu0 0.0
    %1564 = vmatpush1.msra.mxu0 0.0
    %1565 = vmatprep.subr.mxu0 0.0
    %1566 = vmatpush1.msra.mxu0 0.0
    %1567 = vmatprep.subr.mxu0 0.0
    %1568 = vmatpush1.msra.mxu0 0.0
    %1569 = vmatprep.subr.mxu0 0.0
    %1570 = vmatpush1.msra.mxu0 0.0
    %1571 = vmatprep.subr.mxu0 0.0
    %1572 = vmatpush1.msra.mxu0 0.0
    %1573 = vmatprep.subr.mxu0 0.0
    %1574 = vmatpush1.msra.mxu0 0.0
    %1575 = vmatprep.subr.mxu0 0.0
    %1576 = vmatpush1.msra.mxu0 0.0
    %1577 = vmatprep.subr.mxu0 0.0
    %1578 = vmatpush1.msra.mxu0 0.0
    %1579 = vmatprep.subr.mxu0 0.0
    %1580 = vmatpush1.msra.mxu0 0.0
    %1581 = vmatprep.subr.mxu0 0.0
    %1582 = vmatpush1.msra.mxu0 0.0
    %1583 = vmatprep.subr.mxu0 0.0
    %1584 = vmatpush1.msra.mxu0 0.0
    %1585 = vmatprep.subr.mxu0 0.0
    %1586 = vmatpush1.msra.mxu0 0.0
    %1587 = vmatprep.subr.mxu0 0.0
    %1588 = vmatpush1.msra.mxu0 0.0
    %1589 = vmatprep.subr.mxu0 0.0
    %1590 = vmatpush1.msra.mxu0 0.0
    %1591 = vmatprep.subr.mxu0 0.0
    %1592 = vmatpush1.msra.mxu0 0.0
    %1593 = vmatprep.subr.mxu0 0.0
    %1594 = vmatpush1.msra.mxu0 0.0
    %1595 = vmatprep.subr.mxu0 0.0
    %1596 = vmatpush1.msra.mxu0 0.0
    %1597 = vmatprep.subr.mxu0 0.0
    %1598 = vmatpush1.msra.mxu0 0.0
    %1599 = vmatprep.subr.mxu0 0.0
    %1600 = vmatpush1.msra.mxu0 0.0
    %1601 = vmatprep.subr.mxu0 0.0
    %1602 = vmatpush1.msra.mxu0 0.0
    %1603 = vmatprep.subr.mxu0 0.0
    %1604 = vmatpush1.msra.mxu0 0.0
    %1605 = vmatprep.mubr.f32.mxu0 0.0
    %1606 = vmatmul.mubr.f32.gmra.mrb[0].mxu0 %v1539
    %v1607 = vpop.f32.mrb[0].mxu0
    %v1608 = vadd.f32 0.0, %v1607
    %v1609 = vpop.f32.mrb[0].mxu0
    %1610 = vdwg.mxu0
    %v1611 = vadd.f32 %v223, %v1608
    %v1612 = vtanh.pop %v1611
    %v1613 = vmul.f32 %v1612, %v92
    %v1614 = vadd.f32 %v1613, %v93
    %v1615 = vmul.f32 %v1614, %v1187
    %1617 = vrot.lane.b32.xlu0 %v1614, 32
    %v1618 = vpop.permute.xlu0 %1617
    %v1620 = vmul.f32 %v1614, %v1618
    %1622 = vrot.lane.b32.xlu0 %v1620, 32
    %v1623 = vpop.permute.xlu0 %1622
    %v1625 = vadd.f32 %v1615, %v1623
    %v1626 = vtanh.pop %v1625
    %1628 = vrot.lane.b32.xlu0 %v1626, 32
    %v1629 = vpop.permute.xlu0 %1628
    %v1631 = vmul.f32 %v1614, %v1629
    %v1632 = vsel %vm85, 1, 0
    %1633 = vset.pattern.permute.xlu0 0
    %1634 = vperm.xlu0 %1633, %v1632
    %v1635 = vpop.permute.xlu0 %1634
    %vm1636 = vcmp.eq.s32.totalorder %v1635, 1
    %v1637 = vsel %vm1636, %v1631, %v1186
    %v1638 = vsel %vm1636, %v1625, %v1187
    %v1639 = vsel %vm1636, %v1631, 0.0
    %1641 = vrot.lane.b32.xlu0 %v1188, 64
    %v1642 = vpop.permute.xlu0 %1641
    %v1643 = vsel %vm245, %v1642, 0
    %1645 = vmatprep.subr.mxu0 0.0
    %1646 = vmatpush1.msra.mxu0 %v451
    %1647 = vmatprep.subr.mxu0 0.0
    %1648 = vmatpush1.msra.mxu0 %v452
    %1649 = vmatprep.subr.mxu0 0.0
    %1650 = vmatpush1.msra.mxu0 %v453
    %1651 = vmatprep.subr.mxu0 0.0
    %1652 = vmatpush1.msra.mxu0 %v454
    %1653 = vmatprep.subr.mxu0 0.0
    %1654 = vmatpush1.msra.mxu0 0.0
    %1655 = vmatprep.subr.mxu0 0.0
    %1656 = vmatpush1.msra.mxu0 0.0
    %1657 = vmatprep.subr.mxu0 0.0
    %1658 = vmatpush1.msra.mxu0 0.0
    %1659 = vmatprep.subr.mxu0 0.0
    %1660 = vmatpush1.msra.mxu0 0.0
    %1661 = vmatprep.subr.mxu0 0.0
    %1662 = vmatpush1.msra.mxu0 0.0
    %1663 = vmatprep.subr.mxu0 0.0
    %1664 = vmatpush1.msra.mxu0 0.0
    %1665 = vmatprep.subr.mxu0 0.0
    %1666 = vmatpush1.msra.mxu0 0.0
    %1667 = vmatprep.subr.mxu0 0.0
    %1668 = vmatpush1.msra.mxu0 0.0
    %1669 = vmatprep.subr.mxu0 0.0
    %1670 = vmatpush1.msra.mxu0 0.0
    %1671 = vmatprep.subr.mxu0 0.0
    %1672 = vmatpush1.msra.mxu0 0.0
    %1673 = vmatprep.subr.mxu0 0.0
    %1674 = vmatpush1.msra.mxu0 0.0
    %1675 = vmatprep.subr.mxu0 0.0
    %1676 = vmatpush1.msra.mxu0 0.0
    %1677 = vmatprep.subr.mxu0 0.0
    %1678 = vmatpush1.msra.mxu0 0.0
    %1679 = vmatprep.subr.mxu0 0.0
    %1680 = vmatpush1.msra.mxu0 0.0
    %1681 = vmatprep.subr.mxu0 0.0
    %1682 = vmatpush1.msra.mxu0 0.0
    %1683 = vmatprep.subr.mxu0 0.0
    %1684 = vmatpush1.msra.mxu0 0.0
    %1685 = vmatprep.subr.mxu0 0.0
    %1686 = vmatpush1.msra.mxu0 0.0
    %1687 = vmatprep.subr.mxu0 0.0
    %1688 = vmatpush1.msra.mxu0 0.0
    %1689 = vmatprep.subr.mxu0 0.0
    %1690 = vmatpush1.msra.mxu0 0.0
    %1691 = vmatprep.subr.mxu0 0.0
    %1692 = vmatpush1.msra.mxu0 0.0
    %1693 = vmatprep.subr.mxu0 0.0
    %1694 = vmatpush1.msra.mxu0 0.0
    %1695 = vmatprep.subr.mxu0 0.0
    %1696 = vmatpush1.msra.mxu0 0.0
    %1697 = vmatprep.subr.mxu0 0.0
    %1698 = vmatpush1.msra.mxu0 0.0
    %1699 = vmatprep.subr.mxu0 0.0
    %1700 = vmatpush1.msra.mxu0 0.0
    %1701 = vmatprep.subr.mxu0 0.0
    %1702 = vmatpush1.msra.mxu0 0.0
    %1703 = vmatprep.subr.mxu0 0.0
    %1704 = vmatpush1.msra.mxu0 0.0
    %1705 = vmatprep.subr.mxu0 0.0
    %1706 = vmatpush1.msra.mxu0 0.0
    %1707 = vmatprep.subr.mxu0 0.0
    %1708 = vmatpush1.msra.mxu0 0.0
    %1709 = vmatprep.mubr.f32.mxu0 0.0
    %1710 = vmatmul.mubr.f32.gmra.mrb[0].mxu0 %v1643
    %v1711 = vpop.f32.mrb[0].mxu0
    %v1712 = vadd.f32 %v460, %v1711
    %v1713 = vpop.f32.mrb[0].mxu0
    %1714 = vdwg.mxu0
    %1716 = vrot.lane.b32.xlu0 %v1360, 64
    %v1717 = vpop.permute.xlu0 %1716
    %v1718 = vsel %vm245, %v1717, 0
    %1720 = vmatprep.subr.mxu0 0.0
    %1721 = vmatpush1.msra.mxu0 %v532
    %1722 = vmatprep.subr.mxu0 0.0
    %1723 = vmatpush1.msra.mxu0 %v533
    %1724 = vmatprep.subr.mxu0 0.0
    %1725 = vmatpush1.msra.mxu0 %v534
    %1726 = vmatprep.subr.mxu0 0.0
    %1727 = vmatpush1.msra.mxu0 %v535
    %1728 = vmatprep.subr.mxu0 0.0
    %1729 = vmatpush1.msra.mxu0 0.0
    %1730 = vmatprep.subr.mxu0 0.0
    %1731 = vmatpush1.msra.mxu0 0.0
    %1732 = vmatprep.subr.mxu0 0.0
    %1733 = vmatpush1.msra.mxu0 0.0
    %1734 = vmatprep.subr.mxu0 0.0
    %1735 = vmatpush1.msra.mxu0 0.0
    %1736 = vmatprep.subr.mxu0 0.0
    %1737 = vmatpush1.msra.mxu0 0.0
    %1738 = vmatprep.subr.mxu0 0.0
    %1739 = vmatpush1.msra.mxu0 0.0
    %1740 = vmatprep.subr.mxu0 0.0
    %1741 = vmatpush1.msra.mxu0 0.0
    %1742 = vmatprep.subr.mxu0 0.0
    %1743 = vmatpush1.msra.mxu0 0.0
    %1744 = vmatprep.subr.mxu0 0.0
    %1745 = vmatpush1.msra.mxu0 0.0
    %1746 = vmatprep.subr.mxu0 0.0
    %1747 = vmatpush1.msra.mxu0 0.0
    %1748 = vmatprep.subr.mxu0 0.0
    %1749 = vmatpush1.msra.mxu0 0.0
    %1750 = vmatprep.subr.mxu0 0.0
    %1751 = vmatpush1.msra.mxu0 0.0
    %1752 = vmatprep.subr.mxu0 0.0
    %1753 = vmatpush1.msra.mxu0 0.0
    %1754 = vmatprep.subr.mxu0 0.0
    %1755 = vmatpush1.msra.mxu0 0.0
    %1756 = vmatprep.subr.mxu0 0.0
    %1757 = vmatpush1.msra.mxu0 0.0
    %1758 = vmatprep.subr.mxu0 0.0
    %1759 = vmatpush1.msra.mxu0 0.0
    %1760 = vmatprep.subr.mxu0 0.0
    %1761 = vmatpush1.msra.mxu0 0.0
    %1762 = vmatprep.subr.mxu0 0.0
    %1763 = vmatpush1.msra.mxu0 0.0
    %1764 = vmatprep.subr.mxu0 0.0
    %1765 = vmatpush1.msra.mxu0 0.0
    %1766 = vmatprep.subr.mxu0 0.0
    %1767 = vmatpush1.msra.mxu0 0.0
    %1768 = vmatprep.subr.mxu0 0.0
    %1769 = vmatpush1.msra.mxu0 0.0
    %1770 = vmatprep.subr.mxu0 0.0
    %1771 = vmatpush1.msra.mxu0 0.0
    %1772 = vmatprep.subr.mxu0 0.0
    %1773 = vmatpush1.msra.mxu0 0.0
    %1774 = vmatprep.subr.mxu0 0.0
    %1775 = vmatpush1.msra.mxu0 0.0
    %1776 = vmatprep.subr.mxu0 0.0
    %1777 = vmatpush1.msra.mxu0 0.0
    %1778 = vmatprep.subr.mxu0 0.0
    %1779 = vmatpush1.msra.mxu0 0.0
    %1780 = vmatprep.subr.mxu0 0.0
    %1781 = vmatpush1.msra.mxu0 0.0
    %1782 = vmatprep.subr.mxu0 0.0
    %1783 = vmatpush1.msra.mxu0 0.0
    %1784 = vmatprep.mubr.f32.mxu0 0.0
    %1785 = vmatmul.mubr.f32.gmra.mrb[0].mxu0 %v1718
    %v1786 = vpop.f32.mrb[0].mxu0
    %v1787 = vadd.f32 0.0, %v1786
    %v1788 = vpop.f32.mrb[0].mxu0
    %1789 = vdwg.mxu0
    %v1790 = vadd.f32 %v1712, %v1787
    %v1791 = vtanh.pop %v1790
    %v1792 = vmul.f32 %v1791, %v92
    %v1793 = vadd.f32 %v1792, %v93
    %v1794 = vmul.f32 %v1793, %v1361
    %1796 = vrot.lane.b32.xlu0 %v1793, 32
    %v1797 = vpop.permute.xlu0 %1796
    %v1799 = vmul.f32 %v1793, %v1797
    %1801 = vrot.lane.b32.xlu0 %v1799, 32
    %v1802 = vpop.permute.xlu0 %1801
    %v1804 = vadd.f32 %v1794, %v1802
    %v1805 = vtanh.pop %v1804
    %1807 = vrot.lane.b32.xlu0 %v1805, 32
    %v1808 = vpop.permute.xlu0 %1807
    %v1810 = vmul.f32 %v1793, %v1808
    %v1811 = vsel %vm1185, %v1810, %v1360
    %v1812 = vsel %vm1185, %v1804, %v1361
    %v1813 = vsel %vm1185, %v1810, 0.0
    %1815 = vrot.lane.b32.xlu0 %v1362, 64
    %v1816 = vpop.permute.xlu0 %1815
    %v1817 = vsel %vm245, %v1816, 0
    %1819 = vmatprep.subr.mxu0 0.0
    %1820 = vmatpush1.msra.mxu0 %v907
    %1821 = vmatprep.subr.mxu0 0.0
    %1822 = vmatpush1.msra.mxu0 %v908
    %1823 = vmatprep.subr.mxu0 0.0
    %1824 = vmatpush1.msra.mxu0 %v909
    %1825 = vmatprep.subr.mxu0 0.0
    %1826 = vmatpush1.msra.mxu0 %v910
    %1827 = vmatprep.subr.mxu0 0.0
    %1828 = vmatpush1.msra.mxu0 0.0
    %1829 = vmatprep.subr.mxu0 0.0
    %1830 = vmatpush1.msra.mxu0 0.0
    %1831 = vmatprep.subr.mxu0 0.0
    %1832 = vmatpush1.msra.mxu0 0.0
    %1833 = vmatprep.subr.mxu0 0.0
    %1834 = vmatpush1.msra.mxu0 0.0
    %1835 = vmatprep.subr.mxu0 0.0
    %1836 = vmatpush1.msra.mxu0 0.0
    %1837 = vmatprep.subr.mxu0 0.0
    %1838 = vmatpush1.msra.mxu0 0.0
    %1839 = vmatprep.subr.mxu0 0.0
    %1840 = vmatpush1.msra.mxu0 0.0
    %1841 = vmatprep.subr.mxu0 0.0
    %1842 = vmatpush1.msra.mxu0 0.0
    %1843 = vmatprep.subr.mxu0 0.0
    %1844 = vmatpush1.msra.mxu0 0.0
    %1845 = vmatprep.subr.mxu0 0.0
    %1846 = vmatpush1.msra.mxu0 0.0
    %1847 = vmatprep.subr.mxu0 0.0
    %1848 = vmatpush1.msra.mxu0 0.0
    %1849 = vmatprep.subr.mxu0 0.0
    %1850 = vmatpush1.msra.mxu0 0.0
    %1851 = vmatprep.subr.mxu0 0.0
    %1852 = vmatpush1.msra.mxu0 0.0
    %1853 = vmatprep.subr.mxu0 0.0
    %1854 = vmatpush1.msra.mxu0 0.0
    %1855 = vmatprep.subr.mxu0 0.0
    %1856 = vmatpush1.msra.mxu0 0.0
    %1857 = vmatprep.subr.mxu0 0.0
    %1858 = vmatpush1.msra.mxu0 0.0
    %1859 = vmatprep.subr.mxu0 0.0
    %1860 = vmatpush1.msra.mxu0 0.0
    %1861 = vmatprep.subr.mxu0 0.0
    %1862 = vmatpush1.msra.mxu0 0.0
    %1863 = vmatprep.subr.mxu0 0.0
    %1864 = vmatpush1.msra.mxu0 0.0
    %1865 = vmatprep.subr.mxu0 0.0
    %1866 = vmatpush1.msra.mxu0 0.0
    %1867 = vmatprep.subr.mxu0 0.0
    %1868 = vmatpush1.msra.mxu0 0.0
    %1869 = vmatprep.subr.mxu0 0.0
    %1870 = vmatpush1.msra.mxu0 0.0
    %1871 = vmatprep.subr.mxu0 0.0
    %1872 = vmatpush1.msra.mxu0 0.0
    %1873 = vmatprep.subr.mxu0 0.0
    %1874 = vmatpush1.msra.mxu0 0.0
    %1875 = vmatprep.subr.mxu0 0.0
    %1876 = vmatpush1.msra.mxu0 0.0
    %1877 = vmatprep.subr.mxu0 0.0
    %1878 = vmatpush1.msra.mxu0 0.0
    %1879 = vmatprep.subr.mxu0 0.0
    %1880 = vmatpush1.msra.mxu0 0.0
    %1881 = vmatprep.subr.mxu0 0.0
    %1882 = vmatpush1.msra.mxu0 0.0
    %1883 = vmatprep.mubr.f32.mxu0 0.0
    %1884 = vmatmul.mubr.f32.gmra.mrb[0].mxu0 %v1817
    %v1885 = vpop.f32.mrb[0].mxu0
    %v1886 = vadd.f32 %v916, %v1885
    %v1887 = vpop.f32.mrb[0].mxu0
    %1888 = vdwg.mxu0
    %1890 = vrot.lane.b32.xlu0 %v1534, 64
    %v1891 = vpop.permute.xlu0 %1890
    %v1892 = vsel %vm245, %v1891, 0
    %1894 = vmatprep.subr.mxu0 0.0
    %1895 = vmatpush1.msra.mxu0 %v988
    %1896 = vmatprep.subr.mxu0 0.0
    %1897 = vmatpush1.msra.mxu0 %v989
    %1898 = vmatprep.subr.mxu0 0.0
    %1899 = vmatpush1.msra.mxu0 %v990
    %1900 = vmatprep.subr.mxu0 0.0
    %1901 = vmatpush1.msra.mxu0 %v991
    %1902 = vmatprep.subr.mxu0 0.0
    %1903 = vmatpush1.msra.mxu0 0.0
    %1904 = vmatprep.subr.mxu0 0.0
    %1905 = vmatpush1.msra.mxu0 0.0
    %1906 = vmatprep.subr.mxu0 0.0
    %1907 = vmatpush1.msra.mxu0 0.0
    %1908 = vmatprep.subr.mxu0 0.0
    %1909 = vmatpush1.msra.mxu0 0.0
    %1910 = vmatprep.subr.mxu0 0.0
    %1911 = vmatpush1.msra.mxu0 0.0
    %1912 = vmatprep.subr.mxu0 0.0
    %1913 = vmatpush1.msra.mxu0 0.0
    %1914 = vmatprep.subr.mxu0 0.0
    %1915 = vmatpush1.msra.mxu0 0.0
    %1916 = vmatprep.subr.mxu0 0.0
    %1917 = vmatpush1.msra.mxu0 0.0
    %1918 = vmatprep.subr.mxu0 0.0
    %1919 = vmatpush1.msra.mxu0 0.0
    %1920 = vmatprep.subr.mxu0 0.0
    %1921 = vmatpush1.msra.mxu0 0.0
    %1922 = vmatprep.subr.mxu0 0.0
    %1923 = vmatpush1.msra.mxu0 0.0
    %1924 = vmatprep.subr.mxu0 0.0
    %1925 = vmatpush1.msra.mxu0 0.0
    %1926 = vmatprep.subr.mxu0 0.0
    %1927 = vmatpush1.msra.mxu0 0.0
    %1928 = vmatprep.subr.mxu0 0.0
    %1929 = vmatpush1.msra.mxu0 0.0
    %1930 = vmatprep.subr.mxu0 0.0
    %1931 = vmatpush1.msra.mxu0 0.0
    %1932 = vmatprep.subr.mxu0 0.0
    %1933 = vmatpush1.msra.mxu0 0.0
    %1934 = vmatprep.subr.mxu0 0.0
    %1935 = vmatpush1.msra.mxu0 0.0
    %1936 = vmatprep.subr.mxu0 0.0
    %1937 = vmatpush1.msra.mxu0 0.0
    %1938 = vmatprep.subr.mxu0 0.0
    %1939 = vmatpush1.msra.mxu0 0.0
    %1940 = vmatprep.subr.mxu0 0.0
    %1941 = vmatpush1.msra.mxu0 0.0
    %1942 = vmatprep.subr.mxu0 0.0
    %1943 = vmatpush1.msra.mxu0 0.0
    %1944 = vmatprep.subr.mxu0 0.0
    %1945 = vmatpush1.msra.mxu0 0.0
    %1946 = vmatprep.subr.mxu0 0.0
    %1947 = vmatpush1.msra.mxu0 0.0
    %1948 = vmatprep.subr.mxu0 0.0
    %1949 = vmatpush1.msra.mxu0 0.0
    %1950 = vmatprep.subr.mxu0 0.0
    %1951 = vmatpush1.msra.mxu0 0.0
    %1952 = vmatprep.subr.mxu0 0.0
    %1953 = vmatpush1.msra.mxu0 0.0
    %1954 = vmatprep.subr.mxu0 0.0
    %1955 = vmatpush1.msra.mxu0 0.0
    %1956 = vmatprep.subr.mxu0 0.0
    %1957 = vmatpush1.msra.mxu0 0.0
    %1958 = vmatprep.mubr.f32.mxu0 0.0
    %1959 = vmatmul.mubr.f32.gmra.mrb[0].mxu0 %v1892
    %v1960 = vpop.f32.mrb[0].mxu0
    %v1961 = vadd.f32 0.0, %v1960
    %v1962 = vpop.f32.mrb[0].mxu0
    %1963 = vdwg.mxu0
    %v1964 = vadd.f32 %v1886, %v1961
    %v1965 = vtanh.pop %v1964
    %v1966 = vmul.f32 %v1965, %v92
    %v1967 = vadd.f32 %v1966, %v93
    %v1968 = vmul.f32 %v1967, %v1535
    %1970 = vrot.lane.b32.xlu0 %v1967, 32
    %v1971 = vpop.permute.xlu0 %1970
    %v1973 = vmul.f32 %v1967, %v1971
    %1975 = vrot.lane.b32.xlu0 %v1973, 32
    %v1976 = vpop.permute.xlu0 %1975
    %v1978 = vadd.f32 %v1968, %v1976
    %v1979 = vtanh.pop %v1978
    %1981 = vrot.lane.b32.xlu0 %v1979, 32
    %v1982 = vpop.permute.xlu0 %1981
    %v1984 = vmul.f32 %v1967, %v1982
    %v1985 = vsel %vm729, %v1984, %v1534
    %v1986 = vsel %vm729, %v1978, %v1535
    %1988 = vrot.lane.b32.xlu0 %v1637, 64
    %v1989 = vpop.permute.xlu0 %1988
    %v1990 = vsel %vm245, %v1989, 0
    %1992 = vmatprep.subr.mxu0 0.0
    %1993 = vmatpush1.msra.mxu0 %v241
    %1994 = vmatprep.subr.mxu0 0.0
    %1995 = vmatpush1.msra.mxu0 %v242
    %1996 = vmatprep.subr.mxu0 0.0
    %1997 = vmatpush1.msra.mxu0 %v243
    %1998 = vmatprep.subr.mxu0 0.0
    %1999 = vmatpush1.msra.mxu0 %v244
    %2000 = vmatprep.subr.mxu0 0.0
    %2001 = vmatpush1.msra.mxu0 0.0
    %2002 = vmatprep.subr.mxu0 0.0
    %2003 = vmatpush1.msra.mxu0 0.0
    %2004 = vmatprep.subr.mxu0 0.0
    %2005 = vmatpush1.msra.mxu0 0.0
    %2006 = vmatprep.subr.mxu0 0.0
    %2007 = vmatpush1.msra.mxu0 0.0
    %2008 = vmatprep.subr.mxu0 0.0
    %2009 = vmatpush1.msra.mxu0 0.0
    %2010 = vmatprep.subr.mxu0 0.0
    %2011 = vmatpush1.msra.mxu0 0.0
    %2012 = vmatprep.subr.mxu0 0.0
    %2013 = vmatpush1.msra.mxu0 0.0
    %2014 = vmatprep.subr.mxu0 0.0
    %2015 = vmatpush1.msra.mxu0 0.0
    %2016 = vmatprep.subr.mxu0 0.0
    %2017 = vmatpush1.msra.mxu0 0.0
    %2018 = vmatprep.subr.mxu0 0.0
    %2019 = vmatpush1.msra.mxu0 0.0
    %2020 = vmatprep.subr.mxu0 0.0
    %2021 = vmatpush1.msra.mxu0 0.0
    %2022 = vmatprep.subr.mxu0 0.0
    %2023 = vmatpush1.msra.mxu0 0.0
    %2024 = vmatprep.subr.mxu0 0.0
    %2025 = vmatpush1.msra.mxu0 0.0
    %2026 = vmatprep.subr.mxu0 0.0
    %2027 = vmatpush1.msra.mxu0 0.0
    %2028 = vmatprep.subr.mxu0 0.0
    %2029 = vmatpush1.msra.mxu0 0.0
    %2030 = vmatprep.subr.mxu0 0.0
    %2031 = vmatpush1.msra.mxu0 0.0
    %2032 = vmatprep.subr.mxu0 0.0
    %2033 = vmatpush1.msra.mxu0 0.0
    %2034 = vmatprep.subr.mxu0 0.0
    %2035 = vmatpush1.msra.mxu0 0.0
    %2036 = vmatprep.subr.mxu0 0.0
    %2037 = vmatpush1.msra.mxu0 0.0
    %2038 = vmatprep.subr.mxu0 0.0
    %2039 = vmatpush1.msra.mxu0 0.0
    %2040 = vmatprep.subr.mxu0 0.0
    %2041 = vmatpush1.msra.mxu0 0.0
    %2042 = vmatprep.subr.mxu0 0.0
    %2043 = vmatpush1.msra.mxu0 0.0
    %2044 = vmatprep.subr.mxu0 0.0
    %2045 = vmatpush1.msra.mxu0 0.0
    %2046 = vmatprep.subr.mxu0 0.0
    %2047 = vmatpush1.msra.mxu0 0.0
    %2048 = vmatprep.subr.mxu0 0.0
    %2049 = vmatpush1.msra.mxu0 0.0
    %2050 = vmatprep.subr.mxu0 0.0
    %2051 = vmatpush1.msra.mxu0 0.0
    %2052 = vmatprep.subr.mxu0 0.0
    %2053 = vmatpush1.msra.mxu0 0.0
    %2054 = vmatprep.subr.mxu0 0.0
    %2055 = vmatpush1.msra.mxu0 0.0
    %2056 = vmatprep.mubr.f32.mxu0 0.0
    %2057 = vmatmul.mubr.f32.gmra.mrb[0].mxu0 %v1990
    %v2058 = vpop.f32.mrb[0].mxu0
    %v2059 = vadd.f32 0.0, %v2058
    %v2060 = vpop.f32.mrb[0].mxu0
    %2061 = vdwg.mxu0
    %v2062 = vadd.f32 %v228, %v2059
    %v2063 = vtanh.pop %v2062
    %v2064 = vmul.f32 %v2063, %v92
    %v2065 = vadd.f32 %v2064, %v93
    %v2066 = vmul.f32 %v2065, %v1638
    %2068 = vrot.lane.b32.xlu0 %v2065, 32
    %v2069 = vpop.permute.xlu0 %2068
    %v2071 = vmul.f32 %v2065, %v2069
    %2073 = vrot.lane.b32.xlu0 %v2071, 32
    %v2074 = vpop.permute.xlu0 %2073
    %v2076 = vadd.f32 %v2066, %v2074
    %v2077 = vtanh.pop %v2076
    %2079 = vrot.lane.b32.xlu0 %v2077, 32
    %v2080 = vpop.permute.xlu0 %2079
    %v2082 = vmul.f32 %v2065, %v2080
    %v2083 = vsel %vm86, 1, 0
    %2084 = vset.pattern.permute.xlu0 0
    %2085 = vperm.xlu0 %2084, %v2083
    %v2086 = vpop.permute.xlu0 %2085
    %vm2087 = vcmp.eq.s32.totalorder %v2086, 1
    %v2088 = vsel %vm2087, %v2082, %v1637
    %v2089 = vsel %vm2087, %v2076, %v1638
    %v2090 = vsel %vm2087, %v2082, 0.0
    %2092 = vrot.lane.b32.xlu0 %v1639, 64
    %v2093 = vpop.permute.xlu0 %2092
    %v2094 = vsel %vm245, %v2093, 0
    %2096 = vmatprep.subr.mxu0 0.0
    %2097 = vmatpush1.msra.mxu0 %v451
    %2098 = vmatprep.subr.mxu0 0.0
    %2099 = vmatpush1.msra.mxu0 %v452
    %2100 = vmatprep.subr.mxu0 0.0
    %2101 = vmatpush1.msra.mxu0 %v453
    %2102 = vmatprep.subr.mxu0 0.0
    %2103 = vmatpush1.msra.mxu0 %v454
    %2104 = vmatprep.subr.mxu0 0.0
    %2105 = vmatpush1.msra.mxu0 0.0
    %2106 = vmatprep.subr.mxu0 0.0
    %2107 = vmatpush1.msra.mxu0 0.0
    %2108 = vmatprep.subr.mxu0 0.0
    %2109 = vmatpush1.msra.mxu0 0.0
    %2110 = vmatprep.subr.mxu0 0.0
    %2111 = vmatpush1.msra.mxu0 0.0
    %2112 = vmatprep.subr.mxu0 0.0
    %2113 = vmatpush1.msra.mxu0 0.0
    %2114 = vmatprep.subr.mxu0 0.0
    %2115 = vmatpush1.msra.mxu0 0.0
    %2116 = vmatprep.subr.mxu0 0.0
    %2117 = vmatpush1.msra.mxu0 0.0
    %2118 = vmatprep.subr.mxu0 0.0
    %2119 = vmatpush1.msra.mxu0 0.0
    %2120 = vmatprep.subr.mxu0 0.0
    %2121 = vmatpush1.msra.mxu0 0.0
    %2122 = vmatprep.subr.mxu0 0.0
    %2123 = vmatpush1.msra.mxu0 0.0
    %2124 = vmatprep.subr.mxu0 0.0
    %2125 = vmatpush1.msra.mxu0 0.0
    %2126 = vmatprep.subr.mxu0 0.0
    %2127 = vmatpush1.msra.mxu0 0.0
    %2128 = vmatprep.subr.mxu0 0.0
    %2129 = vmatpush1.msra.mxu0 0.0
    %2130 = vmatprep.subr.mxu0 0.0
    %2131 = vmatpush1.msra.mxu0 0.0
    %2132 = vmatprep.subr.mxu0 0.0
    %2133 = vmatpush1.msra.mxu0 0.0
    %2134 = vmatprep.subr.mxu0 0.0
    %2135 = vmatpush1.msra.mxu0 0.0
    %2136 = vmatprep.subr.mxu0 0.0
    %2137 = vmatpush1.msra.mxu0 0.0
    %2138 = vmatprep.subr.mxu0 0.0
    %2139 = vmatpush1.msra.mxu0 0.0
    %2140 = vmatprep.subr.mxu0 0.0
    %2141 = vmatpush1.msra.mxu0 0.0
    %2142 = vmatprep.subr.mxu0 0.0
    %2143 = vmatpush1.msra.mxu0 0.0
    %2144 = vmatprep.subr.mxu0 0.0
    %2145 = vmatpush1.msra.mxu0 0.0
    %2146 = vmatprep.subr.mxu0 0.0
    %2147 = vmatpush1.msra.mxu0 0.0
    %2148 = vmatprep.subr.mxu0 0.0
    %2149 = vmatpush1.msra.mxu0 0.0
    %2150 = vmatprep.subr.mxu0 0.0
    %2151 = vmatpush1.msra.mxu0 0.0
    %2152 = vmatprep.subr.mxu0 0.0
    %2153 = vmatpush1.msra.mxu0 0.0
    %2154 = vmatprep.subr.mxu0 0.0
    %2155 = vmatpush1.msra.mxu0 0.0
    %2156 = vmatprep.subr.mxu0 0.0
    %2157 = vmatpush1.msra.mxu0 0.0
    %2158 = vmatprep.subr.mxu0 0.0
    %2159 = vmatpush1.msra.mxu0 0.0
    %2160 = vmatprep.mubr.f32.mxu0 0.0
    %2161 = vmatmul.mubr.f32.gmra.mrb[0].mxu0 %v2094
    %v2162 = vpop.f32.mrb[0].mxu0
    %v2163 = vadd.f32 %v460, %v2162
    %v2164 = vpop.f32.mrb[0].mxu0
    %2165 = vdwg.mxu0
    %2167 = vrot.lane.b32.xlu0 %v1811, 64
    %v2168 = vpop.permute.xlu0 %2167
    %v2169 = vsel %vm245, %v2168, 0
    %2171 = vmatprep.subr.mxu0 0.0
    %2172 = vmatpush1.msra.mxu0 %v532
    %2173 = vmatprep.subr.mxu0 0.0
    %2174 = vmatpush1.msra.mxu0 %v533
    %2175 = vmatprep.subr.mxu0 0.0
    %2176 = vmatpush1.msra.mxu0 %v534
    %2177 = vmatprep.subr.mxu0 0.0
    %2178 = vmatpush1.msra.mxu0 %v535
    %2179 = vmatprep.subr.mxu0 0.0
    %2180 = vmatpush1.msra.mxu0 0.0
    %2181 = vmatprep.subr.mxu0 0.0
    %2182 = vmatpush1.msra.mxu0 0.0
    %2183 = vmatprep.subr.mxu0 0.0
    %2184 = vmatpush1.msra.mxu0 0.0
    %2185 = vmatprep.subr.mxu0 0.0
    %2186 = vmatpush1.msra.mxu0 0.0
    %2187 = vmatprep.subr.mxu0 0.0
    %2188 = vmatpush1.msra.mxu0 0.0
    %2189 = vmatprep.subr.mxu0 0.0
    %2190 = vmatpush1.msra.mxu0 0.0
    %2191 = vmatprep.subr.mxu0 0.0
    %2192 = vmatpush1.msra.mxu0 0.0
    %2193 = vmatprep.subr.mxu0 0.0
    %2194 = vmatpush1.msra.mxu0 0.0
    %2195 = vmatprep.subr.mxu0 0.0
    %2196 = vmatpush1.msra.mxu0 0.0
    %2197 = vmatprep.subr.mxu0 0.0
    %2198 = vmatpush1.msra.mxu0 0.0
    %2199 = vmatprep.subr.mxu0 0.0
    %2200 = vmatpush1.msra.mxu0 0.0
    %2201 = vmatprep.subr.mxu0 0.0
    %2202 = vmatpush1.msra.mxu0 0.0
    %2203 = vmatprep.subr.mxu0 0.0
    %2204 = vmatpush1.msra.mxu0 0.0
    %2205 = vmatprep.subr.mxu0 0.0
    %2206 = vmatpush1.msra.mxu0 0.0
    %2207 = vmatprep.subr.mxu0 0.0
    %2208 = vmatpush1.msra.mxu0 0.0
    %2209 = vmatprep.subr.mxu0 0.0
    %2210 = vmatpush1.msra.mxu0 0.0
    %2211 = vmatprep.subr.mxu0 0.0
    %2212 = vmatpush1.msra.mxu0 0.0
    %2213 = vmatprep.subr.mxu0 0.0
    %2214 = vmatpush1.msra.mxu0 0.0
    %2215 = vmatprep.subr.mxu0 0.0
    %2216 = vmatpush1.msra.mxu0 0.0
    %2217 = vmatprep.subr.mxu0 0.0
    %2218 = vmatpush1.msra.mxu0 0.0
    %2219 = vmatprep.subr.mxu0 0.0
    %2220 = vmatpush1.msra.mxu0 0.0
    %2221 = vmatprep.subr.mxu0 0.0
    %2222 = vmatpush1.msra.mxu0 0.0
    %2223 = vmatprep.subr.mxu0 0.0
    %2224 = vmatpush1.msra.mxu0 0.0
    %2225 = vmatprep.subr.mxu0 0.0
    %2226 = vmatpush1.msra.mxu0 0.0
    %2227 = vmatprep.subr.mxu0 0.0
    %2228 = vmatpush1.msra.mxu0 0.0
    %2229 = vmatprep.subr.mxu0 0.0
    %2230 = vmatpush1.msra.mxu0 0.0
    %2231 = vmatprep.subr.mxu0 0.0
    %2232 = vmatpush1.msra.mxu0 0.0
    %2233 = vmatprep.subr.mxu0 0.0
    %2234 = vmatpush1.msra.mxu0 0.0
    %2235 = vmatprep.mubr.f32.mxu0 0.0
    %2236 = vmatmul.mubr.f32.gmra.mrb[0].mxu0 %v2169
    %v2237 = vpop.f32.mrb[0].mxu0
    %v2238 = vadd.f32 0.0, %v2237
    %v2239 = vpop.f32.mrb[0].mxu0
    %2240 = vdwg.mxu0
    %v2241 = vadd.f32 %v2163, %v2238
    %v2242 = vtanh.pop %v2241
    %v2243 = vmul.f32 %v2242, %v92
    %v2244 = vadd.f32 %v2243, %v93
    %v2245 = vmul.f32 %v2244, %v1812
    %2247 = vrot.lane.b32.xlu0 %v2244, 32
    %v2248 = vpop.permute.xlu0 %2247
    %v2250 = vmul.f32 %v2244, %v2248
    %2252 = vrot.lane.b32.xlu0 %v2250, 32
    %v2253 = vpop.permute.xlu0 %2252
    %v2255 = vadd.f32 %v2245, %v2253
    %v2256 = vtanh.pop %v2255
    %2258 = vrot.lane.b32.xlu0 %v2256, 32
    %v2259 = vpop.permute.xlu0 %2258
    %v2261 = vmul.f32 %v2244, %v2259
    %v2262 = vsel %vm1636, %v2261, %v1811
    %v2263 = vsel %vm1636, %v2255, %v1812
    %v2264 = vsel %vm1636, %v2261, 0.0
    %2266 = vrot.lane.b32.xlu0 %v1813, 64
    %v2267 = vpop.permute.xlu0 %2266
    %v2268 = vsel %vm245, %v2267, 0
    %2270 = vmatprep.subr.mxu0 0.0
    %2271 = vmatpush1.msra.mxu0 %v907
    %2272 = vmatprep.subr.mxu0 0.0
    %2273 = vmatpush1.msra.mxu0 %v908
    %2274 = vmatprep.subr.mxu0 0.0
    %2275 = vmatpush1.msra.mxu0 %v909
    %2276 = vmatprep.subr.mxu0 0.0
    %2277 = vmatpush1.msra.mxu0 %v910
    %2278 = vmatprep.subr.mxu0 0.0
    %2279 = vmatpush1.msra.mxu0 0.0
    %2280 = vmatprep.subr.mxu0 0.0
    %2281 = vmatpush1.msra.mxu0 0.0
    %2282 = vmatprep.subr.mxu0 0.0
    %2283 = vmatpush1.msra.mxu0 0.0
    %2284 = vmatprep.subr.mxu0 0.0
    %2285 = vmatpush1.msra.mxu0 0.0
    %2286 = vmatprep.subr.mxu0 0.0
    %2287 = vmatpush1.msra.mxu0 0.0
    %2288 = vmatprep.subr.mxu0 0.0
    %2289 = vmatpush1.msra.mxu0 0.0
    %2290 = vmatprep.subr.mxu0 0.0
    %2291 = vmatpush1.msra.mxu0 0.0
    %2292 = vmatprep.subr.mxu0 0.0
    %2293 = vmatpush1.msra.mxu0 0.0
    %2294 = vmatprep.subr.mxu0 0.0
    %2295 = vmatpush1.msra.mxu0 0.0
    %2296 = vmatprep.subr.mxu0 0.0
    %2297 = vmatpush1.msra.mxu0 0.0
    %2298 = vmatprep.subr.mxu0 0.0
    %2299 = vmatpush1.msra.mxu0 0.0
    %2300 = vmatprep.subr.mxu0 0.0
    %2301 = vmatpush1.msra.mxu0 0.0
    %2302 = vmatprep.subr.mxu0 0.0
    %2303 = vmatpush1.msra.mxu0 0.0
    %2304 = vmatprep.subr.mxu0 0.0
    %2305 = vmatpush1.msra.mxu0 0.0
    %2306 = vmatprep.subr.mxu0 0.0
    %2307 = vmatpush1.msra.mxu0 0.0
    %2308 = vmatprep.subr.mxu0 0.0
    %2309 = vmatpush1.msra.mxu0 0.0
    %2310 = vmatprep.subr.mxu0 0.0
    %2311 = vmatpush1.msra.mxu0 0.0
    %2312 = vmatprep.subr.mxu0 0.0
    %2313 = vmatpush1.msra.mxu0 0.0
    %2314 = vmatprep.subr.mxu0 0.0
    %2315 = vmatpush1.msra.mxu0 0.0
    %2316 = vmatprep.subr.mxu0 0.0
    %2317 = vmatpush1.msra.mxu0 0.0
    %2318 = vmatprep.subr.mxu0 0.0
    %2319 = vmatpush1.msra.mxu0 0.0
    %2320 = vmatprep.subr.mxu0 0.0
    %2321 = vmatpush1.msra.mxu0 0.0
    %2322 = vmatprep.subr.mxu0 0.0
    %2323 = vmatpush1.msra.mxu0 0.0
    %2324 = vmatprep.subr.mxu0 0.0
    %2325 = vmatpush1.msra.mxu0 0.0
    %2326 = vmatprep.subr.mxu0 0.0
    %2327 = vmatpush1.msra.mxu0 0.0
    %2328 = vmatprep.subr.mxu0 0.0
    %2329 = vmatpush1.msra.mxu0 0.0
    %2330 = vmatprep.subr.mxu0 0.0
    %2331 = vmatpush1.msra.mxu0 0.0
    %2332 = vmatprep.subr.mxu0 0.0
    %2333 = vmatpush1.msra.mxu0 0.0
    %2334 = vmatprep.mubr.f32.mxu0 0.0
    %2335 = vmatmul.mubr.f32.gmra.mrb[0].mxu0 %v2268
    %v2336 = vpop.f32.mrb[0].mxu0
    %v2337 = vadd.f32 %v916, %v2336
    %v2338 = vpop.f32.mrb[0].mxu0
    %2339 = vdwg.mxu0
    %2341 = vrot.lane.b32.xlu0 %v1985, 64
    %v2342 = vpop.permute.xlu0 %2341
    %v2343 = vsel %vm245, %v2342, 0
    %2345 = vmatprep.subr.mxu0 0.0
    %2346 = vmatpush1.msra.mxu0 %v988
    %2347 = vmatprep.subr.mxu0 0.0
    %2348 = vmatpush1.msra.mxu0 %v989
    %2349 = vmatprep.subr.mxu0 0.0
    %2350 = vmatpush1.msra.mxu0 %v990
    %2351 = vmatprep.subr.mxu0 0.0
    %2352 = vmatpush1.msra.mxu0 %v991
    %2353 = vmatprep.subr.mxu0 0.0
    %2354 = vmatpush1.msra.mxu0 0.0
    %2355 = vmatprep.subr.mxu0 0.0
    %2356 = vmatpush1.msra.mxu0 0.0
    %2357 = vmatprep.subr.mxu0 0.0
    %2358 = vmatpush1.msra.mxu0 0.0
    %2359 = vmatprep.subr.mxu0 0.0
    %2360 = vmatpush1.msra.mxu0 0.0
    %2361 = vmatprep.subr.mxu0 0.0
    %2362 = vmatpush1.msra.mxu0 0.0
    %2363 = vmatprep.subr.mxu0 0.0
    %2364 = vmatpush1.msra.mxu0 0.0
    %2365 = vmatprep.subr.mxu0 0.0
    %2366 = vmatpush1.msra.mxu0 0.0
    %2367 = vmatprep.subr.mxu0 0.0
    %2368 = vmatpush1.msra.mxu0 0.0
    %2369 = vmatprep.subr.mxu0 0.0
    %2370 = vmatpush1.msra.mxu0 0.0
    %2371 = vmatprep.subr.mxu0 0.0
    %2372 = vmatpush1.msra.mxu0 0.0
    %2373 = vmatprep.subr.mxu0 0.0
    %2374 = vmatpush1.msra.mxu0 0.0
    %2375 = vmatprep.subr.mxu0 0.0
    %2376 = vmatpush1.msra.mxu0 0.0
    %2377 = vmatprep.subr.mxu0 0.0
    %2378 = vmatpush1.msra.mxu0 0.0
    %2379 = vmatprep.subr.mxu0 0.0
    %2380 = vmatpush1.msra.mxu0 0.0
    %2381 = vmatprep.subr.mxu0 0.0
    %2382 = vmatpush1.msra.mxu0 0.0
    %2383 = vmatprep.subr.mxu0 0.0
    %2384 = vmatpush1.msra.mxu0 0.0
    %2385 = vmatprep.subr.mxu0 0.0
    %2386 = vmatpush1.msra.mxu0 0.0
    %2387 = vmatprep.subr.mxu0 0.0
    %2388 = vmatpush1.msra.mxu0 0.0
    %2389 = vmatprep.subr.mxu0 0.0
    %2390 = vmatpush1.msra.mxu0 0.0
    %2391 = vmatprep.subr.mxu0 0.0
    %2392 = vmatpush1.msra.mxu0 0.0
    %2393 = vmatprep.subr.mxu0 0.0
    %2394 = vmatpush1.msra.mxu0 0.0
    %2395 = vmatprep.subr.mxu0 0.0
    %2396 = vmatpush1.msra.mxu0 0.0
    %2397 = vmatprep.subr.mxu0 0.0
    %2398 = vmatpush1.msra.mxu0 0.0
    %2399 = vmatprep.subr.mxu0 0.0
    %2400 = vmatpush1.msra.mxu0 0.0
    %2401 = vmatprep.subr.mxu0 0.0
    %2402 = vmatpush1.msra.mxu0 0.0
    %2403 = vmatprep.subr.mxu0 0.0
    %2404 = vmatpush1.msra.mxu0 0.0
    %2405 = vmatprep.subr.mxu0 0.0
    %2406 = vmatpush1.msra.mxu0 0.0
    %2407 = vmatprep.subr.mxu0 0.0
    %2408 = vmatpush1.msra.mxu0 0.0
    %2409 = vmatprep.mubr.f32.mxu0 0.0
    %2410 = vmatmul.mubr.f32.gmra.mrb[0].mxu0 %v2343
    %v2411 = vpop.f32.mrb[0].mxu0
    %v2412 = vadd.f32 0.0, %v2411
    %v2413 = vpop.f32.mrb[0].mxu0
    %2414 = vdwg.mxu0
    %v2415 = vadd.f32 %v2337, %v2412
    %v2416 = vtanh.pop %v2415
    %v2417 = vmul.f32 %v2416, %v92
    %v2418 = vadd.f32 %v2417, %v93
    %v2419 = vmul.f32 %v2418, %v1986
    %2421 = vrot.lane.b32.xlu0 %v2418, 32
    %v2422 = vpop.permute.xlu0 %2421
    %v2424 = vmul.f32 %v2418, %v2422
    %2426 = vrot.lane.b32.xlu0 %v2424, 32
    %v2427 = vpop.permute.xlu0 %2426
    %v2429 = vadd.f32 %v2419, %v2427
    %v2430 = vtanh.pop %v2429
    %2432 = vrot.lane.b32.xlu0 %v2430, 32
    %v2433 = vpop.permute.xlu0 %2432
    %v2435 = vmul.f32 %v2418, %v2433
    %v2436 = vsel %vm1185, %v2435, %v1985
    %v2437 = vsel %vm1185, %v2429, %v1986
    %2439 = vrot.lane.b32.xlu0 %v2088, 64
    %v2440 = vpop.permute.xlu0 %2439
    %v2441 = vsel %vm245, %v2440, 0
    %2443 = vmatprep.subr.mxu0 0.0
    %2444 = vmatpush1.msra.mxu0 %v241
    %2445 = vmatprep.subr.mxu0 0.0
    %2446 = vmatpush1.msra.mxu0 %v242
    %2447 = vmatprep.subr.mxu0 0.0
    %2448 = vmatpush1.msra.mxu0 %v243
    %2449 = vmatprep.subr.mxu0 0.0
    %2450 = vmatpush1.msra.mxu0 %v244
    %2451 = vmatprep.subr.mxu0 0.0
    %2452 = vmatpush1.msra.mxu0 0.0
    %2453 = vmatprep.subr.mxu0 0.0
    %2454 = vmatpush1.msra.mxu0 0.0
    %2455 = vmatprep.subr.mxu0 0.0
    %2456 = vmatpush1.msra.mxu0 0.0
    %2457 = vmatprep.subr.mxu0 0.0
    %2458 = vmatpush1.msra.mxu0 0.0
    %2459 = vmatprep.subr.mxu0 0.0
    %2460 = vmatpush1.msra.mxu0 0.0
    %2461 = vmatprep.subr.mxu0 0.0
    %2462 = vmatpush1.msra.mxu0 0.0
    %2463 = vmatprep.subr.mxu0 0.0
    %2464 = vmatpush1.msra.mxu0 0.0
    %2465 = vmatprep.subr.mxu0 0.0
    %2466 = vmatpush1.msra.mxu0 0.0
    %2467 = vmatprep.subr.mxu0 0.0
    %2468 = vmatpush1.msra.mxu0 0.0
    %2469 = vmatprep.subr.mxu0 0.0
    %2470 = vmatpush1.msra.mxu0 0.0
    %2471 = vmatprep.subr.mxu0 0.0
    %2472 = vmatpush1.msra.mxu0 0.0
    %2473 = vmatprep.subr.mxu0 0.0
    %2474 = vmatpush1.msra.mxu0 0.0
    %2475 = vmatprep.subr.mxu0 0.0
    %2476 = vmatpush1.msra.mxu0 0.0
    %2477 = vmatprep.subr.mxu0 0.0
    %2478 = vmatpush1.msra.mxu0 0.0
    %2479 = vmatprep.subr.mxu0 0.0
    %2480 = vmatpush1.msra.mxu0 0.0
    %2481 = vmatprep.subr.mxu0 0.0
    %2482 = vmatpush1.msra.mxu0 0.0
    %2483 = vmatprep.subr.mxu0 0.0
    %2484 = vmatpush1.msra.mxu0 0.0
    %2485 = vmatprep.subr.mxu0 0.0
    %2486 = vmatpush1.msra.mxu0 0.0
    %2487 = vmatprep.subr.mxu0 0.0
    %2488 = vmatpush1.msra.mxu0 0.0
    %2489 = vmatprep.subr.mxu0 0.0
    %2490 = vmatpush1.msra.mxu0 0.0
    %2491 = vmatprep.subr.mxu0 0.0
    %2492 = vmatpush1.msra.mxu0 0.0
    %2493 = vmatprep.subr.mxu0 0.0
    %2494 = vmatpush1.msra.mxu0 0.0
    %2495 = vmatprep.subr.mxu0 0.0
    %2496 = vmatpush1.msra.mxu0 0.0
    %2497 = vmatprep.subr.mxu0 0.0
    %2498 = vmatpush1.msra.mxu0 0.0
    %2499 = vmatprep.subr.mxu0 0.0
    %2500 = vmatpush1.msra.mxu0 0.0
    %2501 = vmatprep.subr.mxu0 0.0
    %2502 = vmatpush1.msra.mxu0 0.0
    %2503 = vmatprep.subr.mxu0 0.0
    %2504 = vmatpush1.msra.mxu0 0.0
    %2505 = vmatprep.subr.mxu0 0.0
    %2506 = vmatpush1.msra.mxu0 0.0
    %2507 = vmatprep.mubr.f32.mxu0 0.0
    %2508 = vmatmul.mubr.f32.gmra.mrb[0].mxu0 %v2441
    %v2509 = vpop.f32.mrb[0].mxu0
    %v2510 = vadd.f32 0.0, %v2509
    %v2511 = vpop.f32.mrb[0].mxu0
    %2512 = vdwg.mxu0
    %v2513 = vadd.f32 %v233, %v2510
    %v2514 = vtanh.pop %v2513
    %v2515 = vmul.f32 %v2514, %v92
    %v2516 = vadd.f32 %v2515, %v93
    %v2517 = vmul.f32 %v2516, %v2089
    %2519 = vrot.lane.b32.xlu0 %v2516, 32
    %v2520 = vpop.permute.xlu0 %2519
    %v2522 = vmul.f32 %v2516, %v2520
    %2524 = vrot.lane.b32.xlu0 %v2522, 32
    %v2525 = vpop.permute.xlu0 %2524
    %v2527 = vadd.f32 %v2517, %v2525
    %v2528 = vtanh.pop %v2527
    %2530 = vrot.lane.b32.xlu0 %v2528, 32
    %v2531 = vpop.permute.xlu0 %2530
    %v2533 = vmul.f32 %v2516, %v2531
    %v2534 = vsel %vm87, 1, 0
    %2535 = vset.pattern.permute.xlu0 0
    %2536 = vperm.xlu0 %2535, %v2534
    %v2537 = vpop.permute.xlu0 %2536
    %vm2538 = vcmp.eq.s32.totalorder %v2537, 1
    %v2539 = vsel %vm2538, %v2533, %v2088
    %v2540 = vsel %vm2538, %v2527, %v2089
    %v2541 = vsel %vm2538, %v2533, 0.0
    %2543 = vrot.lane.b32.xlu0 %v2090, 64
    %v2544 = vpop.permute.xlu0 %2543
    %v2545 = vsel %vm245, %v2544, 0
    %2547 = vmatprep.subr.mxu0 0.0
    %2548 = vmatpush1.msra.mxu0 %v451
    %2549 = vmatprep.subr.mxu0 0.0
    %2550 = vmatpush1.msra.mxu0 %v452
    %2551 = vmatprep.subr.mxu0 0.0
    %2552 = vmatpush1.msra.mxu0 %v453
    %2553 = vmatprep.subr.mxu0 0.0
    %2554 = vmatpush1.msra.mxu0 %v454
    %2555 = vmatprep.subr.mxu0 0.0
    %2556 = vmatpush1.msra.mxu0 0.0
    %2557 = vmatprep.subr.mxu0 0.0
    %2558 = vmatpush1.msra.mxu0 0.0
    %2559 = vmatprep.subr.mxu0 0.0
    %2560 = vmatpush1.msra.mxu0 0.0
    %2561 = vmatprep.subr.mxu0 0.0
    %2562 = vmatpush1.msra.mxu0 0.0
    %2563 = vmatprep.subr.mxu0 0.0
    %2564 = vmatpush1.msra.mxu0 0.0
    %2565 = vmatprep.subr.mxu0 0.0
    %2566 = vmatpush1.msra.mxu0 0.0
    %2567 = vmatprep.subr.mxu0 0.0
    %2568 = vmatpush1.msra.mxu0 0.0
    %2569 = vmatprep.subr.mxu0 0.0
    %2570 = vmatpush1.msra.mxu0 0.0
    %2571 = vmatprep.subr.mxu0 0.0
    %2572 = vmatpush1.msra.mxu0 0.0
    %2573 = vmatprep.subr.mxu0 0.0
    %2574 = vmatpush1.msra.mxu0 0.0
    %2575 = vmatprep.subr.mxu0 0.0
    %2576 = vmatpush1.msra.mxu0 0.0
    %2577 = vmatprep.subr.mxu0 0.0
    %2578 = vmatpush1.msra.mxu0 0.0
    %2579 = vmatprep.subr.mxu0 0.0
    %2580 = vmatpush1.msra.mxu0 0.0
    %2581 = vmatprep.subr.mxu0 0.0
    %2582 = vmatpush1.msra.mxu0 0.0
    %2583 = vmatprep.subr.mxu0 0.0
    %2584 = vmatpush1.msra.mxu0 0.0
    %2585 = vmatprep.subr.mxu0 0.0
    %2586 = vmatpush1.msra.mxu0 0.0
    %2587 = vmatprep.subr.mxu0 0.0
    %2588 = vmatpush1.msra.mxu0 0.0
    %2589 = vmatprep.subr.mxu0 0.0
    %2590 = vmatpush1.msra.mxu0 0.0
    %2591 = vmatprep.subr.mxu0 0.0
    %2592 = vmatpush1.msra.mxu0 0.0
    %2593 = vmatprep.subr.mxu0 0.0
    %2594 = vmatpush1.msra.mxu0 0.0
    %2595 = vmatprep.subr.mxu0 0.0
    %2596 = vmatpush1.msra.mxu0 0.0
    %2597 = vmatprep.subr.mxu0 0.0
    %2598 = vmatpush1.msra.mxu0 0.0
    %2599 = vmatprep.subr.mxu0 0.0
    %2600 = vmatpush1.msra.mxu0 0.0
    %2601 = vmatprep.subr.mxu0 0.0
    %2602 = vmatpush1.msra.mxu0 0.0
    %2603 = vmatprep.subr.mxu0 0.0
    %2604 = vmatpush1.msra.mxu0 0.0
    %2605 = vmatprep.subr.mxu0 0.0
    %2606 = vmatpush1.msra.mxu0 0.0
    %2607 = vmatprep.subr.mxu0 0.0
    %2608 = vmatpush1.msra.mxu0 0.0
    %2609 = vmatprep.subr.mxu0 0.0
    %2610 = vmatpush1.msra.mxu0 0.0
    %2611 = vmatprep.mubr.f32.mxu0 0.0
    %2612 = vmatmul.mubr.f32.gmra.mrb[0].mxu0 %v2545
    %v2613 = vpop.f32.mrb[0].mxu0
    %v2614 = vadd.f32 %v460, %v2613
    %v2615 = vpop.f32.mrb[0].mxu0
    %2616 = vdwg.mxu0
    %2618 = vrot.lane.b32.xlu0 %v2262, 64
    %v2619 = vpop.permute.xlu0 %2618
    %v2620 = vsel %vm245, %v2619, 0
    %2622 = vmatprep.subr.mxu0 0.0
    %2623 = vmatpush1.msra.mxu0 %v532
    %2624 = vmatprep.subr.mxu0 0.0
    %2625 = vmatpush1.msra.mxu0 %v533
    %2626 = vmatprep.subr.mxu0 0.0
    %2627 = vmatpush1.msra.mxu0 %v534
    %2628 = vmatprep.subr.mxu0 0.0
    %2629 = vmatpush1.msra.mxu0 %v535
    %2630 = vmatprep.subr.mxu0 0.0
    %2631 = vmatpush1.msra.mxu0 0.0
    %2632 = vmatprep.subr.mxu0 0.0
    %2633 = vmatpush1.msra.mxu0 0.0
    %2634 = vmatprep.subr.mxu0 0.0
    %2635 = vmatpush1.msra.mxu0 0.0
    %2636 = vmatprep.subr.mxu0 0.0
    %2637 = vmatpush1.msra.mxu0 0.0
    %2638 = vmatprep.subr.mxu0 0.0
    %2639 = vmatpush1.msra.mxu0 0.0
    %2640 = vmatprep.subr.mxu0 0.0
    %2641 = vmatpush1.msra.mxu0 0.0
    %2642 = vmatprep.subr.mxu0 0.0
    %2643 = vmatpush1.msra.mxu0 0.0
    %2644 = vmatprep.subr.mxu0 0.0
    %2645 = vmatpush1.msra.mxu0 0.0
    %2646 = vmatprep.subr.mxu0 0.0
    %2647 = vmatpush1.msra.mxu0 0.0
    %2648 = vmatprep.subr.mxu0 0.0
    %2649 = vmatpush1.msra.mxu0 0.0
    %2650 = vmatprep.subr.mxu0 0.0
    %2651 = vmatpush1.msra.mxu0 0.0
    %2652 = vmatprep.subr.mxu0 0.0
    %2653 = vmatpush1.msra.mxu0 0.0
    %2654 = vmatprep.subr.mxu0 0.0
    %2655 = vmatpush1.msra.mxu0 0.0
    %2656 = vmatprep.subr.mxu0 0.0
    %2657 = vmatpush1.msra.mxu0 0.0
    %2658 = vmatprep.subr.mxu0 0.0
    %2659 = vmatpush1.msra.mxu0 0.0
    %2660 = vmatprep.subr.mxu0 0.0
    %2661 = vmatpush1.msra.mxu0 0.0
    %2662 = vmatprep.subr.mxu0 0.0
    %2663 = vmatpush1.msra.mxu0 0.0
    %2664 = vmatprep.subr.mxu0 0.0
    %2665 = vmatpush1.msra.mxu0 0.0
    %2666 = vmatprep.subr.mxu0 0.0
    %2667 = vmatpush1.msra.mxu0 0.0
    %2668 = vmatprep.subr.mxu0 0.0
    %2669 = vmatpush1.msra.mxu0 0.0
    %2670 = vmatprep.subr.mxu0 0.0
    %2671 = vmatpush1.msra.mxu0 0.0
    %2672 = vmatprep.subr.mxu0 0.0
    %2673 = vmatpush1.msra.mxu0 0.0
    %2674 = vmatprep.subr.mxu0 0.0
    %2675 = vmatpush1.msra.mxu0 0.0
    %2676 = vmatprep.subr.mxu0 0.0
    %2677 = vmatpush1.msra.mxu0 0.0
    %2678 = vmatprep.subr.mxu0 0.0
    %2679 = vmatpush1.msra.mxu0 0.0
    %2680 = vmatprep.subr.mxu0 0.0
    %2681 = vmatpush1.msra.mxu0 0.0
    %2682 = vmatprep.subr.mxu0 0.0
    %2683 = vmatpush1.msra.mxu0 0.0
    %2684 = vmatprep.subr.mxu0 0.0
    %2685 = vmatpush1.msra.mxu0 0.0
    %2686 = vmatprep.mubr.f32.mxu0 0.0
    %2687 = vmatmul.mubr.f32.gmra.mrb[0].mxu0 %v2620
    %v2688 = vpop.f32.mrb[0].mxu0
    %v2689 = vadd.f32 0.0, %v2688
    %v2690 = vpop.f32.mrb[0].mxu0
    %2691 = vdwg.mxu0
    %v2692 = vadd.f32 %v2614, %v2689
    %v2693 = vtanh.pop %v2692
    %v2694 = vmul.f32 %v2693, %v92
    %v2695 = vadd.f32 %v2694, %v93
    %v2696 = vmul.f32 %v2695, %v2263
    %2698 = vrot.lane.b32.xlu0 %v2695, 32
    %v2699 = vpop.permute.xlu0 %2698
    %v2701 = vmul.f32 %v2695, %v2699
    %2703 = vrot.lane.b32.xlu0 %v2701, 32
    %v2704 = vpop.permute.xlu0 %2703
    %v2706 = vadd.f32 %v2696, %v2704
    %v2707 = vtanh.pop %v2706
    %2709 = vrot.lane.b32.xlu0 %v2707, 32
    %v2710 = vpop.permute.xlu0 %2709
    %v2712 = vmul.f32 %v2695, %v2710
    %v2713 = vsel %vm2087, %v2712, %v2262
    %v2714 = vsel %vm2087, %v2706, %v2263
    %v2715 = vsel %vm2087, %v2712, 0.0
    %2717 = vrot.lane.b32.xlu0 %v2264, 64
    %v2718 = vpop.permute.xlu0 %2717
    %v2719 = vsel %vm245, %v2718, 0
    %2721 = vmatprep.subr.mxu0 0.0
    %2722 = vmatpush1.msra.mxu0 %v907
    %2723 = vmatprep.subr.mxu0 0.0
    %2724 = vmatpush1.msra.mxu0 %v908
    %2725 = vmatprep.subr.mxu0 0.0
    %2726 = vmatpush1.msra.mxu0 %v909
    %2727 = vmatprep.subr.mxu0 0.0
    %2728 = vmatpush1.msra.mxu0 %v910
    %2729 = vmatprep.subr.mxu0 0.0
    %2730 = vmatpush1.msra.mxu0 0.0
    %2731 = vmatprep.subr.mxu0 0.0
    %2732 = vmatpush1.msra.mxu0 0.0
    %2733 = vmatprep.subr.mxu0 0.0
    %2734 = vmatpush1.msra.mxu0 0.0
    %2735 = vmatprep.subr.mxu0 0.0
    %2736 = vmatpush1.msra.mxu0 0.0
    %2737 = vmatprep.subr.mxu0 0.0
    %2738 = vmatpush1.msra.mxu0 0.0
    %2739 = vmatprep.subr.mxu0 0.0
    %2740 = vmatpush1.msra.mxu0 0.0
    %2741 = vmatprep.subr.mxu0 0.0
    %2742 = vmatpush1.msra.mxu0 0.0
    %2743 = vmatprep.subr.mxu0 0.0
    %2744 = vmatpush1.msra.mxu0 0.0
    %2745 = vmatprep.subr.mxu0 0.0
    %2746 = vmatpush1.msra.mxu0 0.0
    %2747 = vmatprep.subr.mxu0 0.0
    %2748 = vmatpush1.msra.mxu0 0.0
    %2749 = vmatprep.subr.mxu0 0.0
    %2750 = vmatpush1.msra.mxu0 0.0
    %2751 = vmatprep.subr.mxu0 0.0
    %2752 = vmatpush1.msra.mxu0 0.0
    %2753 = vmatprep.subr.mxu0 0.0
    %2754 = vmatpush1.msra.mxu0 0.0
    %2755 = vmatprep.subr.mxu0 0.0
    %2756 = vmatpush1.msra.mxu0 0.0
    %2757 = vmatprep.subr.mxu0 0.0
    %2758 = vmatpush1.msra.mxu0 0.0
    %2759 = vmatprep.subr.mxu0 0.0
    %2760 = vmatpush1.msra.mxu0 0.0
    %2761 = vmatprep.subr.mxu0 0.0
    %2762 = vmatpush1.msra.mxu0 0.0
    %2763 = vmatprep.subr.mxu0 0.0
    %2764 = vmatpush1.msra.mxu0 0.0
    %2765 = vmatprep.subr.mxu0 0.0
    %2766 = vmatpush1.msra.mxu0 0.0
    %2767 = vmatprep.subr.mxu0 0.0
    %2768 = vmatpush1.msra.mxu0 0.0
    %2769 = vmatprep.subr.mxu0 0.0
    %2770 = vmatpush1.msra.mxu0 0.0
    %2771 = vmatprep.subr.mxu0 0.0
    %2772 = vmatpush1.msra.mxu0 0.0
    %2773 = vmatprep.subr.mxu0 0.0
    %2774 = vmatpush1.msra.mxu0 0.0
    %2775 = vmatprep.subr.mxu0 0.0
    %2776 = vmatpush1.msra.mxu0 0.0
    %2777 = vmatprep.subr.mxu0 0.0
    %2778 = vmatpush1.msra.mxu0 0.0
    %2779 = vmatprep.subr.mxu0 0.0
    %2780 = vmatpush1.msra.mxu0 0.0
    %2781 = vmatprep.subr.mxu0 0.0
    %2782 = vmatpush1.msra.mxu0 0.0
    %2783 = vmatprep.subr.mxu0 0.0
    %2784 = vmatpush1.msra.mxu0 0.0
    %2785 = vmatprep.mubr.f32.mxu0 0.0
    %2786 = vmatmul.mubr.f32.gmra.mrb[0].mxu0 %v2719
    %v2787 = vpop.f32.mrb[0].mxu0
    %v2788 = vadd.f32 %v916, %v2787
    %v2789 = vpop.f32.mrb[0].mxu0
    %2790 = vdwg.mxu0
    %2792 = vrot.lane.b32.xlu0 %v2436, 64
    %v2793 = vpop.permute.xlu0 %2792
    %v2794 = vsel %vm245, %v2793, 0
    %2796 = vmatprep.subr.mxu0 0.0
    %2797 = vmatpush1.msra.mxu0 %v988
    %2798 = vmatprep.subr.mxu0 0.0
    %2799 = vmatpush1.msra.mxu0 %v989
    %2800 = vmatprep.subr.mxu0 0.0
    %2801 = vmatpush1.msra.mxu0 %v990
    %2802 = vmatprep.subr.mxu0 0.0
    %2803 = vmatpush1.msra.mxu0 %v991
    %2804 = vmatprep.subr.mxu0 0.0
    %2805 = vmatpush1.msra.mxu0 0.0
    %2806 = vmatprep.subr.mxu0 0.0
    %2807 = vmatpush1.msra.mxu0 0.0
    %2808 = vmatprep.subr.mxu0 0.0
    %2809 = vmatpush1.msra.mxu0 0.0
    %2810 = vmatprep.subr.mxu0 0.0
    %2811 = vmatpush1.msra.mxu0 0.0
    %2812 = vmatprep.subr.mxu0 0.0
    %2813 = vmatpush1.msra.mxu0 0.0
    %2814 = vmatprep.subr.mxu0 0.0
    %2815 = vmatpush1.msra.mxu0 0.0
    %2816 = vmatprep.subr.mxu0 0.0
    %2817 = vmatpush1.msra.mxu0 0.0
    %2818 = vmatprep.subr.mxu0 0.0
    %2819 = vmatpush1.msra.mxu0 0.0
    %2820 = vmatprep.subr.mxu0 0.0
    %2821 = vmatpush1.msra.mxu0 0.0
    %2822 = vmatprep.subr.mxu0 0.0
    %2823 = vmatpush1.msra.mxu0 0.0
    %2824 = vmatprep.subr.mxu0 0.0
    %2825 = vmatpush1.msra.mxu0 0.0
    %2826 = vmatprep.subr.mxu0 0.0
    %2827 = vmatpush1.msra.mxu0 0.0
    %2828 = vmatprep.subr.mxu0 0.0
    %2829 = vmatpush1.msra.mxu0 0.0
    %2830 = vmatprep.subr.mxu0 0.0
    %2831 = vmatpush1.msra.mxu0 0.0
    %2832 = vmatprep.subr.mxu0 0.0
    %2833 = vmatpush1.msra.mxu0 0.0
    %2834 = vmatprep.subr.mxu0 0.0
    %2835 = vmatpush1.msra.mxu0 0.0
    %2836 = vmatprep.subr.mxu0 0.0
    %2837 = vmatpush1.msra.mxu0 0.0
    %2838 = vmatprep.subr.mxu0 0.0
    %2839 = vmatpush1.msra.mxu0 0.0
    %2840 = vmatprep.subr.mxu0 0.0
    %2841 = vmatpush1.msra.mxu0 0.0
    %2842 = vmatprep.subr.mxu0 0.0
    %2843 = vmatpush1.msra.mxu0 0.0
    %2844 = vmatprep.subr.mxu0 0.0
    %2845 = vmatpush1.msra.mxu0 0.0
    %2846 = vmatprep.subr.mxu0 0.0
    %2847 = vmatpush1.msra.mxu0 0.0
    %2848 = vmatprep.subr.mxu0 0.0
    %2849 = vmatpush1.msra.mxu0 0.0
    %2850 = vmatprep.subr.mxu0 0.0
    %2851 = vmatpush1.msra.mxu0 0.0
    %2852 = vmatprep.subr.mxu0 0.0
    %2853 = vmatpush1.msra.mxu0 0.0
    %2854 = vmatprep.subr.mxu0 0.0
    %2855 = vmatpush1.msra.mxu0 0.0
    %2856 = vmatprep.subr.mxu0 0.0
    %2857 = vmatpush1.msra.mxu0 0.0
    %2858 = vmatprep.subr.mxu0 0.0
    %2859 = vmatpush1.msra.mxu0 0.0
    %2860 = vmatprep.mubr.f32.mxu0 0.0
    %2861 = vmatmul.mubr.f32.gmra.mrb[0].mxu0 %v2794
    %v2862 = vpop.f32.mrb[0].mxu0
    %v2863 = vadd.f32 0.0, %v2862
    %v2864 = vpop.f32.mrb[0].mxu0
    %2865 = vdwg.mxu0
    %v2866 = vadd.f32 %v2788, %v2863
    %v2867 = vtanh.pop %v2866
    %v2868 = vmul.f32 %v2867, %v92
    %v2869 = vadd.f32 %v2868, %v93
    %v2870 = vmul.f32 %v2869, %v2437
    %2872 = vrot.lane.b32.xlu0 %v2869, 32
    %v2873 = vpop.permute.xlu0 %2872
    %v2875 = vmul.f32 %v2869, %v2873
    %2877 = vrot.lane.b32.xlu0 %v2875, 32
    %v2878 = vpop.permute.xlu0 %2877
    %v2880 = vadd.f32 %v2870, %v2878
    %v2881 = vtanh.pop %v2880
    %2883 = vrot.lane.b32.xlu0 %v2881, 32
    %v2884 = vpop.permute.xlu0 %2883
    %v2886 = vmul.f32 %v2869, %v2884
    %v2887 = vsel %vm1636, %v2886, %v2436
    %v2888 = vsel %vm1636, %v2880, %v2437
    %2890 = vrot.lane.b32.xlu0 %v2539, 64
    %v2891 = vpop.permute.xlu0 %2890
    %v2892 = vsel %vm245, %v2891, 0
    %2894 = vmatprep.subr.mxu0 0.0
    %2895 = vmatpush1.msra.mxu0 %v241
    %2896 = vmatprep.subr.mxu0 0.0
    %2897 = vmatpush1.msra.mxu0 %v242
    %2898 = vmatprep.subr.mxu0 0.0
    %2899 = vmatpush1.msra.mxu0 %v243
    %2900 = vmatprep.subr.mxu0 0.0
    %2901 = vmatpush1.msra.mxu0 %v244
    %2902 = vmatprep.subr.mxu0 0.0
    %2903 = vmatpush1.msra.mxu0 0.0
    %2904 = vmatprep.subr.mxu0 0.0
    %2905 = vmatpush1.msra.mxu0 0.0
    %2906 = vmatprep.subr.mxu0 0.0
    %2907 = vmatpush1.msra.mxu0 0.0
    %2908 = vmatprep.subr.mxu0 0.0
    %2909 = vmatpush1.msra.mxu0 0.0
    %2910 = vmatprep.subr.mxu0 0.0
    %2911 = vmatpush1.msra.mxu0 0.0
    %2912 = vmatprep.subr.mxu0 0.0
    %2913 = vmatpush1.msra.mxu0 0.0
    %2914 = vmatprep.subr.mxu0 0.0
    %2915 = vmatpush1.msra.mxu0 0.0
    %2916 = vmatprep.subr.mxu0 0.0
    %2917 = vmatpush1.msra.mxu0 0.0
    %2918 = vmatprep.subr.mxu0 0.0
    %2919 = vmatpush1.msra.mxu0 0.0
    %2920 = vmatprep.subr.mxu0 0.0
    %2921 = vmatpush1.msra.mxu0 0.0
    %2922 = vmatprep.subr.mxu0 0.0
    %2923 = vmatpush1.msra.mxu0 0.0
    %2924 = vmatprep.subr.mxu0 0.0
    %2925 = vmatpush1.msra.mxu0 0.0
    %2926 = vmatprep.subr.mxu0 0.0
    %2927 = vmatpush1.msra.mxu0 0.0
    %2928 = vmatprep.subr.mxu0 0.0
    %2929 = vmatpush1.msra.mxu0 0.0
    %2930 = vmatprep.subr.mxu0 0.0
    %2931 = vmatpush1.msra.mxu0 0.0
    %2932 = vmatprep.subr.mxu0 0.0
    %2933 = vmatpush1.msra.mxu0 0.0
    %2934 = vmatprep.subr.mxu0 0.0
    %2935 = vmatpush1.msra.mxu0 0.0
    %2936 = vmatprep.subr.mxu0 0.0
    %2937 = vmatpush1.msra.mxu0 0.0
    %2938 = vmatprep.subr.mxu0 0.0
    %2939 = vmatpush1.msra.mxu0 0.0
    %2940 = vmatprep.subr.mxu0 0.0
    %2941 = vmatpush1.msra.mxu0 0.0
    %2942 = vmatprep.subr.mxu0 0.0
    %2943 = vmatpush1.msra.mxu0 0.0
    %2944 = vmatprep.subr.mxu0 0.0
    %2945 = vmatpush1.msra.mxu0 0.0
    %2946 = vmatprep.subr.mxu0 0.0
    %2947 = vmatpush1.msra.mxu0 0.0
    %2948 = vmatprep.subr.mxu0 0.0
    %2949 = vmatpush1.msra.mxu0 0.0
    %2950 = vmatprep.subr.mxu0 0.0
    %2951 = vmatpush1.msra.mxu0 0.0
    %2952 = vmatprep.subr.mxu0 0.0
    %2953 = vmatpush1.msra.mxu0 0.0
    %2954 = vmatprep.subr.mxu0 0.0
    %2955 = vmatpush1.msra.mxu0 0.0
    %2956 = vmatprep.subr.mxu0 0.0
    %2957 = vmatpush1.msra.mxu0 0.0
    %2958 = vmatprep.mubr.f32.mxu0 0.0
    %2959 = vmatmul.mubr.f32.gmra.mrb[0].mxu0 %v2892
    %v2960 = vpop.f32.mrb[0].mxu0
    %v2961 = vadd.f32 0.0, %v2960
    %v2962 = vpop.f32.mrb[0].mxu0
    %2963 = vdwg.mxu0
    %v2964 = vadd.f32 %v238, %v2961
    %v2965 = vtanh.pop %v2964
    %v2966 = vmul.f32 %v2965, %v92
    %v2967 = vadd.f32 %v2966, %v93
    %v2968 = vmul.f32 %v2967, %v2540
    %2970 = vrot.lane.b32.xlu0 %v2967, 32
    %v2971 = vpop.permute.xlu0 %2970
    %v2973 = vmul.f32 %v2967, %v2971
    %2975 = vrot.lane.b32.xlu0 %v2973, 32
    %v2976 = vpop.permute.xlu0 %2975
    %v2978 = vadd.f32 %v2968, %v2976
    %v2979 = vtanh.pop %v2978
    %2981 = vrot.lane.b32.xlu0 %v2979, 32
    %v2982 = vpop.permute.xlu0 %2981
    %v2984 = vmul.f32 %v2967, %v2982
    %v2985 = vsel %vm88, 1, 0
    %2986 = vset.pattern.permute.xlu0 0
    %2987 = vperm.xlu0 %2986, %v2985
    %v2988 = vpop.permute.xlu0 %2987
    %vm2989 = vcmp.eq.s32.totalorder %v2988, 1
    %v2990 = vsel %vm2989, %v2984, 0.0
    %2992 = vrot.lane.b32.xlu0 %v2541, 64
    %v2993 = vpop.permute.xlu0 %2992
    %v2994 = vsel %vm245, %v2993, 0
    %2996 = vmatprep.subr.mxu0 0.0
    %2997 = vmatpush1.msra.mxu0 %v451
    %2998 = vmatprep.subr.mxu0 0.0
    %2999 = vmatpush1.msra.mxu0 %v452
    %3000 = vmatprep.subr.mxu0 0.0
    %3001 = vmatpush1.msra.mxu0 %v453
    %3002 = vmatprep.subr.mxu0 0.0
    %3003 = vmatpush1.msra.mxu0 %v454
    %3004 = vmatprep.subr.mxu0 0.0
    %3005 = vmatpush1.msra.mxu0 0.0
    %3006 = vmatprep.subr.mxu0 0.0
    %3007 = vmatpush1.msra.mxu0 0.0
    %3008 = vmatprep.subr.mxu0 0.0
    %3009 = vmatpush1.msra.mxu0 0.0
    %3010 = vmatprep.subr.mxu0 0.0
    %3011 = vmatpush1.msra.mxu0 0.0
    %3012 = vmatprep.subr.mxu0 0.0
    %3013 = vmatpush1.msra.mxu0 0.0
    %3014 = vmatprep.subr.mxu0 0.0
    %3015 = vmatpush1.msra.mxu0 0.0
    %3016 = vmatprep.subr.mxu0 0.0
    %3017 = vmatpush1.msra.mxu0 0.0
    %3018 = vmatprep.subr.mxu0 0.0
    %3019 = vmatpush1.msra.mxu0 0.0
    %3020 = vmatprep.subr.mxu0 0.0
    %3021 = vmatpush1.msra.mxu0 0.0
    %3022 = vmatprep.subr.mxu0 0.0
    %3023 = vmatpush1.msra.mxu0 0.0
    %3024 = vmatprep.subr.mxu0 0.0
    %3025 = vmatpush1.msra.mxu0 0.0
    %3026 = vmatprep.subr.mxu0 0.0
    %3027 = vmatpush1.msra.mxu0 0.0
    %3028 = vmatprep.subr.mxu0 0.0
    %3029 = vmatpush1.msra.mxu0 0.0
    %3030 = vmatprep.subr.mxu0 0.0
    %3031 = vmatpush1.msra.mxu0 0.0
    %3032 = vmatprep.subr.mxu0 0.0
    %3033 = vmatpush1.msra.mxu0 0.0
    %3034 = vmatprep.subr.mxu0 0.0
    %3035 = vmatpush1.msra.mxu0 0.0
    %3036 = vmatprep.subr.mxu0 0.0
    %3037 = vmatpush1.msra.mxu0 0.0
    %3038 = vmatprep.subr.mxu0 0.0
    %3039 = vmatpush1.msra.mxu0 0.0
    %3040 = vmatprep.subr.mxu0 0.0
    %3041 = vmatpush1.msra.mxu0 0.0
    %3042 = vmatprep.subr.mxu0 0.0
    %3043 = vmatpush1.msra.mxu0 0.0
    %3044 = vmatprep.subr.mxu0 0.0
    %3045 = vmatpush1.msra.mxu0 0.0
    %3046 = vmatprep.subr.mxu0 0.0
    %3047 = vmatpush1.msra.mxu0 0.0
    %3048 = vmatprep.subr.mxu0 0.0
    %3049 = vmatpush1.msra.mxu0 0.0
    %3050 = vmatprep.subr.mxu0 0.0
    %3051 = vmatpush1.msra.mxu0 0.0
    %3052 = vmatprep.subr.mxu0 0.0
    %3053 = vmatpush1.msra.mxu0 0.0
    %3054 = vmatprep.subr.mxu0 0.0
    %3055 = vmatpush1.msra.mxu0 0.0
    %3056 = vmatprep.subr.mxu0 0.0
    %3057 = vmatpush1.msra.mxu0 0.0
    %3058 = vmatprep.subr.mxu0 0.0
    %3059 = vmatpush1.msra.mxu0 0.0
    %3060 = vmatprep.mubr.f32.mxu0 0.0
    %3061 = vmatmul.mubr.f32.gmra.mrb[0].mxu0 %v2994
    %v3062 = vpop.f32.mrb[0].mxu0
    %v3063 = vadd.f32 %v460, %v3062
    %v3064 = vpop.f32.mrb[0].mxu0
    %3065 = vdwg.mxu0
    %3067 = vrot.lane.b32.xlu0 %v2713, 64
    %v3068 = vpop.permute.xlu0 %3067
    %v3069 = vsel %vm245, %v3068, 0
    %3071 = vmatprep.subr.mxu0 0.0
    %3072 = vmatpush1.msra.mxu0 %v532
    %3073 = vmatprep.subr.mxu0 0.0
    %3074 = vmatpush1.msra.mxu0 %v533
    %3075 = vmatprep.subr.mxu0 0.0
    %3076 = vmatpush1.msra.mxu0 %v534
    %3077 = vmatprep.subr.mxu0 0.0
    %3078 = vmatpush1.msra.mxu0 %v535
    %3079 = vmatprep.subr.mxu0 0.0
    %3080 = vmatpush1.msra.mxu0 0.0
    %3081 = vmatprep.subr.mxu0 0.0
    %3082 = vmatpush1.msra.mxu0 0.0
    %3083 = vmatprep.subr.mxu0 0.0
    %3084 = vmatpush1.msra.mxu0 0.0
    %3085 = vmatprep.subr.mxu0 0.0
    %3086 = vmatpush1.msra.mxu0 0.0
    %3087 = vmatprep.subr.mxu0 0.0
    %3088 = vmatpush1.msra.mxu0 0.0
    %3089 = vmatprep.subr.mxu0 0.0
    %3090 = vmatpush1.msra.mxu0 0.0
    %3091 = vmatprep.subr.mxu0 0.0
    %3092 = vmatpush1.msra.mxu0 0.0
    %3093 = vmatprep.subr.mxu0 0.0
    %3094 = vmatpush1.msra.mxu0 0.0
    %3095 = vmatprep.subr.mxu0 0.0
    %3096 = vmatpush1.msra.mxu0 0.0
    %3097 = vmatprep.subr.mxu0 0.0
    %3098 = vmatpush1.msra.mxu0 0.0
    %3099 = vmatprep.subr.mxu0 0.0
    %3100 = vmatpush1.msra.mxu0 0.0
    %3101 = vmatprep.subr.mxu0 0.0
    %3102 = vmatpush1.msra.mxu0 0.0
    %3103 = vmatprep.subr.mxu0 0.0
    %3104 = vmatpush1.msra.mxu0 0.0
    %3105 = vmatprep.subr.mxu0 0.0
    %3106 = vmatpush1.msra.mxu0 0.0
    %3107 = vmatprep.subr.mxu0 0.0
    %3108 = vmatpush1.msra.mxu0 0.0
    %3109 = vmatprep.subr.mxu0 0.0
    %3110 = vmatpush1.msra.mxu0 0.0
    %3111 = vmatprep.subr.mxu0 0.0
    %3112 = vmatpush1.msra.mxu0 0.0
    %3113 = vmatprep.subr.mxu0 0.0
    %3114 = vmatpush1.msra.mxu0 0.0
    %3115 = vmatprep.subr.mxu0 0.0
    %3116 = vmatpush1.msra.mxu0 0.0
    %3117 = vmatprep.subr.mxu0 0.0
    %3118 = vmatpush1.msra.mxu0 0.0
    %3119 = vmatprep.subr.mxu0 0.0
    %3120 = vmatpush1.msra.mxu0 0.0
    %3121 = vmatprep.subr.mxu0 0.0
    %3122 = vmatpush1.msra.mxu0 0.0
    %3123 = vmatprep.subr.mxu0 0.0
    %3124 = vmatpush1.msra.mxu0 0.0
    %3125 = vmatprep.subr.mxu0 0.0
    %3126 = vmatpush1.msra.mxu0 0.0
    %3127 = vmatprep.subr.mxu0 0.0
    %3128 = vmatpush1.msra.mxu0 0.0
    %3129 = vmatprep.subr.mxu0 0.0
    %3130 = vmatpush1.msra.mxu0 0.0
    %3131 = vmatprep.subr.mxu0 0.0
    %3132 = vmatpush1.msra.mxu0 0.0
    %3133 = vmatprep.subr.mxu0 0.0
    %3134 = vmatpush1.msra.mxu0 0.0
    %3135 = vmatprep.mubr.f32.mxu0 0.0
    %3136 = vmatmul.mubr.f32.gmra.mrb[0].mxu0 %v3069
    %v3137 = vpop.f32.mrb[0].mxu0
    %v3138 = vadd.f32 0.0, %v3137
    %v3139 = vpop.f32.mrb[0].mxu0
    %3140 = vdwg.mxu0
    %v3141 = vadd.f32 %v3063, %v3138
    %v3142 = vtanh.pop %v3141
    %v3143 = vmul.f32 %v3142, %v92
    %v3144 = vadd.f32 %v3143, %v93
    %v3145 = vmul.f32 %v3144, %v2714
    %3147 = vrot.lane.b32.xlu0 %v3144, 32
    %v3148 = vpop.permute.xlu0 %3147
    %v3150 = vmul.f32 %v3144, %v3148
    %3152 = vrot.lane.b32.xlu0 %v3150, 32
    %v3153 = vpop.permute.xlu0 %3152
    %v3155 = vadd.f32 %v3145, %v3153
    %v3156 = vtanh.pop %v3155
    %3158 = vrot.lane.b32.xlu0 %v3156, 32
    %v3159 = vpop.permute.xlu0 %3158
    %v3161 = vmul.f32 %v3144, %v3159
    %v3162 = vsel %vm2538, %v3161, %v2713
    %v3163 = vsel %vm2538, %v3155, %v2714
    %v3164 = vsel %vm2538, %v3161, 0.0
    %3166 = vrot.lane.b32.xlu0 %v2715, 64
    %v3167 = vpop.permute.xlu0 %3166
    %v3168 = vsel %vm245, %v3167, 0
    %3170 = vmatprep.subr.mxu0 0.0
    %3171 = vmatpush1.msra.mxu0 %v907
    %3172 = vmatprep.subr.mxu0 0.0
    %3173 = vmatpush1.msra.mxu0 %v908
    %3174 = vmatprep.subr.mxu0 0.0
    %3175 = vmatpush1.msra.mxu0 %v909
    %3176 = vmatprep.subr.mxu0 0.0
    %3177 = vmatpush1.msra.mxu0 %v910
    %3178 = vmatprep.subr.mxu0 0.0
    %3179 = vmatpush1.msra.mxu0 0.0
    %3180 = vmatprep.subr.mxu0 0.0
    %3181 = vmatpush1.msra.mxu0 0.0
    %3182 = vmatprep.subr.mxu0 0.0
    %3183 = vmatpush1.msra.mxu0 0.0
    %3184 = vmatprep.subr.mxu0 0.0
    %3185 = vmatpush1.msra.mxu0 0.0
    %3186 = vmatprep.subr.mxu0 0.0
    %3187 = vmatpush1.msra.mxu0 0.0
    %3188 = vmatprep.subr.mxu0 0.0
    %3189 = vmatpush1.msra.mxu0 0.0
    %3190 = vmatprep.subr.mxu0 0.0
    %3191 = vmatpush1.msra.mxu0 0.0
    %3192 = vmatprep.subr.mxu0 0.0
    %3193 = vmatpush1.msra.mxu0 0.0
    %3194 = vmatprep.subr.mxu0 0.0
    %3195 = vmatpush1.msra.mxu0 0.0
    %3196 = vmatprep.subr.mxu0 0.0
    %3197 = vmatpush1.msra.mxu0 0.0
    %3198 = vmatprep.subr.mxu0 0.0
    %3199 = vmatpush1.msra.mxu0 0.0
    %3200 = vmatprep.subr.mxu0 0.0
    %3201 = vmatpush1.msra.mxu0 0.0
    %3202 = vmatprep.subr.mxu0 0.0
    %3203 = vmatpush1.msra.mxu0 0.0
    %3204 = vmatprep.subr.mxu0 0.0
    %3205 = vmatpush1.msra.mxu0 0.0
    %3206 = vmatprep.subr.mxu0 0.0
    %3207 = vmatpush1.msra.mxu0 0.0
    %3208 = vmatprep.subr.mxu0 0.0
    %3209 = vmatpush1.msra.mxu0 0.0
    %3210 = vmatprep.subr.mxu0 0.0
    %3211 = vmatpush1.msra.mxu0 0.0
    %3212 = vmatprep.subr.mxu0 0.0
    %3213 = vmatpush1.msra.mxu0 0.0
    %3214 = vmatprep.subr.mxu0 0.0
    %3215 = vmatpush1.msra.mxu0 0.0
    %3216 = vmatprep.subr.mxu0 0.0
    %3217 = vmatpush1.msra.mxu0 0.0
    %3218 = vmatprep.subr.mxu0 0.0
    %3219 = vmatpush1.msra.mxu0 0.0
    %3220 = vmatprep.subr.mxu0 0.0
    %3221 = vmatpush1.msra.mxu0 0.0
    %3222 = vmatprep.subr.mxu0 0.0
    %3223 = vmatpush1.msra.mxu0 0.0
    %3224 = vmatprep.subr.mxu0 0.0
    %3225 = vmatpush1.msra.mxu0 0.0
    %3226 = vmatprep.subr.mxu0 0.0
    %3227 = vmatpush1.msra.mxu0 0.0
    %3228 = vmatprep.subr.mxu0 0.0
    %3229 = vmatpush1.msra.mxu0 0.0
    %3230 = vmatprep.subr.mxu0 0.0
    %3231 = vmatpush1.msra.mxu0 0.0
    %3232 = vmatprep.subr.mxu0 0.0
    %3233 = vmatpush1.msra.mxu0 0.0
    %3234 = vmatprep.mubr.f32.mxu0 0.0
    %3235 = vmatmul.mubr.f32.gmra.mrb[0].mxu0 %v3168
    %v3236 = vpop.f32.mrb[0].mxu0
    %v3237 = vadd.f32 %v916, %v3236
    %v3238 = vpop.f32.mrb[0].mxu0
    %3239 = vdwg.mxu0
    %3241 = vrot.lane.b32.xlu0 %v2887, 64
    %v3242 = vpop.permute.xlu0 %3241
    %v3243 = vsel %vm245, %v3242, 0
    %3245 = vmatprep.subr.mxu0 0.0
    %3246 = vmatpush1.msra.mxu0 %v988
    %3247 = vmatprep.subr.mxu0 0.0
    %3248 = vmatpush1.msra.mxu0 %v989
    %3249 = vmatprep.subr.mxu0 0.0
    %3250 = vmatpush1.msra.mxu0 %v990
    %3251 = vmatprep.subr.mxu0 0.0
    %3252 = vmatpush1.msra.mxu0 %v991
    %3253 = vmatprep.subr.mxu0 0.0
    %3254 = vmatpush1.msra.mxu0 0.0
    %3255 = vmatprep.subr.mxu0 0.0
    %3256 = vmatpush1.msra.mxu0 0.0
    %3257 = vmatprep.subr.mxu0 0.0
    %3258 = vmatpush1.msra.mxu0 0.0
    %3259 = vmatprep.subr.mxu0 0.0
    %3260 = vmatpush1.msra.mxu0 0.0
    %3261 = vmatprep.subr.mxu0 0.0
    %3262 = vmatpush1.msra.mxu0 0.0
    %3263 = vmatprep.subr.mxu0 0.0
    %3264 = vmatpush1.msra.mxu0 0.0
    %3265 = vmatprep.subr.mxu0 0.0
    %3266 = vmatpush1.msra.mxu0 0.0
    %3267 = vmatprep.subr.mxu0 0.0
    %3268 = vmatpush1.msra.mxu0 0.0
    %3269 = vmatprep.subr.mxu0 0.0
    %3270 = vmatpush1.msra.mxu0 0.0
    %3271 = vmatprep.subr.mxu0 0.0
    %3272 = vmatpush1.msra.mxu0 0.0
    %3273 = vmatprep.subr.mxu0 0.0
    %3274 = vmatpush1.msra.mxu0 0.0
    %3275 = vmatprep.subr.mxu0 0.0
    %3276 = vmatpush1.msra.mxu0 0.0
    %3277 = vmatprep.subr.mxu0 0.0
    %3278 = vmatpush1.msra.mxu0 0.0
    %3279 = vmatprep.subr.mxu0 0.0
    %3280 = vmatpush1.msra.mxu0 0.0
    %3281 = vmatprep.subr.mxu0 0.0
    %3282 = vmatpush1.msra.mxu0 0.0
    %3283 = vmatprep.subr.mxu0 0.0
    %3284 = vmatpush1.msra.mxu0 0.0
    %3285 = vmatprep.subr.mxu0 0.0
    %3286 = vmatpush1.msra.mxu0 0.0
    %3287 = vmatprep.subr.mxu0 0.0
    %3288 = vmatpush1.msra.mxu0 0.0
    %3289 = vmatprep.subr.mxu0 0.0
    %3290 = vmatpush1.msra.mxu0 0.0
    %3291 = vmatprep.subr.mxu0 0.0
    %3292 = vmatpush1.msra.mxu0 0.0
    %3293 = vmatprep.subr.mxu0 0.0
    %3294 = vmatpush1.msra.mxu0 0.0
    %3295 = vmatprep.subr.mxu0 0.0
    %3296 = vmatpush1.msra.mxu0 0.0
    %3297 = vmatprep.subr.mxu0 0.0
    %3298 = vmatpush1.msra.mxu0 0.0
    %3299 = vmatprep.subr.mxu0 0.0
    %3300 = vmatpush1.msra.mxu0 0.0
    %3301 = vmatprep.subr.mxu0 0.0
    %3302 = vmatpush1.msra.mxu0 0.0
    %3303 = vmatprep.subr.mxu0 0.0
    %3304 = vmatpush1.msra.mxu0 0.0
    %3305 = vmatprep.subr.mxu0 0.0
    %3306 = vmatpush1.msra.mxu0 0.0
    %3307 = vmatprep.subr.mxu0 0.0
    %3308 = vmatpush1.msra.mxu0 0.0
    %3309 = vmatprep.mubr.f32.mxu0 0.0
    %3310 = vmatmul.mubr.f32.gmra.mrb[0].mxu0 %v3243
    %v3311 = vpop.f32.mrb[0].mxu0
    %v3312 = vadd.f32 0.0, %v3311
    %v3313 = vpop.f32.mrb[0].mxu0
    %3314 = vdwg.mxu0
    %v3315 = vadd.f32 %v3237, %v3312
    %v3316 = vtanh.pop %v3315
    %v3317 = vmul.f32 %v3316, %v92
    %v3318 = vadd.f32 %v3317, %v93
    %v3319 = vmul.f32 %v3318, %v2888
    %3321 = vrot.lane.b32.xlu0 %v3318, 32
    %v3322 = vpop.permute.xlu0 %3321
    %v3324 = vmul.f32 %v3318, %v3322
    %3326 = vrot.lane.b32.xlu0 %v3324, 32
    %v3327 = vpop.permute.xlu0 %3326
    %v3329 = vadd.f32 %v3319, %v3327
    %v3330 = vtanh.pop %v3329
    %3332 = vrot.lane.b32.xlu0 %v3330, 32
    %v3333 = vpop.permute.xlu0 %3332
    %v3335 = vmul.f32 %v3318, %v3333
    %v3336 = vsel %vm2087, %v3335, %v2887
    %v3337 = vsel %vm2087, %v3329, %v2888
    %3339 = vrot.lane.b32.xlu0 %v2990, 64
    %v3340 = vpop.permute.xlu0 %3339
    %v3341 = vsel %vm245, %v3340, 0
    %3343 = vmatprep.subr.mxu0 0.0
    %3344 = vmatpush1.msra.mxu0 %v451
    %3345 = vmatprep.subr.mxu0 0.0
    %3346 = vmatpush1.msra.mxu0 %v452
    %3347 = vmatprep.subr.mxu0 0.0
    %3348 = vmatpush1.msra.mxu0 %v453
    %3349 = vmatprep.subr.mxu0 0.0
    %3350 = vmatpush1.msra.mxu0 %v454
    %3351 = vmatprep.subr.mxu0 0.0
    %3352 = vmatpush1.msra.mxu0 0.0
    %3353 = vmatprep.subr.mxu0 0.0
    %3354 = vmatpush1.msra.mxu0 0.0
    %3355 = vmatprep.subr.mxu0 0.0
    %3356 = vmatpush1.msra.mxu0 0.0
    %3357 = vmatprep.subr.mxu0 0.0
    %3358 = vmatpush1.msra.mxu0 0.0
    %3359 = vmatprep.subr.mxu0 0.0
    %3360 = vmatpush1.msra.mxu0 0.0
    %3361 = vmatprep.subr.mxu0 0.0
    %3362 = vmatpush1.msra.mxu0 0.0
    %3363 = vmatprep.subr.mxu0 0.0
    %3364 = vmatpush1.msra.mxu0 0.0
    %3365 = vmatprep.subr.mxu0 0.0
    %3366 = vmatpush1.msra.mxu0 0.0
    %3367 = vmatprep.subr.mxu0 0.0
    %3368 = vmatpush1.msra.mxu0 0.0
    %3369 = vmatprep.subr.mxu0 0.0
    %3370 = vmatpush1.msra.mxu0 0.0
    %3371 = vmatprep.subr.mxu0 0.0
    %3372 = vmatpush1.msra.mxu0 0.0
    %3373 = vmatprep.subr.mxu0 0.0
    %3374 = vmatpush1.msra.mxu0 0.0
    %3375 = vmatprep.subr.mxu0 0.0
    %3376 = vmatpush1.msra.mxu0 0.0
    %3377 = vmatprep.subr.mxu0 0.0
    %3378 = vmatpush1.msra.mxu0 0.0
    %3379 = vmatprep.subr.mxu0 0.0
    %3380 = vmatpush1.msra.mxu0 0.0
    %3381 = vmatprep.subr.mxu0 0.0
    %3382 = vmatpush1.msra.mxu0 0.0
    %3383 = vmatprep.subr.mxu0 0.0
    %3384 = vmatpush1.msra.mxu0 0.0
    %3385 = vmatprep.subr.mxu0 0.0
    %3386 = vmatpush1.msra.mxu0 0.0
    %3387 = vmatprep.subr.mxu0 0.0
    %3388 = vmatpush1.msra.mxu0 0.0
    %3389 = vmatprep.subr.mxu0 0.0
    %3390 = vmatpush1.msra.mxu0 0.0
    %3391 = vmatprep.subr.mxu0 0.0
    %3392 = vmatpush1.msra.mxu0 0.0
    %3393 = vmatprep.subr.mxu0 0.0
    %3394 = vmatpush1.msra.mxu0 0.0
    %3395 = vmatprep.subr.mxu0 0.0
    %3396 = vmatpush1.msra.mxu0 0.0
    %3397 = vmatprep.subr.mxu0 0.0
    %3398 = vmatpush1.msra.mxu0 0.0
    %3399 = vmatprep.subr.mxu0 0.0
    %3400 = vmatpush1.msra.mxu0 0.0
    %3401 = vmatprep.subr.mxu0 0.0
    %3402 = vmatpush1.msra.mxu0 0.0
    %3403 = vmatprep.subr.mxu0 0.0
    %3404 = vmatpush1.msra.mxu0 0.0
    %3405 = vmatprep.subr.mxu0 0.0
    %3406 = vmatpush1.msra.mxu0 0.0
    %3407 = vmatprep.mubr.f32.mxu0 0.0
    %3408 = vmatmul.mubr.f32.gmra.mrb[0].mxu0 %v3341
    %v3409 = vpop.f32.mrb[0].mxu0
    %v3410 = vadd.f32 %v460, %v3409
    %v3411 = vpop.f32.mrb[0].mxu0
    %3412 = vdwg.mxu0
    %3414 = vrot.lane.b32.xlu0 %v3162, 64
    %v3415 = vpop.permute.xlu0 %3414
    %v3416 = vsel %vm245, %v3415, 0
    %3418 = vmatprep.subr.mxu0 0.0
    %3419 = vmatpush1.msra.mxu0 %v532
    %3420 = vmatprep.subr.mxu0 0.0
    %3421 = vmatpush1.msra.mxu0 %v533
    %3422 = vmatprep.subr.mxu0 0.0
    %3423 = vmatpush1.msra.mxu0 %v534
    %3424 = vmatprep.subr.mxu0 0.0
    %3425 = vmatpush1.msra.mxu0 %v535
    %3426 = vmatprep.subr.mxu0 0.0
    %3427 = vmatpush1.msra.mxu0 0.0
    %3428 = vmatprep.subr.mxu0 0.0
    %3429 = vmatpush1.msra.mxu0 0.0
    %3430 = vmatprep.subr.mxu0 0.0
    %3431 = vmatpush1.msra.mxu0 0.0
    %3432 = vmatprep.subr.mxu0 0.0
    %3433 = vmatpush1.msra.mxu0 0.0
    %3434 = vmatprep.subr.mxu0 0.0
    %3435 = vmatpush1.msra.mxu0 0.0
    %3436 = vmatprep.subr.mxu0 0.0
    %3437 = vmatpush1.msra.mxu0 0.0
    %3438 = vmatprep.subr.mxu0 0.0
    %3439 = vmatpush1.msra.mxu0 0.0
    %3440 = vmatprep.subr.mxu0 0.0
    %3441 = vmatpush1.msra.mxu0 0.0
    %3442 = vmatprep.subr.mxu0 0.0
    %3443 = vmatpush1.msra.mxu0 0.0
    %3444 = vmatprep.subr.mxu0 0.0
    %3445 = vmatpush1.msra.mxu0 0.0
    %3446 = vmatprep.subr.mxu0 0.0
    %3447 = vmatpush1.msra.mxu0 0.0
    %3448 = vmatprep.subr.mxu0 0.0
    %3449 = vmatpush1.msra.mxu0 0.0
    %3450 = vmatprep.subr.mxu0 0.0
    %3451 = vmatpush1.msra.mxu0 0.0
    %3452 = vmatprep.subr.mxu0 0.0
    %3453 = vmatpush1.msra.mxu0 0.0
    %3454 = vmatprep.subr.mxu0 0.0
    %3455 = vmatpush1.msra.mxu0 0.0
    %3456 = vmatprep.subr.mxu0 0.0
    %3457 = vmatpush1.msra.mxu0 0.0
    %3458 = vmatprep.subr.mxu0 0.0
    %3459 = vmatpush1.msra.mxu0 0.0
    %3460 = vmatprep.subr.mxu0 0.0
    %3461 = vmatpush1.msra.mxu0 0.0
    %3462 = vmatprep.subr.mxu0 0.0
    %3463 = vmatpush1.msra.mxu0 0.0
    %3464 = vmatprep.subr.mxu0 0.0
    %3465 = vmatpush1.msra.mxu0 0.0
    %3466 = vmatprep.subr.mxu0 0.0
    %3467 = vmatpush1.msra.mxu0 0.0
    %3468 = vmatprep.subr.mxu0 0.0
    %3469 = vmatpush1.msra.mxu0 0.0
    %3470 = vmatprep.subr.mxu0 0.0
    %3471 = vmatpush1.msra.mxu0 0.0
    %3472 = vmatprep.subr.mxu0 0.0
    %3473 = vmatpush1.msra.mxu0 0.0
    %3474 = vmatprep.subr.mxu0 0.0
    %3475 = vmatpush1.msra.mxu0 0.0
    %3476 = vmatprep.subr.mxu0 0.0
    %3477 = vmatpush1.msra.mxu0 0.0
    %3478 = vmatprep.subr.mxu0 0.0
    %3479 = vmatpush1.msra.mxu0 0.0
    %3480 = vmatprep.subr.mxu0 0.0
    %3481 = vmatpush1.msra.mxu0 0.0
    %3482 = vmatprep.mubr.f32.mxu0 0.0
    %3483 = vmatmul.mubr.f32.gmra.mrb[0].mxu0 %v3416
    %v3484 = vpop.f32.mrb[0].mxu0
    %v3485 = vadd.f32 0.0, %v3484
    %v3486 = vpop.f32.mrb[0].mxu0
    %3487 = vdwg.mxu0
    %v3488 = vadd.f32 %v3410, %v3485
    %v3489 = vtanh.pop %v3488
    %v3490 = vmul.f32 %v3489, %v92
    %v3491 = vadd.f32 %v3490, %v93
    %v3492 = vmul.f32 %v3491, %v3163
    %3494 = vrot.lane.b32.xlu0 %v3491, 32
    %v3495 = vpop.permute.xlu0 %3494
    %v3497 = vmul.f32 %v3491, %v3495
    %3499 = vrot.lane.b32.xlu0 %v3497, 32
    %v3500 = vpop.permute.xlu0 %3499
    %v3502 = vadd.f32 %v3492, %v3500
    %v3503 = vtanh.pop %v3502
    %3505 = vrot.lane.b32.xlu0 %v3503, 32
    %v3506 = vpop.permute.xlu0 %3505
    %v3508 = vmul.f32 %v3491, %v3506
    %v3509 = vsel %vm2989, %v3508, 0.0
    %3511 = vrot.lane.b32.xlu0 %v3164, 64
    %v3512 = vpop.permute.xlu0 %3511
    %v3513 = vsel %vm245, %v3512, 0
    %3515 = vmatprep.subr.mxu0 0.0
    %3516 = vmatpush1.msra.mxu0 %v907
    %3517 = vmatprep.subr.mxu0 0.0
    %3518 = vmatpush1.msra.mxu0 %v908
    %3519 = vmatprep.subr.mxu0 0.0
    %3520 = vmatpush1.msra.mxu0 %v909
    %3521 = vmatprep.subr.mxu0 0.0
    %3522 = vmatpush1.msra.mxu0 %v910
    %3523 = vmatprep.subr.mxu0 0.0
    %3524 = vmatpush1.msra.mxu0 0.0
    %3525 = vmatprep.subr.mxu0 0.0
    %3526 = vmatpush1.msra.mxu0 0.0
    %3527 = vmatprep.subr.mxu0 0.0
    %3528 = vmatpush1.msra.mxu0 0.0
    %3529 = vmatprep.subr.mxu0 0.0
    %3530 = vmatpush1.msra.mxu0 0.0
    %3531 = vmatprep.subr.mxu0 0.0
    %3532 = vmatpush1.msra.mxu0 0.0
    %3533 = vmatprep.subr.mxu0 0.0
    %3534 = vmatpush1.msra.mxu0 0.0
    %3535 = vmatprep.subr.mxu0 0.0
    %3536 = vmatpush1.msra.mxu0 0.0
    %3537 = vmatprep.subr.mxu0 0.0
    %3538 = vmatpush1.msra.mxu0 0.0
    %3539 = vmatprep.subr.mxu0 0.0
    %3540 = vmatpush1.msra.mxu0 0.0
    %3541 = vmatprep.subr.mxu0 0.0
    %3542 = vmatpush1.msra.mxu0 0.0
    %3543 = vmatprep.subr.mxu0 0.0
    %3544 = vmatpush1.msra.mxu0 0.0
    %3545 = vmatprep.subr.mxu0 0.0
    %3546 = vmatpush1.msra.mxu0 0.0
    %3547 = vmatprep.subr.mxu0 0.0
    %3548 = vmatpush1.msra.mxu0 0.0
    %3549 = vmatprep.subr.mxu0 0.0
    %3550 = vmatpush1.msra.mxu0 0.0
    %3551 = vmatprep.subr.mxu0 0.0
    %3552 = vmatpush1.msra.mxu0 0.0
    %3553 = vmatprep.subr.mxu0 0.0
    %3554 = vmatpush1.msra.mxu0 0.0
    %3555 = vmatprep.subr.mxu0 0.0
    %3556 = vmatpush1.msra.mxu0 0.0
    %3557 = vmatprep.subr.mxu0 0.0
    %3558 = vmatpush1.msra.mxu0 0.0
    %3559 = vmatprep.subr.mxu0 0.0
    %3560 = vmatpush1.msra.mxu0 0.0
    %3561 = vmatprep.subr.mxu0 0.0
    %3562 = vmatpush1.msra.mxu0 0.0
    %3563 = vmatprep.subr.mxu0 0.0
    %3564 = vmatpush1.msra.mxu0 0.0
    %3565 = vmatprep.subr.mxu0 0.0
    %3566 = vmatpush1.msra.mxu0 0.0
    %3567 = vmatprep.subr.mxu0 0.0
    %3568 = vmatpush1.msra.mxu0 0.0
    %3569 = vmatprep.subr.mxu0 0.0
    %3570 = vmatpush1.msra.mxu0 0.0
    %3571 = vmatprep.subr.mxu0 0.0
    %3572 = vmatpush1.msra.mxu0 0.0
    %3573 = vmatprep.subr.mxu0 0.0
    %3574 = vmatpush1.msra.mxu0 0.0
    %3575 = vmatprep.subr.mxu0 0.0
    %3576 = vmatpush1.msra.mxu0 0.0
    %3577 = vmatprep.subr.mxu0 0.0
    %3578 = vmatpush1.msra.mxu0 0.0
    %3579 = vmatprep.mubr.f32.mxu0 0.0
    %3580 = vmatmul.mubr.f32.gmra.mrb[0].mxu0 %v3513
    %v3581 = vpop.f32.mrb[0].mxu0
    %v3582 = vadd.f32 %v916, %v3581
    %v3583 = vpop.f32.mrb[0].mxu0
    %3584 = vdwg.mxu0
    %3586 = vrot.lane.b32.xlu0 %v3336, 64
    %v3587 = vpop.permute.xlu0 %3586
    %v3588 = vsel %vm245, %v3587, 0
    %3590 = vmatprep.subr.mxu0 0.0
    %3591 = vmatpush1.msra.mxu0 %v988
    %3592 = vmatprep.subr.mxu0 0.0
    %3593 = vmatpush1.msra.mxu0 %v989
    %3594 = vmatprep.subr.mxu0 0.0
    %3595 = vmatpush1.msra.mxu0 %v990
    %3596 = vmatprep.subr.mxu0 0.0
    %3597 = vmatpush1.msra.mxu0 %v991
    %3598 = vmatprep.subr.mxu0 0.0
    %3599 = vmatpush1.msra.mxu0 0.0
    %3600 = vmatprep.subr.mxu0 0.0
    %3601 = vmatpush1.msra.mxu0 0.0
    %3602 = vmatprep.subr.mxu0 0.0
    %3603 = vmatpush1.msra.mxu0 0.0
    %3604 = vmatprep.subr.mxu0 0.0
    %3605 = vmatpush1.msra.mxu0 0.0
    %3606 = vmatprep.subr.mxu0 0.0
    %3607 = vmatpush1.msra.mxu0 0.0
    %3608 = vmatprep.subr.mxu0 0.0
    %3609 = vmatpush1.msra.mxu0 0.0
    %3610 = vmatprep.subr.mxu0 0.0
    %3611 = vmatpush1.msra.mxu0 0.0
    %3612 = vmatprep.subr.mxu0 0.0
    %3613 = vmatpush1.msra.mxu0 0.0
    %3614 = vmatprep.subr.mxu0 0.0
    %3615 = vmatpush1.msra.mxu0 0.0
    %3616 = vmatprep.subr.mxu0 0.0
    %3617 = vmatpush1.msra.mxu0 0.0
    %3618 = vmatprep.subr.mxu0 0.0
    %3619 = vmatpush1.msra.mxu0 0.0
    %3620 = vmatprep.subr.mxu0 0.0
    %3621 = vmatpush1.msra.mxu0 0.0
    %3622 = vmatprep.subr.mxu0 0.0
    %3623 = vmatpush1.msra.mxu0 0.0
    %3624 = vmatprep.subr.mxu0 0.0
    %3625 = vmatpush1.msra.mxu0 0.0
    %3626 = vmatprep.subr.mxu0 0.0
    %3627 = vmatpush1.msra.mxu0 0.0
    %3628 = vmatprep.subr.mxu0 0.0
    %3629 = vmatpush1.msra.mxu0 0.0
    %3630 = vmatprep.subr.mxu0 0.0
    %3631 = vmatpush1.msra.mxu0 0.0
    %3632 = vmatprep.subr.mxu0 0.0
    %3633 = vmatpush1.msra.mxu0 0.0
    %3634 = vmatprep.subr.mxu0 0.0
    %3635 = vmatpush1.msra.mxu0 0.0
    %3636 = vmatprep.subr.mxu0 0.0
    %3637 = vmatpush1.msra.mxu0 0.0
    %3638 = vmatprep.subr.mxu0 0.0
    %3639 = vmatpush1.msra.mxu0 0.0
    %3640 = vmatprep.subr.mxu0 0.0
    %3641 = vmatpush1.msra.mxu0 0.0
    %3642 = vmatprep.subr.mxu0 0.0
    %3643 = vmatpush1.msra.mxu0 0.0
    %3644 = vmatprep.subr.mxu0 0.0
    %3645 = vmatpush1.msra.mxu0 0.0
    %3646 = vmatprep.subr.mxu0 0.0
    %3647 = vmatpush1.msra.mxu0 0.0
    %3648 = vmatprep.subr.mxu0 0.0
    %3649 = vmatpush1.msra.mxu0 0.0
    %3650 = vmatprep.subr.mxu0 0.0
    %3651 = vmatpush1.msra.mxu0 0.0
    %3652 = vmatprep.subr.mxu0 0.0
    %3653 = vmatpush1.msra.mxu0 0.0
    %3654 = vmatprep.mubr.f32.mxu0 0.0
    %3655 = vmatmul.mubr.f32.gmra.mrb[0].mxu0 %v3588
    %v3656 = vpop.f32.mrb[0].mxu0
    %v3657 = vadd.f32 0.0, %v3656
    %v3658 = vpop.f32.mrb[0].mxu0
    %3659 = vdwg.mxu0
    %v3660 = vadd.f32 %v3582, %v3657
    %v3661 = vtanh.pop %v3660
    %v3662 = vmul.f32 %v3661, %v92
    %v3663 = vadd.f32 %v3662, %v93
    %v3664 = vmul.f32 %v3663, %v3337
    %3666 = vrot.lane.b32.xlu0 %v3663, 32
    %v3667 = vpop.permute.xlu0 %3666
    %v3669 = vmul.f32 %v3663, %v3667
    %3671 = vrot.lane.b32.xlu0 %v3669, 32
    %v3672 = vpop.permute.xlu0 %3671
    %v3674 = vadd.f32 %v3664, %v3672
    %v3675 = vtanh.pop %v3674
    %3677 = vrot.lane.b32.xlu0 %v3675, 32
    %v3678 = vpop.permute.xlu0 %3677
    %v3680 = vmul.f32 %v3663, %v3678
    %v3681 = vsel %vm2538, %v3680, %v3336
    %v3682 = vsel %vm2538, %v3674, %v3337
    %3684 = vrot.lane.b32.xlu0 %v3509, 64
    %v3685 = vpop.permute.xlu0 %3684
    %v3686 = vsel %vm245, %v3685, 0
    %3688 = vmatprep.subr.mxu0 0.0
    %3689 = vmatpush1.msra.mxu0 %v907
    %3690 = vmatprep.subr.mxu0 0.0
    %3691 = vmatpush1.msra.mxu0 %v908
    %3692 = vmatprep.subr.mxu0 0.0
    %3693 = vmatpush1.msra.mxu0 %v909
    %3694 = vmatprep.subr.mxu0 0.0
    %3695 = vmatpush1.msra.mxu0 %v910
    %3696 = vmatprep.subr.mxu0 0.0
    %3697 = vmatpush1.msra.mxu0 0.0
    %3698 = vmatprep.subr.mxu0 0.0
    %3699 = vmatpush1.msra.mxu0 0.0
    %3700 = vmatprep.subr.mxu0 0.0
    %3701 = vmatpush1.msra.mxu0 0.0
    %3702 = vmatprep.subr.mxu0 0.0
    %3703 = vmatpush1.msra.mxu0 0.0
    %3704 = vmatprep.subr.mxu0 0.0
    %3705 = vmatpush1.msra.mxu0 0.0
    %3706 = vmatprep.subr.mxu0 0.0
    %3707 = vmatpush1.msra.mxu0 0.0
    %3708 = vmatprep.subr.mxu0 0.0
    %3709 = vmatpush1.msra.mxu0 0.0
    %3710 = vmatprep.subr.mxu0 0.0
    %3711 = vmatpush1.msra.mxu0 0.0
    %3712 = vmatprep.subr.mxu0 0.0
    %3713 = vmatpush1.msra.mxu0 0.0
    %3714 = vmatprep.subr.mxu0 0.0
    %3715 = vmatpush1.msra.mxu0 0.0
    %3716 = vmatprep.subr.mxu0 0.0
    %3717 = vmatpush1.msra.mxu0 0.0
    %3718 = vmatprep.subr.mxu0 0.0
    %3719 = vmatpush1.msra.mxu0 0.0
    %3720 = vmatprep.subr.mxu0 0.0
    %3721 = vmatpush1.msra.mxu0 0.0
    %3722 = vmatprep.subr.mxu0 0.0
    %3723 = vmatpush1.msra.mxu0 0.0
    %3724 = vmatprep.subr.mxu0 0.0
    %3725 = vmatpush1.msra.mxu0 0.0
    %3726 = vmatprep.subr.mxu0 0.0
    %3727 = vmatpush1.msra.mxu0 0.0
    %3728 = vmatprep.subr.mxu0 0.0
    %3729 = vmatpush1.msra.mxu0 0.0
    %3730 = vmatprep.subr.mxu0 0.0
    %3731 = vmatpush1.msra.mxu0 0.0
    %3732 = vmatprep.subr.mxu0 0.0
    %3733 = vmatpush1.msra.mxu0 0.0
    %3734 = vmatprep.subr.mxu0 0.0
    %3735 = vmatpush1.msra.mxu0 0.0
    %3736 = vmatprep.subr.mxu0 0.0
    %3737 = vmatpush1.msra.mxu0 0.0
    %3738 = vmatprep.subr.mxu0 0.0
    %3739 = vmatpush1.msra.mxu0 0.0
    %3740 = vmatprep.subr.mxu0 0.0
    %3741 = vmatpush1.msra.mxu0 0.0
    %3742 = vmatprep.subr.mxu0 0.0
    %3743 = vmatpush1.msra.mxu0 0.0
    %3744 = vmatprep.subr.mxu0 0.0
    %3745 = vmatpush1.msra.mxu0 0.0
    %3746 = vmatprep.subr.mxu0 0.0
    %3747 = vmatpush1.msra.mxu0 0.0
    %3748 = vmatprep.subr.mxu0 0.0
    %3749 = vmatpush1.msra.mxu0 0.0
    %3750 = vmatprep.subr.mxu0 0.0
    %3751 = vmatpush1.msra.mxu0 0.0
    %3752 = vmatprep.mubr.f32.mxu0 0.0
    %3753 = vmatmul.mubr.f32.gmra.mrb[0].mxu0 %v3686
    %v3754 = vpop.f32.mrb[0].mxu0
    %v3755 = vadd.f32 %v916, %v3754
    %v3756 = vpop.f32.mrb[0].mxu0
    %3757 = vdwg.mxu0
    %3759 = vrot.lane.b32.xlu0 %v3681, 64
    %v3760 = vpop.permute.xlu0 %3759
    %v3761 = vsel %vm245, %v3760, 0
    %3763 = vmatprep.subr.mxu0 0.0
    %3764 = vmatpush1.msra.mxu0 %v988
    %3765 = vmatprep.subr.mxu0 0.0
    %3766 = vmatpush1.msra.mxu0 %v989
    %3767 = vmatprep.subr.mxu0 0.0
    %3768 = vmatpush1.msra.mxu0 %v990
    %3769 = vmatprep.subr.mxu0 0.0
    %3770 = vmatpush1.msra.mxu0 %v991
    %3771 = vmatprep.subr.mxu0 0.0
    %3772 = vmatpush1.msra.mxu0 0.0
    %3773 = vmatprep.subr.mxu0 0.0
    %3774 = vmatpush1.msra.mxu0 0.0
    %3775 = vmatprep.subr.mxu0 0.0
    %3776 = vmatpush1.msra.mxu0 0.0
    %3777 = vmatprep.subr.mxu0 0.0
    %3778 = vmatpush1.msra.mxu0 0.0
    %3779 = vmatprep.subr.mxu0 0.0
    %3780 = vmatpush1.msra.mxu0 0.0
    %3781 = vmatprep.subr.mxu0 0.0
    %3782 = vmatpush1.msra.mxu0 0.0
    %3783 = vmatprep.subr.mxu0 0.0
    %3784 = vmatpush1.msra.mxu0 0.0
    %3785 = vmatprep.subr.mxu0 0.0
    %3786 = vmatpush1.msra.mxu0 0.0
    %3787 = vmatprep.subr.mxu0 0.0
    %3788 = vmatpush1.msra.mxu0 0.0
    %3789 = vmatprep.subr.mxu0 0.0
    %3790 = vmatpush1.msra.mxu0 0.0
    %3791 = vmatprep.subr.mxu0 0.0
    %3792 = vmatpush1.msra.mxu0 0.0
    %3793 = vmatprep.subr.mxu0 0.0
    %3794 = vmatpush1.msra.mxu0 0.0
    %3795 = vmatprep.subr.mxu0 0.0
    %3796 = vmatpush1.msra.mxu0 0.0
    %3797 = vmatprep.subr.mxu0 0.0
    %3798 = vmatpush1.msra.mxu0 0.0
    %3799 = vmatprep.subr.mxu0 0.0
    %3800 = vmatpush1.msra.mxu0 0.0
    %3801 = vmatprep.subr.mxu0 0.0
    %3802 = vmatpush1.msra.mxu0 0.0
    %3803 = vmatprep.subr.mxu0 0.0
    %3804 = vmatpush1.msra.mxu0 0.0
    %3805 = vmatprep.subr.mxu0 0.0
    %3806 = vmatpush1.msra.mxu0 0.0
    %3807 = vmatprep.subr.mxu0 0.0
    %3808 = vmatpush1.msra.mxu0 0.0
    %3809 = vmatprep.subr.mxu0 0.0
    %3810 = vmatpush1.msra.mxu0 0.0
    %3811 = vmatprep.subr.mxu0 0.0
    %3812 = vmatpush1.msra.mxu0 0.0
    %3813 = vmatprep.subr.mxu0 0.0
    %3814 = vmatpush1.msra.mxu0 0.0
    %3815 = vmatprep.subr.mxu0 0.0
    %3816 = vmatpush1.msra.mxu0 0.0
    %3817 = vmatprep.subr.mxu0 0.0
    %3818 = vmatpush1.msra.mxu0 0.0
    %3819 = vmatprep.subr.mxu0 0.0
    %3820 = vmatpush1.msra.mxu0 0.0
    %3821 = vmatprep.subr.mxu0 0.0
    %3822 = vmatpush1.msra.mxu0 0.0
    %3823 = vmatprep.subr.mxu0 0.0
    %3824 = vmatpush1.msra.mxu0 0.0
    %3825 = vmatprep.subr.mxu0 0.0
    %3826 = vmatpush1.msra.mxu0 0.0
    %3827 = vmatprep.mubr.f32.mxu0 0.0
    %3828 = vmatmul.mubr.f32.gmra.mrb[0].mxu0 %v3761
    %v3829 = vpop.f32.mrb[0].mxu0
    %v3830 = vadd.f32 0.0, %v3829
    %v3831 = vpop.f32.mrb[0].mxu0
    %3832 = vdwg.mxu0
    %v3833 = vadd.f32 %v3755, %v3830
    %v3834 = vtanh.pop %v3833
    %v3835 = vmul.f32 %v3834, %v92
    %v3836 = vadd.f32 %v3835, %v93
    %v3837 = vmul.f32 %v3836, %v3682
    %3839 = vrot.lane.b32.xlu0 %v3836, 32
    %v3840 = vpop.permute.xlu0 %3839
    %v3842 = vmul.f32 %v3836, %v3840
    %3844 = vrot.lane.b32.xlu0 %v3842, 32
    %v3845 = vpop.permute.xlu0 %3844
    %v3847 = vadd.f32 %v3837, %v3845
    %v3848 = vtanh.pop %v3847
    %3850 = vrot.lane.b32.xlu0 %v3848, 32
    %v3851 = vpop.permute.xlu0 %3850
    %v3853 = vmul.f32 %v3836, %v3851
    %v3854 = vsel %vm2989, %v3853, %v3681
    %3856 = vrot.lane.b32.xlu0 %v3854, 64
    %v3857 = vpop.permute.xlu0 %3856
    %3859 = vst.msk [vmem:[#allocation8] sm:$0xff] %vm245, %v3857
    // Predicated region
    $region58: #{tpu_custom_call.1} parent=1 // pred_check
      _
    $region59: #{tpu_custom_call.1} parent=1 // pred_check_branch
      %3861 = sbr.rel (0) target = $region61
    $region60: #{tpu_custom_call.1} parent=1 // pred_region
      %s3863 = ssub.s32 128, 128
      %3864 = vsyncadd [#allocation4], %s3863
      %s3866 = sshll.u32 [#allocation8], 4
      %s3867 = int_to_ptr.vmem [resolvable:$true] %s3866
      %3869 = dma.vmem_to_hbm [thread:$0]  %s3867, 128, %s11, [#allocation4]
    $region61: #{tpu_custom_call.1} parent=1 // pred_fallthru
      _
    // Predicated region
    $region62: #{tpu_custom_call.1} parent=1 // pred_check
      _
    $region63: #{tpu_custom_call.1} parent=1 // pred_check_branch
      %3871 = sbr.rel (0) target = $region65
    $region64: #{tpu_custom_call.1} parent=1 // pred_region
      %3872 = dma.done [#allocation4], 128
    $region65: #{tpu_custom_call.1} parent=1 // pred_fallthru
      _
    %3873 = vsyncpa [#allocation3], 1
    %3874 = vsyncpa [#allocation6], 1
    %3875 = vsyncpa [#allocation4], 1

</llo_original>
